<compile_context>
chip_gen: v7x
topology: tpu7x:2x2x1
jax: 0.10.0
libtpu: 0.0.40
codegen_flags: <defaults>
</compile_context>

<pallas_src>
import math
from functools import partial

import jax
import jax.numpy as jnp
from jax.experimental import pallas as pl

D_MODEL = 32
N_HEAD = 4
D_HEAD = D_MODEL // N_HEAD
DFF = 64
NUM_LAYERS = 2
LN_EPS = 1e-5


# ---------------------------------------------------------------------------
# In-kernel helpers (traced inside the Pallas kernel body).
# ---------------------------------------------------------------------------
def _attn_softmax(s):
    m = jnp.max(s, axis=-1, keepdims=True)
    e = jnp.exp(s - m)
    denom = jnp.sum(e, axis=-1, keepdims=True)
    return e * pl.reciprocal(denom, approx=True)


def _layer_norm(x, w, b):
    # one-pass: two independent lane reduces instead of mean -> center -> mean
    inv_d = 1.0 / D_MODEL
    s1 = jnp.sum(x, axis=-1, keepdims=True)
    s2 = jnp.sum(x * x, axis=-1, keepdims=True)
    mu = s1 * inv_d
    var = jnp.maximum(s2 * inv_d - mu * mu, 0.0)
    return (x - mu) * jax.lax.rsqrt(var + LN_EPS) * w + b


def _ln_fc(x, w_prime, const):
    # final layernorm with fc_for_action_probs folded into the affine:
    # logits = sum(x_hat * (ln_w * fc_w)) + (ln_b . fc_w + fc_b)
    inv_d = 1.0 / D_MODEL
    s1 = jnp.sum(x, axis=-1, keepdims=True)
    s2 = jnp.sum(x * x, axis=-1, keepdims=True)
    mu = s1 * inv_d
    var = jnp.maximum(s2 * inv_d - mu * mu, 0.0)
    xhat = (x - mu) * jax.lax.rsqrt(var + LN_EPS)
    return jnp.sum(xhat * w_prime, axis=-1, keepdims=True) + const


def _attend(q, k, v, mask):
    """Per-head score/softmax/PV on batch-folded activations.

    q: (N, D), k/v: (Mn, D), mask: (N, Mn) additive block-diagonal mask that
    prevents attention across batch elements.  Heads are static lane slices.
    The 1/sqrt(d_head) scale is already folded into the Q projection.
    """
    outs = []
    for h in range(N_HEAD):
        sl = slice(h * D_HEAD, (h + 1) * D_HEAD)
        s = jnp.einsum('nk,mk->nm', q[:, sl], k[:, sl],
                       preferred_element_type=jnp.float32) + mask
        p = _attn_softmax(s)
        outs.append(jnp.dot(p, v[:, sl], preferred_element_type=jnp.float32))
    return jnp.concatenate(outs, axis=-1)              # (N, D)


# ---------------------------------------------------------------------------
# Fused Pallas kernel: 2 decoder layers + (layernorm3 ∘ fc) selection logits.
# ---------------------------------------------------------------------------
def fused_decoder_kernel(x_ref, mem_ref, mask_s_ref, mask_c_ref,
                         w_sa_ref, b_sa_ref, w_caq_ref, b_caq_ref,
                         w_cakv_ref, b_cakv_ref, w_out_ref, b_out_ref,
                         ffn_w1_ref, ffn_b1_ref, ffn_w2_ref, ffn_b2_ref,
                         ln_w_ref, ln_b_ref, lnfc_w_ref, lnfc_c_ref,
                         logits_ref):
    x = x_ref[...]                      # (B*S, D) batch-folded targets
    mem = mem_ref[...]                  # (B*M, D) batch-folded memory
    mask_s = mask_s_ref[...]            # (B*S, B*S)
    mask_c = mask_c_ref[...]            # (B*S, B*M)

    # Hoisted cross-attention K/V for BOTH layers: one 128-lane-wide matmul.
    kv_all = jnp.dot(mem, w_cakv_ref[...],
                     preferred_element_type=jnp.float32) + b_cakv_ref[...]

    for li in range(NUM_LAYERS):
        # ----- self-attention (packed QKV projection, post-norm) -----
        qkv = jnp.dot(x, w_sa_ref[li],
                      preferred_element_type=jnp.float32) + b_sa_ref[li]   # (N, 3D)
        sa = _attend(qkv[:, 0:D_MODEL],
                     qkv[:, D_MODEL:2 * D_MODEL],
                     qkv[:, 2 * D_MODEL:3 * D_MODEL], mask_s)
        sa = jnp.dot(sa, w_out_ref[2 * li],
                     preferred_element_type=jnp.float32) + b_out_ref[2 * li]
        x = _layer_norm(x + sa, ln_w_ref[3 * li + 0], ln_b_ref[3 * li + 0])

        # ----- cross-attention with memory (K/V precomputed above) -----
        q = jnp.dot(x, w_caq_ref[li],
                    preferred_element_type=jnp.float32) + b_caq_ref[li]
        k_ca = kv_all[:, 2 * li * D_MODEL:(2 * li + 1) * D_MODEL]
        v_ca = kv_all[:, (2 * li + 1) * D_MODEL:(2 * li + 2) * D_MODEL]
        ca = _attend(q, k_ca, v_ca, mask_c)
        ca = jnp.dot(ca, w_out_ref[2 * li + 1],
                     preferred_element_type=jnp.float32) + b_out_ref[2 * li + 1]
        x = _layer_norm(x + ca, ln_w_ref[3 * li + 1], ln_b_ref[3 * li + 1])

        # ----- feed-forward (relu) -----
        h = jnp.maximum(
            jnp.dot(x, ffn_w1_ref[li], preferred_element_type=jnp.float32)
            + ffn_b1_ref[li], 0.0)
        ff = jnp.dot(h, ffn_w2_ref[li],
                     preferred_element_type=jnp.float32) + ffn_b2_ref[li]
        y = x + ff
        if li < NUM_LAYERS - 1:
            x = _layer_norm(y, ln_w_ref[3 * li + 2], ln_b_ref[3 * li + 2])
        else:
            # last norm3 output is only consumed by the logit -> fused form
            logits_ref[...] = _ln_fc(y, lnfc_w_ref[...], lnfc_c_ref[...])


def run_fused_decoder(params, box_flat, mem_flat, mask_self, mask_cross):
    n = box_flat.shape[0]
    return pl.pallas_call(
        fused_decoder_kernel,
        out_shape=jax.ShapeDtypeStruct((n, 1), jnp.float32),
    )(box_flat, mem_flat, mask_self, mask_cross,
      params["w_sa_qkv"], params["b_sa_qkv"],
      params["w_ca_q"], params["b_ca_q"],
      params["w_ca_kv"], params["b_ca_kv"],
      params["w_out"], params["b_out"],
      params["ffn_w1"], params["ffn_b1"],
      params["ffn_w2"], params["ffn_b2"],
      params["ln_w"], params["ln_b"],
      params["lnfc_w"], params["lnfc_c"])


# ---------------------------------------------------------------------------
# Forward pass (jitted).  Selection / sampling / gather / orientation embedding
# are cheap plain-JAX glue fused into the same XLA program.
# ---------------------------------------------------------------------------
# TODO(synk): categorical sampling + chosen-box gather + orientation embedding
# stay plain JAX (a standalone pallas_call costs more than these ~KFLOP ops).
@partial(jax.jit, static_argnames=("mode",))
def _selection_core(params, box_encoding, position_embedding, unpacked_box_state,
                    forced_action_idx, rng, mode):
    B, S, D = box_encoding.shape
    M = position_embedding.shape[1]

    box_flat = box_encoding.reshape(B * S, D)
    mem_flat = position_embedding.reshape(B * M, D)

    # block-diagonal additive masks so folded batches never attend to each other
    rb = jnp.repeat(jnp.arange(B), S)
    cb_s = jnp.repeat(jnp.arange(B), S)
    cb_m = jnp.repeat(jnp.arange(B), M)
    mask_self = jnp.where(rb[:, None] == cb_s[None, :], 0.0, -1e9).astype(jnp.float32)
    mask_cross = jnp.where(rb[:, None] == cb_m[None, :], 0.0, -1e9).astype(jnp.float32)

    logits = run_fused_decoder(params, box_flat, mem_flat, mask_self, mask_cross)
    logits = logits.reshape(B, S)
    probs = jax.nn.softmax(logits, axis=-1)            # exact (bit-stable log_probs)

    if mode == "forced":
        chosen = forced_action_idx.astype(jnp.int32)
    elif mode == "argmax":
        chosen = jnp.argmax(probs, axis=1).astype(jnp.int32)
    else:  # sample
        safe = jnp.maximum(probs, 1e-30)
        chosen = jax.random.categorical(rng, jnp.log(safe), axis=-1).astype(jnp.int32)

    # Categorical(probs=clamp(p)).log_prob(chosen)
    clamped = jnp.maximum(probs, 1e-9)
    log_prob = (jnp.log(clamped[jnp.arange(B), chosen])
                - jnp.log(jnp.sum(clamped, axis=-1)))

    # gather chosen box dims and build the 6 orthogonal orientations
    selected_dims = unpacked_box_state[jnp.arange(B), chosen]            # (B, 3)
    perm = jnp.array([[0, 1, 2], [0, 2, 1], [1, 0, 2],
                      [1, 2, 0], [2, 0, 1], [2, 1, 0]], dtype=jnp.int32)
    all_orient = selected_dims[:, perm]                                  # (B, 6, 3)

    l = all_orient[..., 0:1]
    w = all_orient[..., 1:2]
    h = all_orient[..., 2:3]
    emb = (l * params["emb_l_w"][0] + params["emb_l_b"][0]
           + w * params["emb_w_w"][0] + params["emb_w_b"][0]
           + h * params["emb_h_w"][0] + params["emb_h_b"][0]) / 3.0      # (B, 6, D)

    return chosen, log_prob, emb, probs


def selection_decoder_forward(params, box_encoding, position_embedding,
                              unpacked_box_state, forced_action_idx=None,
                              deterministic_selection=False, rng=None):
    B = box_encoding.shape[0]
    if forced_action_idx is not None:
        mode = "forced"
        forced = jnp.asarray(forced_action_idx, jnp.int32)
    elif deterministic_selection:
        mode = "argmax"
        forced = jnp.zeros((B,), jnp.int32)
    else:
        mode = "sample"
        forced = jnp.zeros((B,), jnp.int32)
    if rng is None:
        rng = jax.random.PRNGKey(0)
    return _selection_core(params, box_encoding, position_embedding,
                           unpacked_box_state, forced, rng, mode=mode)


# ---------------------------------------------------------------------------
# Deterministic parameter init: generate PyTorch-layout weights, pack into slabs.
# ---------------------------------------------------------------------------
def init_params(key):
    keys = iter(jax.random.split(key, 256))

    def rnd(shape, scale=0.05):
        return jax.random.normal(next(keys), shape, jnp.float32) * scale

    inv_scale = 1.0 / math.sqrt(D_HEAD)    # folded into Q projections host-side

    w_sa_qkv, b_sa_qkv = [], []
    w_ca_q, b_ca_q = [], []
    ca_kv_cols, ca_kv_bias = [], []
    w_out, b_out = [], []
    ffn_w1, ffn_b1, ffn_w2, ffn_b2 = [], [], [], []
    ln_w_list, ln_b_list = [], []
    ln3_last_w = ln3_last_b = None

    for li in range(NUM_LAYERS):
        # --- self-attention: in_proj (3D, D), out_proj (D, D)  (PyTorch (out,in))
        Wsa = rnd((3 * D_MODEL, D_MODEL))
        bsa = rnd((3 * D_MODEL,))
        Wsa = Wsa.at[:D_MODEL].multiply(inv_scale)
        bsa = bsa.at[:D_MODEL].multiply(inv_scale)
        w_sa_qkv.append(Wsa.T)                                  # (D, 3D)
        b_sa_qkv.append(bsa.reshape(1, 3 * D_MODEL))
        Wo = rnd((D_MODEL, D_MODEL)); bo = rnd((D_MODEL,))
        w_out.append(Wo.T); b_out.append(bo.reshape(1, D_MODEL))

        # --- cross-attention: Q stays in-layer, K/V hoisted into one 128-wide slab
        Wca = rnd((3 * D_MODEL, D_MODEL))
        bca = rnd((3 * D_MODEL,))
        w_ca_q.append((Wca[:D_MODEL] * inv_scale).T)            # (D, D)
        b_ca_q.append((bca[:D_MODEL] * inv_scale).reshape(1, D_MODEL))
        ca_kv_cols.append(Wca[D_MODEL:2 * D_MODEL].T)           # K_li  (D, D)
        ca_kv_cols.append(Wca[2 * D_MODEL:3 * D_MODEL].T)       # V_li  (D, D)
        ca_kv_bias.append(bca[D_MODEL:2 * D_MODEL])
        ca_kv_bias.append(bca[2 * D_MODEL:3 * D_MODEL])
        Wo2 = rnd((D_MODEL, D_MODEL)); bo2 = rnd((D_MODEL,))
        w_out.append(Wo2.T); b_out.append(bo2.reshape(1, D_MODEL))

        # --- feed-forward
        W1 = rnd((DFF, D_MODEL)); b1 = rnd((DFF,))
        W2 = rnd((D_MODEL, DFF)); b2 = rnd((D_MODEL,))
        ffn_w1.append(W1.T); ffn_b1.append(b1.reshape(1, DFF))
        ffn_w2.append(W2.T); ffn_b2.append(b2.reshape(1, D_MODEL))

        # --- layernorms (PyTorch default init: weight=1, bias=0)
        for ni in range(3):
            lw = jnp.ones((D_MODEL,), jnp.float32)
            lb = jnp.zeros((D_MODEL,), jnp.float32)
            if li == NUM_LAYERS - 1 and ni == 2:
                ln3_last_w, ln3_last_b = lw, lb       # folded with fc below
            else:
                ln_w_list.append(lw.reshape(1, D_MODEL))
                ln_b_list.append(lb.reshape(1, D_MODEL))

    # fc_for_action_probs (Linear D -> 1) folded into last layernorm affine
    fc_w = rnd((1, D_MODEL))
    fc_b = rnd((1,))
    lnfc_w = (ln3_last_w * fc_w[0]).reshape(1, D_MODEL)
    lnfc_c = (jnp.sum(ln3_last_b * fc_w[0]) + fc_b[0]).reshape(1, 1)

    return dict(
        w_sa_qkv=jnp.stack(w_sa_qkv), b_sa_qkv=jnp.stack(b_sa_qkv),   # (2,32,96)/(2,1,96)
        w_ca_q=jnp.stack(w_ca_q), b_ca_q=jnp.stack(b_ca_q),           # (2,32,32)/(2,1,32)
        w_ca_kv=jnp.concatenate(ca_kv_cols, axis=1),                  # (32,128)
        b_ca_kv=jnp.concatenate(ca_kv_bias).reshape(1, 4 * D_MODEL),  # (1,128)
        w_out=jnp.stack(w_out), b_out=jnp.stack(b_out),               # (4,32,32)/(4,1,32)
        ffn_w1=jnp.stack(ffn_w1), ffn_b1=jnp.stack(ffn_b1),           # (2,32,64)/(2,1,64)
        ffn_w2=jnp.stack(ffn_w2), ffn_b2=jnp.stack(ffn_b2),           # (2,64,32)/(2,1,32)
        ln_w=jnp.stack(ln_w_list), ln_b=jnp.stack(ln_b_list),         # (5,1,32)
        lnfc_w=lnfc_w, lnfc_c=lnfc_c,
        emb_l_w=rnd((1, D_MODEL)), emb_l_b=rnd((1, D_MODEL)),
        emb_w_w=rnd((1, D_MODEL)), emb_w_b=rnd((1, D_MODEL)),
        emb_h_w=rnd((1, D_MODEL)), emb_h_b=rnd((1, D_MODEL)),
    )


if __name__ == "__main__":
    key = jax.random.PRNGKey(0)
    kp, kx, km, ks = jax.random.split(key, 4)

    B, S, M = 2, 8, 8   # batch, num candidate boxes (tgt len), memory len
    params = init_params(kp)
    box_encoding = jax.random.normal(kx, (B, S, D_MODEL), jnp.float32)
    position_embedding = jax.random.normal(km, (B, M, D_MODEL), jnp.float32)
    unpacked_box_state = jax.random.uniform(ks, (B, S, 3), jnp.float32, 0.5, 2.0)

    chosen, log_prob, orient_emb, probs = selection_decoder_forward(
        params, box_encoding, position_embedding, unpacked_box_state,
        deterministic_selection=True)

    jax.block_until_ready((chosen, log_prob, orient_emb, probs))
    assert chosen.shape == (B,)
    assert log_prob.shape == (B,)
    assert orient_emb.shape == (B, 6, D_MODEL)
    assert probs.shape == (B, S)
    assert bool(jnp.all(jnp.isfinite(probs))) and bool(jnp.all(jnp.isfinite(log_prob)))
    print("KERNEL_OK")
</pallas_src>

<mosaic_0001>
module attributes {stable_mosaic.version = 11 : i64} {
  func.func @fused_decoder_kernel(%arg0: memref<16x32xf32, #tpu.memory_space<vmem>>, %arg1: memref<16x32xf32, #tpu.memory_space<vmem>>, %arg2: memref<16x16xf32, #tpu.memory_space<vmem>>, %arg3: memref<16x16xf32, #tpu.memory_space<vmem>>, %arg4: memref<2x32x96xf32, #tpu.memory_space<vmem>>, %arg5: memref<2x1x96xf32, #tpu.memory_space<vmem>>, %arg6: memref<2x32x32xf32, #tpu.memory_space<vmem>>, %arg7: memref<2x1x32xf32, #tpu.memory_space<vmem>>, %arg8: memref<32x128xf32, #tpu.memory_space<vmem>>, %arg9: memref<1x128xf32, #tpu.memory_space<vmem>>, %arg10: memref<4x32x32xf32, #tpu.memory_space<vmem>>, %arg11: memref<4x1x32xf32, #tpu.memory_space<vmem>>, %arg12: memref<2x32x64xf32, #tpu.memory_space<vmem>>, %arg13: memref<2x1x64xf32, #tpu.memory_space<vmem>>, %arg14: memref<2x64x32xf32, #tpu.memory_space<vmem>>, %arg15: memref<2x1x32xf32, #tpu.memory_space<vmem>>, %arg16: memref<5x1x32xf32, #tpu.memory_space<vmem>>, %arg17: memref<5x1x32xf32, #tpu.memory_space<vmem>>, %arg18: memref<1x32xf32, #tpu.memory_space<vmem>>, %arg19: memref<1x1xf32, #tpu.memory_space<vmem>>, %arg20: memref<16x1xf32, #tpu.memory_space<vmem>>) attributes {dimension_semantics = [], scalar_prefetch = 0 : i64, scratch_operands = 0 : i64, tpu.core_type = #tpu.core_type<tc>} {
    %c0 = arith.constant 0 : index
    %c0_0 = arith.constant 0 : index
    %0 = vector.load %arg0[%c0, %c0_0] : memref<16x32xf32, #tpu.memory_space<vmem>>, vector<16x32xf32>
    %c0_1 = arith.constant 0 : index
    %c0_2 = arith.constant 0 : index
    %1 = vector.load %arg1[%c0_1, %c0_2] : memref<16x32xf32, #tpu.memory_space<vmem>>, vector<16x32xf32>
    %c0_3 = arith.constant 0 : index
    %c0_4 = arith.constant 0 : index
    %2 = vector.load %arg2[%c0_3, %c0_4] : memref<16x16xf32, #tpu.memory_space<vmem>>, vector<16x16xf32>
    %c0_5 = arith.constant 0 : index
    %c0_6 = arith.constant 0 : index
    %3 = vector.load %arg3[%c0_5, %c0_6] : memref<16x16xf32, #tpu.memory_space<vmem>>, vector<16x16xf32>
    %c0_7 = arith.constant 0 : index
    %c0_8 = arith.constant 0 : index
    %4 = vector.load %arg8[%c0_7, %c0_8] : memref<32x128xf32, #tpu.memory_space<vmem>>, vector<32x128xf32>
    %cst = arith.constant dense<0.000000e+00> : vector<16x128xf32>
    %5 = tpu.matmul %1, %4, %cst {dimension_numbers = #tpu.dot_dimension_numbers<[1], [0], [0], [1], [0, 0, 1, 1], [], []>} : vector<16x32xf32>, vector<32x128xf32>, vector<16x128xf32> -> vector<16x128xf32>
    %c0_9 = arith.constant 0 : index
    %c0_10 = arith.constant 0 : index
    %6 = vector.load %arg9[%c0_9, %c0_10] : memref<1x128xf32, #tpu.memory_space<vmem>>, vector<1x128xf32>
    %7 = vector.broadcast %6 : vector<1x128xf32> to vector<16x128xf32>
    %8 = arith.addf %5, %7 : vector<16x128xf32>
    %c0_11 = arith.constant 0 : index
    %c0_12 = arith.constant 0 : index
    %c0_13 = arith.constant 0 : index
    %9 = vector.load %arg4[%c0_11, %c0_12, %c0_13] : memref<2x32x96xf32, #tpu.memory_space<vmem>>, vector<1x32x96xf32>
    %10 = vector.shape_cast %9 : vector<1x32x96xf32> to vector<32x96xf32>
    %cst_14 = arith.constant dense<0.000000e+00> : vector<16x96xf32>
    %11 = tpu.matmul %0, %10, %cst_14 {dimension_numbers = #tpu.dot_dimension_numbers<[1], [0], [0], [1], [0, 0, 1, 1], [], []>} : vector<16x32xf32>, vector<32x96xf32>, vector<16x96xf32> -> vector<16x96xf32>
    %c0_15 = arith.constant 0 : index
    %c0_16 = arith.constant 0 : index
    %c0_17 = arith.constant 0 : index
    %12 = vector.load %arg5[%c0_15, %c0_16, %c0_17] : memref<2x1x96xf32, #tpu.memory_space<vmem>>, vector<1x1x96xf32>
    %13 = vector.shape_cast %12 : vector<1x1x96xf32> to vector<1x96xf32>
    %14 = vector.broadcast %13 : vector<1x96xf32> to vector<16x96xf32>
    %15 = arith.addf %11, %14 : vector<16x96xf32>
    %16 = vector.extract_strided_slice %15 {offsets = [0, 0], sizes = [16, 32], strides = [1, 1]} : vector<16x96xf32> to vector<16x32xf32>
    %17 = vector.extract_strided_slice %15 {offsets = [0, 32], sizes = [16, 32], strides = [1, 1]} : vector<16x96xf32> to vector<16x32xf32>
    %18 = vector.extract_strided_slice %15 {offsets = [0, 64], sizes = [16, 32], strides = [1, 1]} : vector<16x96xf32> to vector<16x32xf32>
    %19 = vector.extract_strided_slice %16 {offsets = [0, 0], sizes = [16, 8], strides = [1, 1]} : vector<16x32xf32> to vector<16x8xf32>
    %20 = vector.extract_strided_slice %17 {offsets = [0, 0], sizes = [16, 8], strides = [1, 1]} : vector<16x32xf32> to vector<16x8xf32>
    "tpu.trace_start"() <{level = 10 : i32, message = "nk,mk->nm"}> : () -> ()
    %cst_18 = arith.constant dense<0.000000e+00> : vector<16x16xf32>
    %21 = tpu.matmul %19, %20, %cst_18 {dimension_numbers = #tpu.dot_dimension_numbers<[1], [1], [0], [0], [0, 0, 1, 0], [], []>} : vector<16x8xf32>, vector<16x8xf32>, vector<16x16xf32> -> vector<16x16xf32>
    "tpu.trace_stop"() : () -> ()
    %22 = arith.addf %21, %2 : vector<16x16xf32>
    %cst_19 = arith.constant dense<0xFF800000> : vector<16xf32>
    %23 = vector.multi_reduction <maximumf>, %22, %cst_19 [1] : vector<16x16xf32> to vector<16xf32>
    %24 = vector.shape_cast %23 : vector<16xf32> to vector<16x1xf32>
    %25 = vector.broadcast %24 : vector<16x1xf32> to vector<16x16xf32>
    %26 = arith.subf %22, %25 : vector<16x16xf32>
    %27 = math.exp %26 : vector<16x16xf32>
    %cst_20 = arith.constant dense<0.000000e+00> : vector<16xf32>
    %28 = vector.multi_reduction <add>, %27, %cst_20 [1] : vector<16x16xf32> to vector<16xf32>
    %29 = vector.shape_cast %28 : vector<16xf32> to vector<16x1xf32>
    %30 = tpu.reciprocal %29 {approx = true} : vector<16x1xf32> -> vector<16x1xf32>
    %31 = vector.broadcast %30 : vector<16x1xf32> to vector<16x16xf32>
    %32 = arith.mulf %27, %31 : vector<16x16xf32>
    %33 = vector.extract_strided_slice %18 {offsets = [0, 0], sizes = [16, 8], strides = [1, 1]} : vector<16x32xf32> to vector<16x8xf32>
    %cst_21 = arith.constant dense<0.000000e+00> : vector<16x8xf32>
    %34 = tpu.matmul %32, %33, %cst_21 {dimension_numbers = #tpu.dot_dimension_numbers<[1], [0], [0], [1], [0, 0, 1, 1], [], []>} : vector<16x16xf32>, vector<16x8xf32>, vector<16x8xf32> -> vector<16x8xf32>
    %35 = vector.extract_strided_slice %16 {offsets = [0, 8], sizes = [16, 8], strides = [1, 1]} : vector<16x32xf32> to vector<16x8xf32>
    %36 = vector.extract_strided_slice %17 {offsets = [0, 8], sizes = [16, 8], strides = [1, 1]} : vector<16x32xf32> to vector<16x8xf32>
    "tpu.trace_start"() <{level = 10 : i32, message = "nk,mk->nm"}> : () -> ()
    %cst_22 = arith.constant dense<0.000000e+00> : vector<16x16xf32>
    %37 = tpu.matmul %35, %36, %cst_22 {dimension_numbers = #tpu.dot_dimension_numbers<[1], [1], [0], [0], [0, 0, 1, 0], [], []>} : vector<16x8xf32>, vector<16x8xf32>, vector<16x16xf32> -> vector<16x16xf32>
    "tpu.trace_stop"() : () -> ()
    %38 = arith.addf %37, %2 : vector<16x16xf32>
    %cst_23 = arith.constant dense<0xFF800000> : vector<16xf32>
    %39 = vector.multi_reduction <maximumf>, %38, %cst_23 [1] : vector<16x16xf32> to vector<16xf32>
    %40 = vector.shape_cast %39 : vector<16xf32> to vector<16x1xf32>
    %41 = vector.broadcast %40 : vector<16x1xf32> to vector<16x16xf32>
    %42 = arith.subf %38, %41 : vector<16x16xf32>
    %43 = math.exp %42 : vector<16x16xf32>
    %cst_24 = arith.constant dense<0.000000e+00> : vector<16xf32>
    %44 = vector.multi_reduction <add>, %43, %cst_24 [1] : vector<16x16xf32> to vector<16xf32>
    %45 = vector.shape_cast %44 : vector<16xf32> to vector<16x1xf32>
    %46 = tpu.reciprocal %45 {approx = true} : vector<16x1xf32> -> vector<16x1xf32>
    %47 = vector.broadcast %46 : vector<16x1xf32> to vector<16x16xf32>
    %48 = arith.mulf %43, %47 : vector<16x16xf32>
    %49 = vector.extract_strided_slice %18 {offsets = [0, 8], sizes = [16, 8], strides = [1, 1]} : vector<16x32xf32> to vector<16x8xf32>
    %cst_25 = arith.constant dense<0.000000e+00> : vector<16x8xf32>
    %50 = tpu.matmul %48, %49, %cst_25 {dimension_numbers = #tpu.dot_dimension_numbers<[1], [0], [0], [1], [0, 0, 1, 1], [], []>} : vector<16x16xf32>, vector<16x8xf32>, vector<16x8xf32> -> vector<16x8xf32>
    %51 = vector.extract_strided_slice %16 {offsets = [0, 16], sizes = [16, 8], strides = [1, 1]} : vector<16x32xf32> to vector<16x8xf32>
    %52 = vector.extract_strided_slice %17 {offsets = [0, 16], sizes = [16, 8], strides = [1, 1]} : vector<16x32xf32> to vector<16x8xf32>
    "tpu.trace_start"() <{level = 10 : i32, message = "nk,mk->nm"}> : () -> ()
    %cst_26 = arith.constant dense<0.000000e+00> : vector<16x16xf32>
    %53 = tpu.matmul %51, %52, %cst_26 {dimension_numbers = #tpu.dot_dimension_numbers<[1], [1], [0], [0], [0, 0, 1, 0], [], []>} : vector<16x8xf32>, vector<16x8xf32>, vector<16x16xf32> -> vector<16x16xf32>
    "tpu.trace_stop"() : () -> ()
    %54 = arith.addf %53, %2 : vector<16x16xf32>
    %cst_27 = arith.constant dense<0xFF800000> : vector<16xf32>
    %55 = vector.multi_reduction <maximumf>, %54, %cst_27 [1] : vector<16x16xf32> to vector<16xf32>
    %56 = vector.shape_cast %55 : vector<16xf32> to vector<16x1xf32>
    %57 = vector.broadcast %56 : vector<16x1xf32> to vector<16x16xf32>
    %58 = arith.subf %54, %57 : vector<16x16xf32>
    %59 = math.exp %58 : vector<16x16xf32>
    %cst_28 = arith.constant dense<0.000000e+00> : vector<16xf32>
    %60 = vector.multi_reduction <add>, %59, %cst_28 [1] : vector<16x16xf32> to vector<16xf32>
    %61 = vector.shape_cast %60 : vector<16xf32> to vector<16x1xf32>
    %62 = tpu.reciprocal %61 {approx = true} : vector<16x1xf32> -> vector<16x1xf32>
    %63 = vector.broadcast %62 : vector<16x1xf32> to vector<16x16xf32>
    %64 = arith.mulf %59, %63 : vector<16x16xf32>
    %65 = vector.extract_strided_slice %18 {offsets = [0, 16], sizes = [16, 8], strides = [1, 1]} : vector<16x32xf32> to vector<16x8xf32>
    %cst_29 = arith.constant dense<0.000000e+00> : vector<16x8xf32>
    %66 = tpu.matmul %64, %65, %cst_29 {dimension_numbers = #tpu.dot_dimension_numbers<[1], [0], [0], [1], [0, 0, 1, 1], [], []>} : vector<16x16xf32>, vector<16x8xf32>, vector<16x8xf32> -> vector<16x8xf32>
    %67 = vector.extract_strided_slice %16 {offsets = [0, 24], sizes = [16, 8], strides = [1, 1]} : vector<16x32xf32> to vector<16x8xf32>
    %68 = vector.extract_strided_slice %17 {offsets = [0, 24], sizes = [16, 8], strides = [1, 1]} : vector<16x32xf32> to vector<16x8xf32>
    "tpu.trace_start"() <{level = 10 : i32, message = "nk,mk->nm"}> : () -> ()
    %cst_30 = arith.constant dense<0.000000e+00> : vector<16x16xf32>
    %69 = tpu.matmul %67, %68, %cst_30 {dimension_numbers = #tpu.dot_dimension_numbers<[1], [1], [0], [0], [0, 0, 1, 0], [], []>} : vector<16x8xf32>, vector<16x8xf32>, vector<16x16xf32> -> vector<16x16xf32>
    "tpu.trace_stop"() : () -> ()
    %70 = arith.addf %69, %2 : vector<16x16xf32>
    %cst_31 = arith.constant dense<0xFF800000> : vector<16xf32>
    %71 = vector.multi_reduction <maximumf>, %70, %cst_31 [1] : vector<16x16xf32> to vector<16xf32>
    %72 = vector.shape_cast %71 : vector<16xf32> to vector<16x1xf32>
    %73 = vector.broadcast %72 : vector<16x1xf32> to vector<16x16xf32>
    %74 = arith.subf %70, %73 : vector<16x16xf32>
    %75 = math.exp %74 : vector<16x16xf32>
    %cst_32 = arith.constant dense<0.000000e+00> : vector<16xf32>
    %76 = vector.multi_reduction <add>, %75, %cst_32 [1] : vector<16x16xf32> to vector<16xf32>
    %77 = vector.shape_cast %76 : vector<16xf32> to vector<16x1xf32>
    %78 = tpu.reciprocal %77 {approx = true} : vector<16x1xf32> -> vector<16x1xf32>
    %79 = vector.broadcast %78 : vector<16x1xf32> to vector<16x16xf32>
    %80 = arith.mulf %75, %79 : vector<16x16xf32>
    %81 = vector.extract_strided_slice %18 {offsets = [0, 24], sizes = [16, 8], strides = [1, 1]} : vector<16x32xf32> to vector<16x8xf32>
    %cst_33 = arith.constant dense<0.000000e+00> : vector<16x8xf32>
    %82 = tpu.matmul %80, %81, %cst_33 {dimension_numbers = #tpu.dot_dimension_numbers<[1], [0], [0], [1], [0, 0, 1, 1], [], []>} : vector<16x16xf32>, vector<16x8xf32>, vector<16x8xf32> -> vector<16x8xf32>
    %83 = tpu.concatenate %34, %50, %66, %82 in 1 : vector<16x8xf32>, vector<16x8xf32>, vector<16x8xf32>, vector<16x8xf32> -> vector<16x32xf32>
    %c0_34 = arith.constant 0 : index
    %c0_35 = arith.constant 0 : index
    %c0_36 = arith.constant 0 : index
    %84 = vector.load %arg10[%c0_34, %c0_35, %c0_36] : memref<4x32x32xf32, #tpu.memory_space<vmem>>, vector<1x32x32xf32>
    %85 = vector.shape_cast %84 : vector<1x32x32xf32> to vector<32x32xf32>
    %cst_37 = arith.constant dense<0.000000e+00> : vector<16x32xf32>
    %86 = tpu.matmul %83, %85, %cst_37 {dimension_numbers = #tpu.dot_dimension_numbers<[1], [0], [0], [1], [0, 0, 1, 1], [], []>} : vector<16x32xf32>, vector<32x32xf32>, vector<16x32xf32> -> vector<16x32xf32>
    %c0_38 = arith.constant 0 : index
    %c0_39 = arith.constant 0 : index
    %c0_40 = arith.constant 0 : index
    %87 = vector.load %arg11[%c0_38, %c0_39, %c0_40] : memref<4x1x32xf32, #tpu.memory_space<vmem>>, vector<1x1x32xf32>
    %88 = vector.shape_cast %87 : vector<1x1x32xf32> to vector<1x32xf32>
    %89 = vector.broadcast %88 : vector<1x32xf32> to vector<16x32xf32>
    %90 = arith.addf %86, %89 : vector<16x32xf32>
    %91 = arith.addf %0, %90 : vector<16x32xf32>
    %c0_41 = arith.constant 0 : index
    %c0_42 = arith.constant 0 : index
    %c0_43 = arith.constant 0 : index
    %92 = vector.load %arg16[%c0_41, %c0_42, %c0_43] : memref<5x1x32xf32, #tpu.memory_space<vmem>>, vector<1x1x32xf32>
    %93 = vector.shape_cast %92 : vector<1x1x32xf32> to vector<1x32xf32>
    %c0_44 = arith.constant 0 : index
    %c0_45 = arith.constant 0 : index
    %c0_46 = arith.constant 0 : index
    %94 = vector.load %arg17[%c0_44, %c0_45, %c0_46] : memref<5x1x32xf32, #tpu.memory_space<vmem>>, vector<1x1x32xf32>
    %95 = vector.shape_cast %94 : vector<1x1x32xf32> to vector<1x32xf32>
    %cst_47 = arith.constant dense<0.000000e+00> : vector<16xf32>
    %96 = vector.multi_reduction <add>, %91, %cst_47 [1] : vector<16x32xf32> to vector<16xf32>
    %97 = vector.shape_cast %96 : vector<16xf32> to vector<16x1xf32>
    %98 = arith.mulf %91, %91 : vector<16x32xf32>
    %cst_48 = arith.constant dense<0.000000e+00> : vector<16xf32>
    %99 = vector.multi_reduction <add>, %98, %cst_48 [1] : vector<16x32xf32> to vector<16xf32>
    %100 = vector.shape_cast %99 : vector<16xf32> to vector<16x1xf32>
    %cst_49 = arith.constant 3.125000e-02 : f32
    %101 = vector.broadcast %cst_49 : f32 to vector<16x1xf32>
    %102 = arith.mulf %97, %101 : vector<16x1xf32>
    %cst_50 = arith.constant 3.125000e-02 : f32
    %103 = vector.broadcast %cst_50 : f32 to vector<16x1xf32>
    %104 = arith.mulf %100, %103 : vector<16x1xf32>
    %105 = arith.mulf %102, %102 : vector<16x1xf32>
    %106 = arith.subf %104, %105 : vector<16x1xf32>
    %cst_51 = arith.constant 0.000000e+00 : f32
    %107 = vector.broadcast %cst_51 : f32 to vector<16x1xf32>
    %108 = arith.maximumf %106, %107 : vector<16x1xf32>
    %109 = vector.broadcast %102 : vector<16x1xf32> to vector<16x32xf32>
    %110 = arith.subf %91, %109 : vector<16x32xf32>
    %cst_52 = arith.constant 9.99999974E-6 : f32
    %111 = vector.broadcast %cst_52 : f32 to vector<16x1xf32>
    %112 = arith.addf %108, %111 : vector<16x1xf32>
    %113 = math.rsqrt %112 : vector<16x1xf32>
    %114 = vector.broadcast %113 : vector<16x1xf32> to vector<16x32xf32>
    %115 = arith.mulf %110, %114 : vector<16x32xf32>
    %116 = vector.broadcast %93 : vector<1x32xf32> to vector<16x32xf32>
    %117 = arith.mulf %115, %116 : vector<16x32xf32>
    %118 = vector.broadcast %95 : vector<1x32xf32> to vector<16x32xf32>
    %119 = arith.addf %117, %118 : vector<16x32xf32>
    %c0_53 = arith.constant 0 : index
    %c0_54 = arith.constant 0 : index
    %c0_55 = arith.constant 0 : index
    %120 = vector.load %arg6[%c0_53, %c0_54, %c0_55] : memref<2x32x32xf32, #tpu.memory_space<vmem>>, vector<1x32x32xf32>
    %121 = vector.shape_cast %120 : vector<1x32x32xf32> to vector<32x32xf32>
    %cst_56 = arith.constant dense<0.000000e+00> : vector<16x32xf32>
    %122 = tpu.matmul %119, %121, %cst_56 {dimension_numbers = #tpu.dot_dimension_numbers<[1], [0], [0], [1], [0, 0, 1, 1], [], []>} : vector<16x32xf32>, vector<32x32xf32>, vector<16x32xf32> -> vector<16x32xf32>
    %c0_57 = arith.constant 0 : index
    %c0_58 = arith.constant 0 : index
    %c0_59 = arith.constant 0 : index
    %123 = vector.load %arg7[%c0_57, %c0_58, %c0_59] : memref<2x1x32xf32, #tpu.memory_space<vmem>>, vector<1x1x32xf32>
    %124 = vector.shape_cast %123 : vector<1x1x32xf32> to vector<1x32xf32>
    %125 = vector.broadcast %124 : vector<1x32xf32> to vector<16x32xf32>
    %126 = arith.addf %122, %125 : vector<16x32xf32>
    %127 = vector.extract_strided_slice %8 {offsets = [0, 0], sizes = [16, 32], strides = [1, 1]} : vector<16x128xf32> to vector<16x32xf32>
    %128 = vector.extract_strided_slice %8 {offsets = [0, 32], sizes = [16, 32], strides = [1, 1]} : vector<16x128xf32> to vector<16x32xf32>
    %129 = vector.extract_strided_slice %126 {offsets = [0, 0], sizes = [16, 8], strides = [1, 1]} : vector<16x32xf32> to vector<16x8xf32>
    %130 = vector.extract_strided_slice %127 {offsets = [0, 0], sizes = [16, 8], strides = [1, 1]} : vector<16x32xf32> to vector<16x8xf32>
    "tpu.trace_start"() <{level = 10 : i32, message = "nk,mk->nm"}> : () -> ()
    %cst_60 = arith.constant dense<0.000000e+00> : vector<16x16xf32>
    %131 = tpu.matmul %129, %130, %cst_60 {dimension_numbers = #tpu.dot_dimension_numbers<[1], [1], [0], [0], [0, 0, 1, 0], [], []>} : vector<16x8xf32>, vector<16x8xf32>, vector<16x16xf32> -> vector<16x16xf32>
    "tpu.trace_stop"() : () -> ()
    %132 = arith.addf %131, %3 : vector<16x16xf32>
    %cst_61 = arith.constant dense<0xFF800000> : vector<16xf32>
    %133 = vector.multi_reduction <maximumf>, %132, %cst_61 [1] : vector<16x16xf32> to vector<16xf32>
    %134 = vector.shape_cast %133 : vector<16xf32> to vector<16x1xf32>
    %135 = vector.broadcast %134 : vector<16x1xf32> to vector<16x16xf32>
    %136 = arith.subf %132, %135 : vector<16x16xf32>
    %137 = math.exp %136 : vector<16x16xf32>
    %cst_62 = arith.constant dense<0.000000e+00> : vector<16xf32>
    %138 = vector.multi_reduction <add>, %137, %cst_62 [1] : vector<16x16xf32> to vector<16xf32>
    %139 = vector.shape_cast %138 : vector<16xf32> to vector<16x1xf32>
    %140 = tpu.reciprocal %139 {approx = true} : vector<16x1xf32> -> vector<16x1xf32>
    %141 = vector.broadcast %140 : vector<16x1xf32> to vector<16x16xf32>
    %142 = arith.mulf %137, %141 : vector<16x16xf32>
    %143 = vector.extract_strided_slice %128 {offsets = [0, 0], sizes = [16, 8], strides = [1, 1]} : vector<16x32xf32> to vector<16x8xf32>
    %cst_63 = arith.constant dense<0.000000e+00> : vector<16x8xf32>
    %144 = tpu.matmul %142, %143, %cst_63 {dimension_numbers = #tpu.dot_dimension_numbers<[1], [0], [0], [1], [0, 0, 1, 1], [], []>} : vector<16x16xf32>, vector<16x8xf32>, vector<16x8xf32> -> vector<16x8xf32>
    %145 = vector.extract_strided_slice %126 {offsets = [0, 8], sizes = [16, 8], strides = [1, 1]} : vector<16x32xf32> to vector<16x8xf32>
    %146 = vector.extract_strided_slice %127 {offsets = [0, 8], sizes = [16, 8], strides = [1, 1]} : vector<16x32xf32> to vector<16x8xf32>
    "tpu.trace_start"() <{level = 10 : i32, message = "nk,mk->nm"}> : () -> ()
    %cst_64 = arith.constant dense<0.000000e+00> : vector<16x16xf32>
    %147 = tpu.matmul %145, %146, %cst_64 {dimension_numbers = #tpu.dot_dimension_numbers<[1], [1], [0], [0], [0, 0, 1, 0], [], []>} : vector<16x8xf32>, vector<16x8xf32>, vector<16x16xf32> -> vector<16x16xf32>
    "tpu.trace_stop"() : () -> ()
    %148 = arith.addf %147, %3 : vector<16x16xf32>
    %cst_65 = arith.constant dense<0xFF800000> : vector<16xf32>
    %149 = vector.multi_reduction <maximumf>, %148, %cst_65 [1] : vector<16x16xf32> to vector<16xf32>
    %150 = vector.shape_cast %149 : vector<16xf32> to vector<16x1xf32>
    %151 = vector.broadcast %150 : vector<16x1xf32> to vector<16x16xf32>
    %152 = arith.subf %148, %151 : vector<16x16xf32>
    %153 = math.exp %152 : vector<16x16xf32>
    %cst_66 = arith.constant dense<0.000000e+00> : vector<16xf32>
    %154 = vector.multi_reduction <add>, %153, %cst_66 [1] : vector<16x16xf32> to vector<16xf32>
    %155 = vector.shape_cast %154 : vector<16xf32> to vector<16x1xf32>
    %156 = tpu.reciprocal %155 {approx = true} : vector<16x1xf32> -> vector<16x1xf32>
    %157 = vector.broadcast %156 : vector<16x1xf32> to vector<16x16xf32>
    %158 = arith.mulf %153, %157 : vector<16x16xf32>
    %159 = vector.extract_strided_slice %128 {offsets = [0, 8], sizes = [16, 8], strides = [1, 1]} : vector<16x32xf32> to vector<16x8xf32>
    %cst_67 = arith.constant dense<0.000000e+00> : vector<16x8xf32>
    %160 = tpu.matmul %158, %159, %cst_67 {dimension_numbers = #tpu.dot_dimension_numbers<[1], [0], [0], [1], [0, 0, 1, 1], [], []>} : vector<16x16xf32>, vector<16x8xf32>, vector<16x8xf32> -> vector<16x8xf32>
    %161 = vector.extract_strided_slice %126 {offsets = [0, 16], sizes = [16, 8], strides = [1, 1]} : vector<16x32xf32> to vector<16x8xf32>
    %162 = vector.extract_strided_slice %127 {offsets = [0, 16], sizes = [16, 8], strides = [1, 1]} : vector<16x32xf32> to vector<16x8xf32>
    "tpu.trace_start"() <{level = 10 : i32, message = "nk,mk->nm"}> : () -> ()
    %cst_68 = arith.constant dense<0.000000e+00> : vector<16x16xf32>
    %163 = tpu.matmul %161, %162, %cst_68 {dimension_numbers = #tpu.dot_dimension_numbers<[1], [1], [0], [0], [0, 0, 1, 0], [], []>} : vector<16x8xf32>, vector<16x8xf32>, vector<16x16xf32> -> vector<16x16xf32>
    "tpu.trace_stop"() : () -> ()
    %164 = arith.addf %163, %3 : vector<16x16xf32>
    %cst_69 = arith.constant dense<0xFF800000> : vector<16xf32>
    %165 = vector.multi_reduction <maximumf>, %164, %cst_69 [1] : vector<16x16xf32> to vector<16xf32>
    %166 = vector.shape_cast %165 : vector<16xf32> to vector<16x1xf32>
    %167 = vector.broadcast %166 : vector<16x1xf32> to vector<16x16xf32>
    %168 = arith.subf %164, %167 : vector<16x16xf32>
    %169 = math.exp %168 : vector<16x16xf32>
    %cst_70 = arith.constant dense<0.000000e+00> : vector<16xf32>
    %170 = vector.multi_reduction <add>, %169, %cst_70 [1] : vector<16x16xf32> to vector<16xf32>
    %171 = vector.shape_cast %170 : vector<16xf32> to vector<16x1xf32>
    %172 = tpu.reciprocal %171 {approx = true} : vector<16x1xf32> -> vector<16x1xf32>
    %173 = vector.broadcast %172 : vector<16x1xf32> to vector<16x16xf32>
    %174 = arith.mulf %169, %173 : vector<16x16xf32>
    %175 = vector.extract_strided_slice %128 {offsets = [0, 16], sizes = [16, 8], strides = [1, 1]} : vector<16x32xf32> to vector<16x8xf32>
    %cst_71 = arith.constant dense<0.000000e+00> : vector<16x8xf32>
    %176 = tpu.matmul %174, %175, %cst_71 {dimension_numbers = #tpu.dot_dimension_numbers<[1], [0], [0], [1], [0, 0, 1, 1], [], []>} : vector<16x16xf32>, vector<16x8xf32>, vector<16x8xf32> -> vector<16x8xf32>
    %177 = vector.extract_strided_slice %126 {offsets = [0, 24], sizes = [16, 8], strides = [1, 1]} : vector<16x32xf32> to vector<16x8xf32>
    %178 = vector.extract_strided_slice %127 {offsets = [0, 24], sizes = [16, 8], strides = [1, 1]} : vector<16x32xf32> to vector<16x8xf32>
    "tpu.trace_start"() <{level = 10 : i32, message = "nk,mk->nm"}> : () -> ()
    %cst_72 = arith.constant dense<0.000000e+00> : vector<16x16xf32>
    %179 = tpu.matmul %177, %178, %cst_72 {dimension_numbers = #tpu.dot_dimension_numbers<[1], [1], [0], [0], [0, 0, 1, 0], [], []>} : vector<16x8xf32>, vector<16x8xf32>, vector<16x16xf32> -> vector<16x16xf32>
    "tpu.trace_stop"() : () -> ()
    %180 = arith.addf %179, %3 : vector<16x16xf32>
    %cst_73 = arith.constant dense<0xFF800000> : vector<16xf32>
    %181 = vector.multi_reduction <maximumf>, %180, %cst_73 [1] : vector<16x16xf32> to vector<16xf32>
    %182 = vector.shape_cast %181 : vector<16xf32> to vector<16x1xf32>
    %183 = vector.broadcast %182 : vector<16x1xf32> to vector<16x16xf32>
    %184 = arith.subf %180, %183 : vector<16x16xf32>
    %185 = math.exp %184 : vector<16x16xf32>
    %cst_74 = arith.constant dense<0.000000e+00> : vector<16xf32>
    %186 = vector.multi_reduction <add>, %185, %cst_74 [1] : vector<16x16xf32> to vector<16xf32>
    %187 = vector.shape_cast %186 : vector<16xf32> to vector<16x1xf32>
    %188 = tpu.reciprocal %187 {approx = true} : vector<16x1xf32> -> vector<16x1xf32>
    %189 = vector.broadcast %188 : vector<16x1xf32> to vector<16x16xf32>
    %190 = arith.mulf %185, %189 : vector<16x16xf32>
    %191 = vector.extract_strided_slice %128 {offsets = [0, 24], sizes = [16, 8], strides = [1, 1]} : vector<16x32xf32> to vector<16x8xf32>
    %cst_75 = arith.constant dense<0.000000e+00> : vector<16x8xf32>
    %192 = tpu.matmul %190, %191, %cst_75 {dimension_numbers = #tpu.dot_dimension_numbers<[1], [0], [0], [1], [0, 0, 1, 1], [], []>} : vector<16x16xf32>, vector<16x8xf32>, vector<16x8xf32> -> vector<16x8xf32>
    %193 = tpu.concatenate %144, %160, %176, %192 in 1 : vector<16x8xf32>, vector<16x8xf32>, vector<16x8xf32>, vector<16x8xf32> -> vector<16x32xf32>
    %c1 = arith.constant 1 : index
    %c0_76 = arith.constant 0 : index
    %c0_77 = arith.constant 0 : index
    %194 = vector.load %arg10[%c1, %c0_76, %c0_77] : memref<4x32x32xf32, #tpu.memory_space<vmem>>, vector<1x32x32xf32>
    %195 = vector.shape_cast %194 : vector<1x32x32xf32> to vector<32x32xf32>
    %cst_78 = arith.constant dense<0.000000e+00> : vector<16x32xf32>
    %196 = tpu.matmul %193, %195, %cst_78 {dimension_numbers = #tpu.dot_dimension_numbers<[1], [0], [0], [1], [0, 0, 1, 1], [], []>} : vector<16x32xf32>, vector<32x32xf32>, vector<16x32xf32> -> vector<16x32xf32>
    %c1_79 = arith.constant 1 : index
    %c0_80 = arith.constant 0 : index
    %c0_81 = arith.constant 0 : index
    %197 = vector.load %arg11[%c1_79, %c0_80, %c0_81] : memref<4x1x32xf32, #tpu.memory_space<vmem>>, vector<1x1x32xf32>
    %198 = vector.shape_cast %197 : vector<1x1x32xf32> to vector<1x32xf32>
    %199 = vector.broadcast %198 : vector<1x32xf32> to vector<16x32xf32>
    %200 = arith.addf %196, %199 : vector<16x32xf32>
    %201 = arith.addf %119, %200 : vector<16x32xf32>
    %c1_82 = arith.constant 1 : index
    %c0_83 = arith.constant 0 : index
    %c0_84 = arith.constant 0 : index
    %202 = vector.load %arg16[%c1_82, %c0_83, %c0_84] : memref<5x1x32xf32, #tpu.memory_space<vmem>>, vector<1x1x32xf32>
    %203 = vector.shape_cast %202 : vector<1x1x32xf32> to vector<1x32xf32>
    %c1_85 = arith.constant 1 : index
    %c0_86 = arith.constant 0 : index
    %c0_87 = arith.constant 0 : index
    %204 = vector.load %arg17[%c1_85, %c0_86, %c0_87] : memref<5x1x32xf32, #tpu.memory_space<vmem>>, vector<1x1x32xf32>
    %205 = vector.shape_cast %204 : vector<1x1x32xf32> to vector<1x32xf32>
    %cst_88 = arith.constant dense<0.000000e+00> : vector<16xf32>
    %206 = vector.multi_reduction <add>, %201, %cst_88 [1] : vector<16x32xf32> to vector<16xf32>
    %207 = vector.shape_cast %206 : vector<16xf32> to vector<16x1xf32>
    %208 = arith.mulf %201, %201 : vector<16x32xf32>
    %cst_89 = arith.constant dense<0.000000e+00> : vector<16xf32>
    %209 = vector.multi_reduction <add>, %208, %cst_89 [1] : vector<16x32xf32> to vector<16xf32>
    %210 = vector.shape_cast %209 : vector<16xf32> to vector<16x1xf32>
    %cst_90 = arith.constant 3.125000e-02 : f32
    %211 = vector.broadcast %cst_90 : f32 to vector<16x1xf32>
    %212 = arith.mulf %207, %211 : vector<16x1xf32>
    %cst_91 = arith.constant 3.125000e-02 : f32
    %213 = vector.broadcast %cst_91 : f32 to vector<16x1xf32>
    %214 = arith.mulf %210, %213 : vector<16x1xf32>
    %215 = arith.mulf %212, %212 : vector<16x1xf32>
    %216 = arith.subf %214, %215 : vector<16x1xf32>
    %cst_92 = arith.constant 0.000000e+00 : f32
    %217 = vector.broadcast %cst_92 : f32 to vector<16x1xf32>
    %218 = arith.maximumf %216, %217 : vector<16x1xf32>
    %219 = vector.broadcast %212 : vector<16x1xf32> to vector<16x32xf32>
    %220 = arith.subf %201, %219 : vector<16x32xf32>
    %cst_93 = arith.constant 9.99999974E-6 : f32
    %221 = vector.broadcast %cst_93 : f32 to vector<16x1xf32>
    %222 = arith.addf %218, %221 : vector<16x1xf32>
    %223 = math.rsqrt %222 : vector<16x1xf32>
    %224 = vector.broadcast %223 : vector<16x1xf32> to vector<16x32xf32>
    %225 = arith.mulf %220, %224 : vector<16x32xf32>
    %226 = vector.broadcast %203 : vector<1x32xf32> to vector<16x32xf32>
    %227 = arith.mulf %225, %226 : vector<16x32xf32>
    %228 = vector.broadcast %205 : vector<1x32xf32> to vector<16x32xf32>
    %229 = arith.addf %227, %228 : vector<16x32xf32>
    %c0_94 = arith.constant 0 : index
    %c0_95 = arith.constant 0 : index
    %c0_96 = arith.constant 0 : index
    %230 = vector.load %arg12[%c0_94, %c0_95, %c0_96] : memref<2x32x64xf32, #tpu.memory_space<vmem>>, vector<1x32x64xf32>
    %231 = vector.shape_cast %230 : vector<1x32x64xf32> to vector<32x64xf32>
    %cst_97 = arith.constant dense<0.000000e+00> : vector<16x64xf32>
    %232 = tpu.matmul %229, %231, %cst_97 {dimension_numbers = #tpu.dot_dimension_numbers<[1], [0], [0], [1], [0, 0, 1, 1], [], []>} : vector<16x32xf32>, vector<32x64xf32>, vector<16x64xf32> -> vector<16x64xf32>
    %c0_98 = arith.constant 0 : index
    %c0_99 = arith.constant 0 : index
    %c0_100 = arith.constant 0 : index
    %233 = vector.load %arg13[%c0_98, %c0_99, %c0_100] : memref<2x1x64xf32, #tpu.memory_space<vmem>>, vector<1x1x64xf32>
    %234 = vector.shape_cast %233 : vector<1x1x64xf32> to vector<1x64xf32>
    %235 = vector.broadcast %234 : vector<1x64xf32> to vector<16x64xf32>
    %236 = arith.addf %232, %235 : vector<16x64xf32>
    %cst_101 = arith.constant 0.000000e+00 : f32
    %237 = vector.broadcast %cst_101 : f32 to vector<16x64xf32>
    %238 = arith.maximumf %236, %237 : vector<16x64xf32>
    %c0_102 = arith.constant 0 : index
    %c0_103 = arith.constant 0 : index
    %c0_104 = arith.constant 0 : index
    %239 = vector.load %arg14[%c0_102, %c0_103, %c0_104] : memref<2x64x32xf32, #tpu.memory_space<vmem>>, vector<1x64x32xf32>
    %240 = vector.shape_cast %239 : vector<1x64x32xf32> to vector<64x32xf32>
    %cst_105 = arith.constant dense<0.000000e+00> : vector<16x32xf32>
    %241 = tpu.matmul %238, %240, %cst_105 {dimension_numbers = #tpu.dot_dimension_numbers<[1], [0], [0], [1], [0, 0, 1, 1], [], []>} : vector<16x64xf32>, vector<64x32xf32>, vector<16x32xf32> -> vector<16x32xf32>
    %c0_106 = arith.constant 0 : index
    %c0_107 = arith.constant 0 : index
    %c0_108 = arith.constant 0 : index
    %242 = vector.load %arg15[%c0_106, %c0_107, %c0_108] : memref<2x1x32xf32, #tpu.memory_space<vmem>>, vector<1x1x32xf32>
    %243 = vector.shape_cast %242 : vector<1x1x32xf32> to vector<1x32xf32>
    %244 = vector.broadcast %243 : vector<1x32xf32> to vector<16x32xf32>
    %245 = arith.addf %241, %244 : vector<16x32xf32>
    %246 = arith.addf %229, %245 : vector<16x32xf32>
    %c2 = arith.constant 2 : index
    %c0_109 = arith.constant 0 : index
    %c0_110 = arith.constant 0 : index
    %247 = vector.load %arg16[%c2, %c0_109, %c0_110] : memref<5x1x32xf32, #tpu.memory_space<vmem>>, vector<1x1x32xf32>
    %248 = vector.shape_cast %247 : vector<1x1x32xf32> to vector<1x32xf32>
    %c2_111 = arith.constant 2 : index
    %c0_112 = arith.constant 0 : index
    %c0_113 = arith.constant 0 : index
    %249 = vector.load %arg17[%c2_111, %c0_112, %c0_113] : memref<5x1x32xf32, #tpu.memory_space<vmem>>, vector<1x1x32xf32>
    %250 = vector.shape_cast %249 : vector<1x1x32xf32> to vector<1x32xf32>
    %cst_114 = arith.constant dense<0.000000e+00> : vector<16xf32>
    %251 = vector.multi_reduction <add>, %246, %cst_114 [1] : vector<16x32xf32> to vector<16xf32>
    %252 = vector.shape_cast %251 : vector<16xf32> to vector<16x1xf32>
    %253 = arith.mulf %246, %246 : vector<16x32xf32>
    %cst_115 = arith.constant dense<0.000000e+00> : vector<16xf32>
    %254 = vector.multi_reduction <add>, %253, %cst_115 [1] : vector<16x32xf32> to vector<16xf32>
    %255 = vector.shape_cast %254 : vector<16xf32> to vector<16x1xf32>
    %cst_116 = arith.constant 3.125000e-02 : f32
    %256 = vector.broadcast %cst_116 : f32 to vector<16x1xf32>
    %257 = arith.mulf %252, %256 : vector<16x1xf32>
    %cst_117 = arith.constant 3.125000e-02 : f32
    %258 = vector.broadcast %cst_117 : f32 to vector<16x1xf32>
    %259 = arith.mulf %255, %258 : vector<16x1xf32>
    %260 = arith.mulf %257, %257 : vector<16x1xf32>
    %261 = arith.subf %259, %260 : vector<16x1xf32>
    %cst_118 = arith.constant 0.000000e+00 : f32
    %262 = vector.broadcast %cst_118 : f32 to vector<16x1xf32>
    %263 = arith.maximumf %261, %262 : vector<16x1xf32>
    %264 = vector.broadcast %257 : vector<16x1xf32> to vector<16x32xf32>
    %265 = arith.subf %246, %264 : vector<16x32xf32>
    %cst_119 = arith.constant 9.99999974E-6 : f32
    %266 = vector.broadcast %cst_119 : f32 to vector<16x1xf32>
    %267 = arith.addf %263, %266 : vector<16x1xf32>
    %268 = math.rsqrt %267 : vector<16x1xf32>
    %269 = vector.broadcast %268 : vector<16x1xf32> to vector<16x32xf32>
    %270 = arith.mulf %265, %269 : vector<16x32xf32>
    %271 = vector.broadcast %248 : vector<1x32xf32> to vector<16x32xf32>
    %272 = arith.mulf %270, %271 : vector<16x32xf32>
    %273 = vector.broadcast %250 : vector<1x32xf32> to vector<16x32xf32>
    %274 = arith.addf %272, %273 : vector<16x32xf32>
    %c1_120 = arith.constant 1 : index
    %c0_121 = arith.constant 0 : index
    %c0_122 = arith.constant 0 : index
    %275 = vector.load %arg4[%c1_120, %c0_121, %c0_122] : memref<2x32x96xf32, #tpu.memory_space<vmem>>, vector<1x32x96xf32>
    %276 = vector.shape_cast %275 : vector<1x32x96xf32> to vector<32x96xf32>
    %cst_123 = arith.constant dense<0.000000e+00> : vector<16x96xf32>
    %277 = tpu.matmul %274, %276, %cst_123 {dimension_numbers = #tpu.dot_dimension_numbers<[1], [0], [0], [1], [0, 0, 1, 1], [], []>} : vector<16x32xf32>, vector<32x96xf32>, vector<16x96xf32> -> vector<16x96xf32>
    %c1_124 = arith.constant 1 : index
    %c0_125 = arith.constant 0 : index
    %c0_126 = arith.constant 0 : index
    %278 = vector.load %arg5[%c1_124, %c0_125, %c0_126] : memref<2x1x96xf32, #tpu.memory_space<vmem>>, vector<1x1x96xf32>
    %279 = vector.shape_cast %278 : vector<1x1x96xf32> to vector<1x96xf32>
    %280 = vector.broadcast %279 : vector<1x96xf32> to vector<16x96xf32>
    %281 = arith.addf %277, %280 : vector<16x96xf32>
    %282 = vector.extract_strided_slice %281 {offsets = [0, 0], sizes = [16, 32], strides = [1, 1]} : vector<16x96xf32> to vector<16x32xf32>
    %283 = vector.extract_strided_slice %281 {offsets = [0, 32], sizes = [16, 32], strides = [1, 1]} : vector<16x96xf32> to vector<16x32xf32>
    %284 = vector.extract_strided_slice %281 {offsets = [0, 64], sizes = [16, 32], strides = [1, 1]} : vector<16x96xf32> to vector<16x32xf32>
    %285 = vector.extract_strided_slice %282 {offsets = [0, 0], sizes = [16, 8], strides = [1, 1]} : vector<16x32xf32> to vector<16x8xf32>
    %286 = vector.extract_strided_slice %283 {offsets = [0, 0], sizes = [16, 8], strides = [1, 1]} : vector<16x32xf32> to vector<16x8xf32>
    "tpu.trace_start"() <{level = 10 : i32, message = "nk,mk->nm"}> : () -> ()
    %cst_127 = arith.constant dense<0.000000e+00> : vector<16x16xf32>
    %287 = tpu.matmul %285, %286, %cst_127 {dimension_numbers = #tpu.dot_dimension_numbers<[1], [1], [0], [0], [0, 0, 1, 0], [], []>} : vector<16x8xf32>, vector<16x8xf32>, vector<16x16xf32> -> vector<16x16xf32>
    "tpu.trace_stop"() : () -> ()
    %288 = arith.addf %287, %2 : vector<16x16xf32>
    %cst_128 = arith.constant dense<0xFF800000> : vector<16xf32>
    %289 = vector.multi_reduction <maximumf>, %288, %cst_128 [1] : vector<16x16xf32> to vector<16xf32>
    %290 = vector.shape_cast %289 : vector<16xf32> to vector<16x1xf32>
    %291 = vector.broadcast %290 : vector<16x1xf32> to vector<16x16xf32>
    %292 = arith.subf %288, %291 : vector<16x16xf32>
    %293 = math.exp %292 : vector<16x16xf32>
    %cst_129 = arith.constant dense<0.000000e+00> : vector<16xf32>
    %294 = vector.multi_reduction <add>, %293, %cst_129 [1] : vector<16x16xf32> to vector<16xf32>
    %295 = vector.shape_cast %294 : vector<16xf32> to vector<16x1xf32>
    %296 = tpu.reciprocal %295 {approx = true} : vector<16x1xf32> -> vector<16x1xf32>
    %297 = vector.broadcast %296 : vector<16x1xf32> to vector<16x16xf32>
    %298 = arith.mulf %293, %297 : vector<16x16xf32>
    %299 = vector.extract_strided_slice %284 {offsets = [0, 0], sizes = [16, 8], strides = [1, 1]} : vector<16x32xf32> to vector<16x8xf32>
    %cst_130 = arith.constant dense<0.000000e+00> : vector<16x8xf32>
    %300 = tpu.matmul %298, %299, %cst_130 {dimension_numbers = #tpu.dot_dimension_numbers<[1], [0], [0], [1], [0, 0, 1, 1], [], []>} : vector<16x16xf32>, vector<16x8xf32>, vector<16x8xf32> -> vector<16x8xf32>
    %301 = vector.extract_strided_slice %282 {offsets = [0, 8], sizes = [16, 8], strides = [1, 1]} : vector<16x32xf32> to vector<16x8xf32>
    %302 = vector.extract_strided_slice %283 {offsets = [0, 8], sizes = [16, 8], strides = [1, 1]} : vector<16x32xf32> to vector<16x8xf32>
    "tpu.trace_start"() <{level = 10 : i32, message = "nk,mk->nm"}> : () -> ()
    %cst_131 = arith.constant dense<0.000000e+00> : vector<16x16xf32>
    %303 = tpu.matmul %301, %302, %cst_131 {dimension_numbers = #tpu.dot_dimension_numbers<[1], [1], [0], [0], [0, 0, 1, 0], [], []>} : vector<16x8xf32>, vector<16x8xf32>, vector<16x16xf32> -> vector<16x16xf32>
    "tpu.trace_stop"() : () -> ()
    %304 = arith.addf %303, %2 : vector<16x16xf32>
    %cst_132 = arith.constant dense<0xFF800000> : vector<16xf32>
    %305 = vector.multi_reduction <maximumf>, %304, %cst_132 [1] : vector<16x16xf32> to vector<16xf32>
    %306 = vector.shape_cast %305 : vector<16xf32> to vector<16x1xf32>
    %307 = vector.broadcast %306 : vector<16x1xf32> to vector<16x16xf32>
    %308 = arith.subf %304, %307 : vector<16x16xf32>
    %309 = math.exp %308 : vector<16x16xf32>
    %cst_133 = arith.constant dense<0.000000e+00> : vector<16xf32>
    %310 = vector.multi_reduction <add>, %309, %cst_133 [1] : vector<16x16xf32> to vector<16xf32>
    %311 = vector.shape_cast %310 : vector<16xf32> to vector<16x1xf32>
    %312 = tpu.reciprocal %311 {approx = true} : vector<16x1xf32> -> vector<16x1xf32>
    %313 = vector.broadcast %312 : vector<16x1xf32> to vector<16x16xf32>
    %314 = arith.mulf %309, %313 : vector<16x16xf32>
    %315 = vector.extract_strided_slice %284 {offsets = [0, 8], sizes = [16, 8], strides = [1, 1]} : vector<16x32xf32> to vector<16x8xf32>
    %cst_134 = arith.constant dense<0.000000e+00> : vector<16x8xf32>
    %316 = tpu.matmul %314, %315, %cst_134 {dimension_numbers = #tpu.dot_dimension_numbers<[1], [0], [0], [1], [0, 0, 1, 1], [], []>} : vector<16x16xf32>, vector<16x8xf32>, vector<16x8xf32> -> vector<16x8xf32>
    %317 = vector.extract_strided_slice %282 {offsets = [0, 16], sizes = [16, 8], strides = [1, 1]} : vector<16x32xf32> to vector<16x8xf32>
    %318 = vector.extract_strided_slice %283 {offsets = [0, 16], sizes = [16, 8], strides = [1, 1]} : vector<16x32xf32> to vector<16x8xf32>
    "tpu.trace_start"() <{level = 10 : i32, message = "nk,mk->nm"}> : () -> ()
    %cst_135 = arith.constant dense<0.000000e+00> : vector<16x16xf32>
    %319 = tpu.matmul %317, %318, %cst_135 {dimension_numbers = #tpu.dot_dimension_numbers<[1], [1], [0], [0], [0, 0, 1, 0], [], []>} : vector<16x8xf32>, vector<16x8xf32>, vector<16x16xf32> -> vector<16x16xf32>
    "tpu.trace_stop"() : () -> ()
    %320 = arith.addf %319, %2 : vector<16x16xf32>
    %cst_136 = arith.constant dense<0xFF800000> : vector<16xf32>
    %321 = vector.multi_reduction <maximumf>, %320, %cst_136 [1] : vector<16x16xf32> to vector<16xf32>
    %322 = vector.shape_cast %321 : vector<16xf32> to vector<16x1xf32>
    %323 = vector.broadcast %322 : vector<16x1xf32> to vector<16x16xf32>
    %324 = arith.subf %320, %323 : vector<16x16xf32>
    %325 = math.exp %324 : vector<16x16xf32>
    %cst_137 = arith.constant dense<0.000000e+00> : vector<16xf32>
    %326 = vector.multi_reduction <add>, %325, %cst_137 [1] : vector<16x16xf32> to vector<16xf32>
    %327 = vector.shape_cast %326 : vector<16xf32> to vector<16x1xf32>
    %328 = tpu.reciprocal %327 {approx = true} : vector<16x1xf32> -> vector<16x1xf32>
    %329 = vector.broadcast %328 : vector<16x1xf32> to vector<16x16xf32>
    %330 = arith.mulf %325, %329 : vector<16x16xf32>
    %331 = vector.extract_strided_slice %284 {offsets = [0, 16], sizes = [16, 8], strides = [1, 1]} : vector<16x32xf32> to vector<16x8xf32>
    %cst_138 = arith.constant dense<0.000000e+00> : vector<16x8xf32>
    %332 = tpu.matmul %330, %331, %cst_138 {dimension_numbers = #tpu.dot_dimension_numbers<[1], [0], [0], [1], [0, 0, 1, 1], [], []>} : vector<16x16xf32>, vector<16x8xf32>, vector<16x8xf32> -> vector<16x8xf32>
    %333 = vector.extract_strided_slice %282 {offsets = [0, 24], sizes = [16, 8], strides = [1, 1]} : vector<16x32xf32> to vector<16x8xf32>
    %334 = vector.extract_strided_slice %283 {offsets = [0, 24], sizes = [16, 8], strides = [1, 1]} : vector<16x32xf32> to vector<16x8xf32>
    "tpu.trace_start"() <{level = 10 : i32, message = "nk,mk->nm"}> : () -> ()
    %cst_139 = arith.constant dense<0.000000e+00> : vector<16x16xf32>
    %335 = tpu.matmul %333, %334, %cst_139 {dimension_numbers = #tpu.dot_dimension_numbers<[1], [1], [0], [0], [0, 0, 1, 0], [], []>} : vector<16x8xf32>, vector<16x8xf32>, vector<16x16xf32> -> vector<16x16xf32>
    "tpu.trace_stop"() : () -> ()
    %336 = arith.addf %335, %2 : vector<16x16xf32>
    %cst_140 = arith.constant dense<0xFF800000> : vector<16xf32>
    %337 = vector.multi_reduction <maximumf>, %336, %cst_140 [1] : vector<16x16xf32> to vector<16xf32>
    %338 = vector.shape_cast %337 : vector<16xf32> to vector<16x1xf32>
    %339 = vector.broadcast %338 : vector<16x1xf32> to vector<16x16xf32>
    %340 = arith.subf %336, %339 : vector<16x16xf32>
    %341 = math.exp %340 : vector<16x16xf32>
    %cst_141 = arith.constant dense<0.000000e+00> : vector<16xf32>
    %342 = vector.multi_reduction <add>, %341, %cst_141 [1] : vector<16x16xf32> to vector<16xf32>
    %343 = vector.shape_cast %342 : vector<16xf32> to vector<16x1xf32>
    %344 = tpu.reciprocal %343 {approx = true} : vector<16x1xf32> -> vector<16x1xf32>
    %345 = vector.broadcast %344 : vector<16x1xf32> to vector<16x16xf32>
    %346 = arith.mulf %341, %345 : vector<16x16xf32>
    %347 = vector.extract_strided_slice %284 {offsets = [0, 24], sizes = [16, 8], strides = [1, 1]} : vector<16x32xf32> to vector<16x8xf32>
    %cst_142 = arith.constant dense<0.000000e+00> : vector<16x8xf32>
    %348 = tpu.matmul %346, %347, %cst_142 {dimension_numbers = #tpu.dot_dimension_numbers<[1], [0], [0], [1], [0, 0, 1, 1], [], []>} : vector<16x16xf32>, vector<16x8xf32>, vector<16x8xf32> -> vector<16x8xf32>
    %349 = tpu.concatenate %300, %316, %332, %348 in 1 : vector<16x8xf32>, vector<16x8xf32>, vector<16x8xf32>, vector<16x8xf32> -> vector<16x32xf32>
    %c2_143 = arith.constant 2 : index
    %c0_144 = arith.constant 0 : index
    %c0_145 = arith.constant 0 : index
    %350 = vector.load %arg10[%c2_143, %c0_144, %c0_145] : memref<4x32x32xf32, #tpu.memory_space<vmem>>, vector<1x32x32xf32>
    %351 = vector.shape_cast %350 : vector<1x32x32xf32> to vector<32x32xf32>
    %cst_146 = arith.constant dense<0.000000e+00> : vector<16x32xf32>
    %352 = tpu.matmul %349, %351, %cst_146 {dimension_numbers = #tpu.dot_dimension_numbers<[1], [0], [0], [1], [0, 0, 1, 1], [], []>} : vector<16x32xf32>, vector<32x32xf32>, vector<16x32xf32> -> vector<16x32xf32>
    %c2_147 = arith.constant 2 : index
    %c0_148 = arith.constant 0 : index
    %c0_149 = arith.constant 0 : index
    %353 = vector.load %arg11[%c2_147, %c0_148, %c0_149] : memref<4x1x32xf32, #tpu.memory_space<vmem>>, vector<1x1x32xf32>
    %354 = vector.shape_cast %353 : vector<1x1x32xf32> to vector<1x32xf32>
    %355 = vector.broadcast %354 : vector<1x32xf32> to vector<16x32xf32>
    %356 = arith.addf %352, %355 : vector<16x32xf32>
    %357 = arith.addf %274, %356 : vector<16x32xf32>
    %c3 = arith.constant 3 : index
    %c0_150 = arith.constant 0 : index
    %c0_151 = arith.constant 0 : index
    %358 = vector.load %arg16[%c3, %c0_150, %c0_151] : memref<5x1x32xf32, #tpu.memory_space<vmem>>, vector<1x1x32xf32>
    %359 = vector.shape_cast %358 : vector<1x1x32xf32> to vector<1x32xf32>
    %c3_152 = arith.constant 3 : index
    %c0_153 = arith.constant 0 : index
    %c0_154 = arith.constant 0 : index
    %360 = vector.load %arg17[%c3_152, %c0_153, %c0_154] : memref<5x1x32xf32, #tpu.memory_space<vmem>>, vector<1x1x32xf32>
    %361 = vector.shape_cast %360 : vector<1x1x32xf32> to vector<1x32xf32>
    %cst_155 = arith.constant dense<0.000000e+00> : vector<16xf32>
    %362 = vector.multi_reduction <add>, %357, %cst_155 [1] : vector<16x32xf32> to vector<16xf32>
    %363 = vector.shape_cast %362 : vector<16xf32> to vector<16x1xf32>
    %364 = arith.mulf %357, %357 : vector<16x32xf32>
    %cst_156 = arith.constant dense<0.000000e+00> : vector<16xf32>
    %365 = vector.multi_reduction <add>, %364, %cst_156 [1] : vector<16x32xf32> to vector<16xf32>
    %366 = vector.shape_cast %365 : vector<16xf32> to vector<16x1xf32>
    %cst_157 = arith.constant 3.125000e-02 : f32
    %367 = vector.broadcast %cst_157 : f32 to vector<16x1xf32>
    %368 = arith.mulf %363, %367 : vector<16x1xf32>
    %cst_158 = arith.constant 3.125000e-02 : f32
    %369 = vector.broadcast %cst_158 : f32 to vector<16x1xf32>
    %370 = arith.mulf %366, %369 : vector<16x1xf32>
    %371 = arith.mulf %368, %368 : vector<16x1xf32>
    %372 = arith.subf %370, %371 : vector<16x1xf32>
    %cst_159 = arith.constant 0.000000e+00 : f32
    %373 = vector.broadcast %cst_159 : f32 to vector<16x1xf32>
    %374 = arith.maximumf %372, %373 : vector<16x1xf32>
    %375 = vector.broadcast %368 : vector<16x1xf32> to vector<16x32xf32>
    %376 = arith.subf %357, %375 : vector<16x32xf32>
    %cst_160 = arith.constant 9.99999974E-6 : f32
    %377 = vector.broadcast %cst_160 : f32 to vector<16x1xf32>
    %378 = arith.addf %374, %377 : vector<16x1xf32>
    %379 = math.rsqrt %378 : vector<16x1xf32>
    %380 = vector.broadcast %379 : vector<16x1xf32> to vector<16x32xf32>
    %381 = arith.mulf %376, %380 : vector<16x32xf32>
    %382 = vector.broadcast %359 : vector<1x32xf32> to vector<16x32xf32>
    %383 = arith.mulf %381, %382 : vector<16x32xf32>
    %384 = vector.broadcast %361 : vector<1x32xf32> to vector<16x32xf32>
    %385 = arith.addf %383, %384 : vector<16x32xf32>
    %c1_161 = arith.constant 1 : index
    %c0_162 = arith.constant 0 : index
    %c0_163 = arith.constant 0 : index
    %386 = vector.load %arg6[%c1_161, %c0_162, %c0_163] : memref<2x32x32xf32, #tpu.memory_space<vmem>>, vector<1x32x32xf32>
    %387 = vector.shape_cast %386 : vector<1x32x32xf32> to vector<32x32xf32>
    %cst_164 = arith.constant dense<0.000000e+00> : vector<16x32xf32>
    %388 = tpu.matmul %385, %387, %cst_164 {dimension_numbers = #tpu.dot_dimension_numbers<[1], [0], [0], [1], [0, 0, 1, 1], [], []>} : vector<16x32xf32>, vector<32x32xf32>, vector<16x32xf32> -> vector<16x32xf32>
    %c1_165 = arith.constant 1 : index
    %c0_166 = arith.constant 0 : index
    %c0_167 = arith.constant 0 : index
    %389 = vector.load %arg7[%c1_165, %c0_166, %c0_167] : memref<2x1x32xf32, #tpu.memory_space<vmem>>, vector<1x1x32xf32>
    %390 = vector.shape_cast %389 : vector<1x1x32xf32> to vector<1x32xf32>
    %391 = vector.broadcast %390 : vector<1x32xf32> to vector<16x32xf32>
    %392 = arith.addf %388, %391 : vector<16x32xf32>
    %393 = vector.extract_strided_slice %8 {offsets = [0, 64], sizes = [16, 32], strides = [1, 1]} : vector<16x128xf32> to vector<16x32xf32>
    %394 = vector.extract_strided_slice %8 {offsets = [0, 96], sizes = [16, 32], strides = [1, 1]} : vector<16x128xf32> to vector<16x32xf32>
    %395 = vector.extract_strided_slice %392 {offsets = [0, 0], sizes = [16, 8], strides = [1, 1]} : vector<16x32xf32> to vector<16x8xf32>
    %396 = vector.extract_strided_slice %393 {offsets = [0, 0], sizes = [16, 8], strides = [1, 1]} : vector<16x32xf32> to vector<16x8xf32>
    "tpu.trace_start"() <{level = 10 : i32, message = "nk,mk->nm"}> : () -> ()
    %cst_168 = arith.constant dense<0.000000e+00> : vector<16x16xf32>
    %397 = tpu.matmul %395, %396, %cst_168 {dimension_numbers = #tpu.dot_dimension_numbers<[1], [1], [0], [0], [0, 0, 1, 0], [], []>} : vector<16x8xf32>, vector<16x8xf32>, vector<16x16xf32> -> vector<16x16xf32>
    "tpu.trace_stop"() : () -> ()
    %398 = arith.addf %397, %3 : vector<16x16xf32>
    %cst_169 = arith.constant dense<0xFF800000> : vector<16xf32>
    %399 = vector.multi_reduction <maximumf>, %398, %cst_169 [1] : vector<16x16xf32> to vector<16xf32>
    %400 = vector.shape_cast %399 : vector<16xf32> to vector<16x1xf32>
    %401 = vector.broadcast %400 : vector<16x1xf32> to vector<16x16xf32>
    %402 = arith.subf %398, %401 : vector<16x16xf32>
    %403 = math.exp %402 : vector<16x16xf32>
    %cst_170 = arith.constant dense<0.000000e+00> : vector<16xf32>
    %404 = vector.multi_reduction <add>, %403, %cst_170 [1] : vector<16x16xf32> to vector<16xf32>
    %405 = vector.shape_cast %404 : vector<16xf32> to vector<16x1xf32>
    %406 = tpu.reciprocal %405 {approx = true} : vector<16x1xf32> -> vector<16x1xf32>
    %407 = vector.broadcast %406 : vector<16x1xf32> to vector<16x16xf32>
    %408 = arith.mulf %403, %407 : vector<16x16xf32>
    %409 = vector.extract_strided_slice %394 {offsets = [0, 0], sizes = [16, 8], strides = [1, 1]} : vector<16x32xf32> to vector<16x8xf32>
    %cst_171 = arith.constant dense<0.000000e+00> : vector<16x8xf32>
    %410 = tpu.matmul %408, %409, %cst_171 {dimension_numbers = #tpu.dot_dimension_numbers<[1], [0], [0], [1], [0, 0, 1, 1], [], []>} : vector<16x16xf32>, vector<16x8xf32>, vector<16x8xf32> -> vector<16x8xf32>
    %411 = vector.extract_strided_slice %392 {offsets = [0, 8], sizes = [16, 8], strides = [1, 1]} : vector<16x32xf32> to vector<16x8xf32>
    %412 = vector.extract_strided_slice %393 {offsets = [0, 8], sizes = [16, 8], strides = [1, 1]} : vector<16x32xf32> to vector<16x8xf32>
    "tpu.trace_start"() <{level = 10 : i32, message = "nk,mk->nm"}> : () -> ()
    %cst_172 = arith.constant dense<0.000000e+00> : vector<16x16xf32>
    %413 = tpu.matmul %411, %412, %cst_172 {dimension_numbers = #tpu.dot_dimension_numbers<[1], [1], [0], [0], [0, 0, 1, 0], [], []>} : vector<16x8xf32>, vector<16x8xf32>, vector<16x16xf32> -> vector<16x16xf32>
    "tpu.trace_stop"() : () -> ()
    %414 = arith.addf %413, %3 : vector<16x16xf32>
    %cst_173 = arith.constant dense<0xFF800000> : vector<16xf32>
    %415 = vector.multi_reduction <maximumf>, %414, %cst_173 [1] : vector<16x16xf32> to vector<16xf32>
    %416 = vector.shape_cast %415 : vector<16xf32> to vector<16x1xf32>
    %417 = vector.broadcast %416 : vector<16x1xf32> to vector<16x16xf32>
    %418 = arith.subf %414, %417 : vector<16x16xf32>
    %419 = math.exp %418 : vector<16x16xf32>
    %cst_174 = arith.constant dense<0.000000e+00> : vector<16xf32>
    %420 = vector.multi_reduction <add>, %419, %cst_174 [1] : vector<16x16xf32> to vector<16xf32>
    %421 = vector.shape_cast %420 : vector<16xf32> to vector<16x1xf32>
    %422 = tpu.reciprocal %421 {approx = true} : vector<16x1xf32> -> vector<16x1xf32>
    %423 = vector.broadcast %422 : vector<16x1xf32> to vector<16x16xf32>
    %424 = arith.mulf %419, %423 : vector<16x16xf32>
    %425 = vector.extract_strided_slice %394 {offsets = [0, 8], sizes = [16, 8], strides = [1, 1]} : vector<16x32xf32> to vector<16x8xf32>
    %cst_175 = arith.constant dense<0.000000e+00> : vector<16x8xf32>
    %426 = tpu.matmul %424, %425, %cst_175 {dimension_numbers = #tpu.dot_dimension_numbers<[1], [0], [0], [1], [0, 0, 1, 1], [], []>} : vector<16x16xf32>, vector<16x8xf32>, vector<16x8xf32> -> vector<16x8xf32>
    %427 = vector.extract_strided_slice %392 {offsets = [0, 16], sizes = [16, 8], strides = [1, 1]} : vector<16x32xf32> to vector<16x8xf32>
    %428 = vector.extract_strided_slice %393 {offsets = [0, 16], sizes = [16, 8], strides = [1, 1]} : vector<16x32xf32> to vector<16x8xf32>
    "tpu.trace_start"() <{level = 10 : i32, message = "nk,mk->nm"}> : () -> ()
    %cst_176 = arith.constant dense<0.000000e+00> : vector<16x16xf32>
    %429 = tpu.matmul %427, %428, %cst_176 {dimension_numbers = #tpu.dot_dimension_numbers<[1], [1], [0], [0], [0, 0, 1, 0], [], []>} : vector<16x8xf32>, vector<16x8xf32>, vector<16x16xf32> -> vector<16x16xf32>
    "tpu.trace_stop"() : () -> ()
    %430 = arith.addf %429, %3 : vector<16x16xf32>
    %cst_177 = arith.constant dense<0xFF800000> : vector<16xf32>
    %431 = vector.multi_reduction <maximumf>, %430, %cst_177 [1] : vector<16x16xf32> to vector<16xf32>
    %432 = vector.shape_cast %431 : vector<16xf32> to vector<16x1xf32>
    %433 = vector.broadcast %432 : vector<16x1xf32> to vector<16x16xf32>
    %434 = arith.subf %430, %433 : vector<16x16xf32>
    %435 = math.exp %434 : vector<16x16xf32>
    %cst_178 = arith.constant dense<0.000000e+00> : vector<16xf32>
    %436 = vector.multi_reduction <add>, %435, %cst_178 [1] : vector<16x16xf32> to vector<16xf32>
    %437 = vector.shape_cast %436 : vector<16xf32> to vector<16x1xf32>
    %438 = tpu.reciprocal %437 {approx = true} : vector<16x1xf32> -> vector<16x1xf32>
    %439 = vector.broadcast %438 : vector<16x1xf32> to vector<16x16xf32>
    %440 = arith.mulf %435, %439 : vector<16x16xf32>
    %441 = vector.extract_strided_slice %394 {offsets = [0, 16], sizes = [16, 8], strides = [1, 1]} : vector<16x32xf32> to vector<16x8xf32>
    %cst_179 = arith.constant dense<0.000000e+00> : vector<16x8xf32>
    %442 = tpu.matmul %440, %441, %cst_179 {dimension_numbers = #tpu.dot_dimension_numbers<[1], [0], [0], [1], [0, 0, 1, 1], [], []>} : vector<16x16xf32>, vector<16x8xf32>, vector<16x8xf32> -> vector<16x8xf32>
    %443 = vector.extract_strided_slice %392 {offsets = [0, 24], sizes = [16, 8], strides = [1, 1]} : vector<16x32xf32> to vector<16x8xf32>
    %444 = vector.extract_strided_slice %393 {offsets = [0, 24], sizes = [16, 8], strides = [1, 1]} : vector<16x32xf32> to vector<16x8xf32>
    "tpu.trace_start"() <{level = 10 : i32, message = "nk,mk->nm"}> : () -> ()
    %cst_180 = arith.constant dense<0.000000e+00> : vector<16x16xf32>
    %445 = tpu.matmul %443, %444, %cst_180 {dimension_numbers = #tpu.dot_dimension_numbers<[1], [1], [0], [0], [0, 0, 1, 0], [], []>} : vector<16x8xf32>, vector<16x8xf32>, vector<16x16xf32> -> vector<16x16xf32>
    "tpu.trace_stop"() : () -> ()
    %446 = arith.addf %445, %3 : vector<16x16xf32>
    %cst_181 = arith.constant dense<0xFF800000> : vector<16xf32>
    %447 = vector.multi_reduction <maximumf>, %446, %cst_181 [1] : vector<16x16xf32> to vector<16xf32>
    %448 = vector.shape_cast %447 : vector<16xf32> to vector<16x1xf32>
    %449 = vector.broadcast %448 : vector<16x1xf32> to vector<16x16xf32>
    %450 = arith.subf %446, %449 : vector<16x16xf32>
    %451 = math.exp %450 : vector<16x16xf32>
    %cst_182 = arith.constant dense<0.000000e+00> : vector<16xf32>
    %452 = vector.multi_reduction <add>, %451, %cst_182 [1] : vector<16x16xf32> to vector<16xf32>
    %453 = vector.shape_cast %452 : vector<16xf32> to vector<16x1xf32>
    %454 = tpu.reciprocal %453 {approx = true} : vector<16x1xf32> -> vector<16x1xf32>
    %455 = vector.broadcast %454 : vector<16x1xf32> to vector<16x16xf32>
    %456 = arith.mulf %451, %455 : vector<16x16xf32>
    %457 = vector.extract_strided_slice %394 {offsets = [0, 24], sizes = [16, 8], strides = [1, 1]} : vector<16x32xf32> to vector<16x8xf32>
    %cst_183 = arith.constant dense<0.000000e+00> : vector<16x8xf32>
    %458 = tpu.matmul %456, %457, %cst_183 {dimension_numbers = #tpu.dot_dimension_numbers<[1], [0], [0], [1], [0, 0, 1, 1], [], []>} : vector<16x16xf32>, vector<16x8xf32>, vector<16x8xf32> -> vector<16x8xf32>
    %459 = tpu.concatenate %410, %426, %442, %458 in 1 : vector<16x8xf32>, vector<16x8xf32>, vector<16x8xf32>, vector<16x8xf32> -> vector<16x32xf32>
    %c3_184 = arith.constant 3 : index
    %c0_185 = arith.constant 0 : index
    %c0_186 = arith.constant 0 : index
    %460 = vector.load %arg10[%c3_184, %c0_185, %c0_186] : memref<4x32x32xf32, #tpu.memory_space<vmem>>, vector<1x32x32xf32>
    %461 = vector.shape_cast %460 : vector<1x32x32xf32> to vector<32x32xf32>
    %cst_187 = arith.constant dense<0.000000e+00> : vector<16x32xf32>
    %462 = tpu.matmul %459, %461, %cst_187 {dimension_numbers = #tpu.dot_dimension_numbers<[1], [0], [0], [1], [0, 0, 1, 1], [], []>} : vector<16x32xf32>, vector<32x32xf32>, vector<16x32xf32> -> vector<16x32xf32>
    %c3_188 = arith.constant 3 : index
    %c0_189 = arith.constant 0 : index
    %c0_190 = arith.constant 0 : index
    %463 = vector.load %arg11[%c3_188, %c0_189, %c0_190] : memref<4x1x32xf32, #tpu.memory_space<vmem>>, vector<1x1x32xf32>
    %464 = vector.shape_cast %463 : vector<1x1x32xf32> to vector<1x32xf32>
    %465 = vector.broadcast %464 : vector<1x32xf32> to vector<16x32xf32>
    %466 = arith.addf %462, %465 : vector<16x32xf32>
    %467 = arith.addf %385, %466 : vector<16x32xf32>
    %c4 = arith.constant 4 : index
    %c0_191 = arith.constant 0 : index
    %c0_192 = arith.constant 0 : index
    %468 = vector.load %arg16[%c4, %c0_191, %c0_192] : memref<5x1x32xf32, #tpu.memory_space<vmem>>, vector<1x1x32xf32>
    %469 = vector.shape_cast %468 : vector<1x1x32xf32> to vector<1x32xf32>
    %c4_193 = arith.constant 4 : index
    %c0_194 = arith.constant 0 : index
    %c0_195 = arith.constant 0 : index
    %470 = vector.load %arg17[%c4_193, %c0_194, %c0_195] : memref<5x1x32xf32, #tpu.memory_space<vmem>>, vector<1x1x32xf32>
    %471 = vector.shape_cast %470 : vector<1x1x32xf32> to vector<1x32xf32>
    %cst_196 = arith.constant dense<0.000000e+00> : vector<16xf32>
    %472 = vector.multi_reduction <add>, %467, %cst_196 [1] : vector<16x32xf32> to vector<16xf32>
    %473 = vector.shape_cast %472 : vector<16xf32> to vector<16x1xf32>
    %474 = arith.mulf %467, %467 : vector<16x32xf32>
    %cst_197 = arith.constant dense<0.000000e+00> : vector<16xf32>
    %475 = vector.multi_reduction <add>, %474, %cst_197 [1] : vector<16x32xf32> to vector<16xf32>
    %476 = vector.shape_cast %475 : vector<16xf32> to vector<16x1xf32>
    %cst_198 = arith.constant 3.125000e-02 : f32
    %477 = vector.broadcast %cst_198 : f32 to vector<16x1xf32>
    %478 = arith.mulf %473, %477 : vector<16x1xf32>
    %cst_199 = arith.constant 3.125000e-02 : f32
    %479 = vector.broadcast %cst_199 : f32 to vector<16x1xf32>
    %480 = arith.mulf %476, %479 : vector<16x1xf32>
    %481 = arith.mulf %478, %478 : vector<16x1xf32>
    %482 = arith.subf %480, %481 : vector<16x1xf32>
    %cst_200 = arith.constant 0.000000e+00 : f32
    %483 = vector.broadcast %cst_200 : f32 to vector<16x1xf32>
    %484 = arith.maximumf %482, %483 : vector<16x1xf32>
    %485 = vector.broadcast %478 : vector<16x1xf32> to vector<16x32xf32>
    %486 = arith.subf %467, %485 : vector<16x32xf32>
    %cst_201 = arith.constant 9.99999974E-6 : f32
    %487 = vector.broadcast %cst_201 : f32 to vector<16x1xf32>
    %488 = arith.addf %484, %487 : vector<16x1xf32>
    %489 = math.rsqrt %488 : vector<16x1xf32>
    %490 = vector.broadcast %489 : vector<16x1xf32> to vector<16x32xf32>
    %491 = arith.mulf %486, %490 : vector<16x32xf32>
    %492 = vector.broadcast %469 : vector<1x32xf32> to vector<16x32xf32>
    %493 = arith.mulf %491, %492 : vector<16x32xf32>
    %494 = vector.broadcast %471 : vector<1x32xf32> to vector<16x32xf32>
    %495 = arith.addf %493, %494 : vector<16x32xf32>
    %c1_202 = arith.constant 1 : index
    %c0_203 = arith.constant 0 : index
    %c0_204 = arith.constant 0 : index
    %496 = vector.load %arg12[%c1_202, %c0_203, %c0_204] : memref<2x32x64xf32, #tpu.memory_space<vmem>>, vector<1x32x64xf32>
    %497 = vector.shape_cast %496 : vector<1x32x64xf32> to vector<32x64xf32>
    %cst_205 = arith.constant dense<0.000000e+00> : vector<16x64xf32>
    %498 = tpu.matmul %495, %497, %cst_205 {dimension_numbers = #tpu.dot_dimension_numbers<[1], [0], [0], [1], [0, 0, 1, 1], [], []>} : vector<16x32xf32>, vector<32x64xf32>, vector<16x64xf32> -> vector<16x64xf32>
    %c1_206 = arith.constant 1 : index
    %c0_207 = arith.constant 0 : index
    %c0_208 = arith.constant 0 : index
    %499 = vector.load %arg13[%c1_206, %c0_207, %c0_208] : memref<2x1x64xf32, #tpu.memory_space<vmem>>, vector<1x1x64xf32>
    %500 = vector.shape_cast %499 : vector<1x1x64xf32> to vector<1x64xf32>
    %501 = vector.broadcast %500 : vector<1x64xf32> to vector<16x64xf32>
    %502 = arith.addf %498, %501 : vector<16x64xf32>
    %cst_209 = arith.constant 0.000000e+00 : f32
    %503 = vector.broadcast %cst_209 : f32 to vector<16x64xf32>
    %504 = arith.maximumf %502, %503 : vector<16x64xf32>
    %c1_210 = arith.constant 1 : index
    %c0_211 = arith.constant 0 : index
    %c0_212 = arith.constant 0 : index
    %505 = vector.load %arg14[%c1_210, %c0_211, %c0_212] : memref<2x64x32xf32, #tpu.memory_space<vmem>>, vector<1x64x32xf32>
    %506 = vector.shape_cast %505 : vector<1x64x32xf32> to vector<64x32xf32>
    %cst_213 = arith.constant dense<0.000000e+00> : vector<16x32xf32>
    %507 = tpu.matmul %504, %506, %cst_213 {dimension_numbers = #tpu.dot_dimension_numbers<[1], [0], [0], [1], [0, 0, 1, 1], [], []>} : vector<16x64xf32>, vector<64x32xf32>, vector<16x32xf32> -> vector<16x32xf32>
    %c1_214 = arith.constant 1 : index
    %c0_215 = arith.constant 0 : index
    %c0_216 = arith.constant 0 : index
    %508 = vector.load %arg15[%c1_214, %c0_215, %c0_216] : memref<2x1x32xf32, #tpu.memory_space<vmem>>, vector<1x1x32xf32>
    %509 = vector.shape_cast %508 : vector<1x1x32xf32> to vector<1x32xf32>
    %510 = vector.broadcast %509 : vector<1x32xf32> to vector<16x32xf32>
    %511 = arith.addf %507, %510 : vector<16x32xf32>
    %512 = arith.addf %495, %511 : vector<16x32xf32>
    %c0_217 = arith.constant 0 : index
    %c0_218 = arith.constant 0 : index
    %513 = vector.load %arg18[%c0_217, %c0_218] : memref<1x32xf32, #tpu.memory_space<vmem>>, vector<1x32xf32>
    %c0_219 = arith.constant 0 : index
    %c0_220 = arith.constant 0 : index
    %514 = vector.load %arg19[%c0_219, %c0_220] : memref<1x1xf32, #tpu.memory_space<vmem>>, vector<1x1xf32>
    %cst_221 = arith.constant dense<0.000000e+00> : vector<16xf32>
    %515 = vector.multi_reduction <add>, %512, %cst_221 [1] : vector<16x32xf32> to vector<16xf32>
    %516 = vector.shape_cast %515 : vector<16xf32> to vector<16x1xf32>
    %517 = arith.mulf %512, %512 : vector<16x32xf32>
    %cst_222 = arith.constant dense<0.000000e+00> : vector<16xf32>
    %518 = vector.multi_reduction <add>, %517, %cst_222 [1] : vector<16x32xf32> to vector<16xf32>
    %519 = vector.shape_cast %518 : vector<16xf32> to vector<16x1xf32>
    %cst_223 = arith.constant 3.125000e-02 : f32
    %520 = vector.broadcast %cst_223 : f32 to vector<16x1xf32>
    %521 = arith.mulf %516, %520 : vector<16x1xf32>
    %cst_224 = arith.constant 3.125000e-02 : f32
    %522 = vector.broadcast %cst_224 : f32 to vector<16x1xf32>
    %523 = arith.mulf %519, %522 : vector<16x1xf32>
    %524 = arith.mulf %521, %521 : vector<16x1xf32>
    %525 = arith.subf %523, %524 : vector<16x1xf32>
    %cst_225 = arith.constant 0.000000e+00 : f32
    %526 = vector.broadcast %cst_225 : f32 to vector<16x1xf32>
    %527 = arith.maximumf %525, %526 : vector<16x1xf32>
    %528 = vector.broadcast %521 : vector<16x1xf32> to vector<16x32xf32>
    %529 = arith.subf %512, %528 : vector<16x32xf32>
    %cst_226 = arith.constant 9.99999974E-6 : f32
    %530 = vector.broadcast %cst_226 : f32 to vector<16x1xf32>
    %531 = arith.addf %527, %530 : vector<16x1xf32>
    %532 = math.rsqrt %531 : vector<16x1xf32>
    %533 = vector.broadcast %532 : vector<16x1xf32> to vector<16x32xf32>
    %534 = arith.mulf %529, %533 : vector<16x32xf32>
    %535 = vector.broadcast %513 : vector<1x32xf32> to vector<16x32xf32>
    %536 = arith.mulf %534, %535 : vector<16x32xf32>
    %cst_227 = arith.constant dense<0.000000e+00> : vector<16xf32>
    %537 = vector.multi_reduction <add>, %536, %cst_227 [1] : vector<16x32xf32> to vector<16xf32>
    %538 = vector.shape_cast %537 : vector<16xf32> to vector<16x1xf32>
    %539 = vector.broadcast %514 : vector<1x1xf32> to vector<16x1xf32>
    %540 = arith.addf %538, %539 : vector<16x1xf32>
    %c0_228 = arith.constant 0 : index
    %c0_229 = arith.constant 0 : index
    %541 = vector.load %arg20[%c0_228, %c0_229] : memref<16x1xf32, #tpu.memory_space<vmem>>, vector<16x1xf32>
    tpu.vector_store %arg20[%c0_228, %c0_229], %540 {strides = array<i32>} : memref<16x1xf32, #tpu.memory_space<vmem>>, vector<16x1xf32>,
    return
  }
}

</mosaic_0001>

<llo_original>
// kernel: eq.17
$region0: #{eq.17}
  %s0 = inlined_call_operand.vmem [shape: s32[2,8], index: 0, kind: input, shape index: {}]
  %s1 = inlined_call_operand.vmem [shape: s32[16], index: 1, kind: output, shape index: {}]
  $region1: #{eq.17} parent=0
    #allocation0 [shape = 'u8[4096]{0}', space=vmem, size = 0x1000, scoped, tag = 'scoped mem for output reshape']
    #allocation1 [shape = 'u8[4096]{0}', space=vmem, size = 0x1000, scoped, tag = 'scoped mem for input reshape']
    %s3 = sshllo.u32 0, 2
    %v4 = vld [vmem:[%s0] sm:%s3]
    %5 = vst [vmem:[#allocation1] sm:%s3] %v4
    %v6 = vld [vmem:[#allocation1] sm:$0x1]
    %vm7 = vcmask 64512
    %8 = vst.msk [vmem:[#allocation0] sm:$0x1] %vm7, %v6
    %s9 = scalar_lea.vmem [#allocation1], 1
    %v10 = vld [vmem:[%s9] sm:$0x1]
    %11 = vrot.lane.b32.xlu0 %v10, 8
    %v12 = vpop.permute.xlu0 %11
    %vm13 = vcmask 130112
    %14 = vst.msk [vmem:[#allocation0] sm:$0x1] %vm13, %v12
    %s16 = sshllo.u32 0, 1
    %v18 = vld [vmem:[#allocation0] sm:%s16]
    %s19 = sshllo.u32 0, 1
    %20 = vst [vmem:[%s1] sm:%s19] %v18

// kernel: _selection_core.1
$region0: #{_selection_core.1}
  #allocation0 [shape = 'u32[]', space=smem, size = 0x4, offset = 0x4, fixed_abs, tag = 'smem constant byte address 0x4 - core index']
  #allocation1 [shape = 'u32[144,128]{1,0:T(1,128)}', space=vmem, size = 0x12000, scoped, tag = 'internal scratch']
  #allocation2 [shape = 'f32[1,1]{1,0:T(1,128)S(1)}', space=vmem, size = 0x200, scoped, tag = 'scoped memory for _selection_core.1']
  %s0 = inlined_call_operand.vmem [shape: f32[16,32], index: 0, kind: input, shape index: {}]
  %s1 = inlined_call_operand.hbm [shape: f32[16,32], index: 1, kind: input, shape index: {}]
  %s2 = inlined_call_operand.vmem [shape: f32[16,16], index: 2, kind: input, shape index: {}, may-alias: {2,3}]
  %s3 = inlined_call_operand.vmem [shape: f32[16,16], index: 3, kind: input, shape index: {}, may-alias: {2,3}]
  %s4 = inlined_call_operand.vmem [shape: f32[2,32,96], index: 4, kind: input, shape index: {}]
  %s5 = inlined_call_operand.hbm [shape: f32[2,1,96], index: 5, kind: input, shape index: {}]
  %s6 = inlined_call_operand.hbm [shape: f32[2,32,32], index: 6, kind: input, shape index: {}]
  %s7 = inlined_call_operand.hbm [shape: f32[2,1,32], index: 7, kind: input, shape index: {}]
  %s8 = inlined_call_operand.vmem [shape: f32[32,128], index: 8, kind: input, shape index: {}]
  %s9 = inlined_call_operand.vmem [shape: f32[1,128], index: 9, kind: input, shape index: {}]
  %s10 = inlined_call_operand.vmem [shape: f32[4,32,32], index: 10, kind: input, shape index: {}]
  %s11 = inlined_call_operand.vmem [shape: f32[4,1,32], index: 11, kind: input, shape index: {}]
  %s12 = inlined_call_operand.hbm [shape: f32[2,32,64], index: 12, kind: input, shape index: {}]
  %s13 = inlined_call_operand.hbm [shape: f32[2,1,64], index: 13, kind: input, shape index: {}]
  %s14 = inlined_call_operand.vmem [shape: f32[2,64,32], index: 14, kind: input, shape index: {}]
  %s15 = inlined_call_operand.hbm [shape: f32[2,1,32], index: 15, kind: input, shape index: {}]
  %s16 = inlined_call_operand.vmem [shape: f32[5,1,32], index: 16, kind: input, shape index: {}]
  %s17 = inlined_call_operand.vmem [shape: f32[5,1,32], index: 17, kind: input, shape index: {}]
  %s18 = inlined_call_operand.hbm [shape: f32[1,32], index: 18, kind: input, shape index: {}]
  %s19 = inlined_call_operand.<no memory space> [shape: f32[1,1], index: 19, kind: input, shape index: {}]
  %s20 = inlined_call_operand.vmem [shape: f32[16,1], index: 20, kind: output, shape index: {}]
  %s21 = sld [smem:[#allocation0]]
  $region122: #{_selection_core.1} parent=0
    _
  %s23 = ssub.s32 1, %s21
  %s24 = scalar_select 0, %s23, %s21
  %v25 = vstv %s19
  %26 = vst [vmem:[#allocation2] sm:$0x1] %v25
  $region1: #{_selection_core.1} parent=0
    #allocation3 [shape = 'u8[8192]{0}', space=vmem, size = 0x2000, scoped, tag = 'input window, operand 1, single buffered']
    #allocation4 [shape = 's32[1]{0}', space=sflag, size = 0x4, scoped, tag = 'scoped memory for _selection_core.1']
    #allocation5 [shape = 'u8[1024]{0}', space=vmem, size = 0x400, scoped, tag = 'input window, operand 5, single buffered']
    #allocation6 [shape = 's32[1]{0}', space=sflag, size = 0x4, scoped, tag = 'scoped memory for _selection_core.1']
    #allocation7 [shape = 'u8[32768]{0}', space=vmem, size = 0x8000, scoped, tag = 'input window, operand 6, single buffered']
    #allocation8 [shape = 'u8[1024]{0}', space=vmem, size = 0x400, scoped, tag = 'input window, operand 7, single buffered']
    #allocation9 [shape = 's32[1]{0}', space=sflag, size = 0x4, scoped, tag = 'scoped memory for _selection_core.1']
    #allocation10 [shape = 'u8[32768]{0}', space=vmem, size = 0x8000, scoped, tag = 'input window, operand 12, single buffered']
    #allocation11 [shape = 'u8[1024]{0}', space=vmem, size = 0x400, scoped, tag = 'input window, operand 13, single buffered']
    #allocation12 [shape = 's32[1]{0}', space=sflag, size = 0x4, scoped, tag = 'scoped memory for _selection_core.1']
    #allocation13 [shape = 'u8[1024]{0}', space=vmem, size = 0x400, scoped, tag = 'input window, operand 15, single buffered']
    #allocation14 [shape = 'u8[512]{0}', space=vmem, size = 0x400, scoped, tag = 'input window, operand 18, single buffered']
    #allocation15 [shape = 's32[1]{0}', space=sflag, size = 0x4, scoped, tag = 'scoped memory for _selection_core.1']
    %27 = vsyncpa [#allocation4], 0
    %28 = vsyncpa [#allocation6], 0
    %29 = vsyncpa [#allocation9], 0
    %30 = vsyncpa [#allocation12], 0
    %31 = vsyncpa [#allocation15], 0
    // Predicated region
    $region2: #{_selection_core.1} parent=1 // pred_check
      _
    $region3: #{_selection_core.1} parent=1 // pred_check_branch
      %33 = sbr.rel (0) target = $region5
    $region4: #{_selection_core.1} parent=1 // pred_region
      _
    $region5: #{_selection_core.1} parent=1 // pred_fallthru
      _
    // Predicated region
    $region6: #{_selection_core.1} parent=1 // pred_check
      _
    $region7: #{_selection_core.1} parent=1 // pred_check_branch
      %35 = sbr.rel (0) target = $region9
    $region8: #{_selection_core.1} parent=1 // pred_region
      %s37 = ssub.s32 256, 256
      %38 = vsyncadd [#allocation4], %s37
      %s39 = sshll.u32 [#allocation3], 4
      %s40 = int_to_ptr.vmem [resolvable:$true] %s39
      %45 = dma.hbm_to_vmem [thread:$0]  %s1, 256, %s40, [#allocation4], 128, 128, 8
    $region9: #{_selection_core.1} parent=1 // pred_fallthru
      _
    // Predicated region
    $region10: #{_selection_core.1} parent=1 // pred_check
      _
    $region11: #{_selection_core.1} parent=1 // pred_check_branch
      %47 = sbr.rel (0) target = $region13
    $region12: #{_selection_core.1} parent=1 // pred_region
      _
    $region13: #{_selection_core.1} parent=1 // pred_fallthru
      _
    // Predicated region
    $region14: #{_selection_core.1} parent=1 // pred_check
      _
    $region15: #{_selection_core.1} parent=1 // pred_check_branch
      %49 = sbr.rel (0) target = $region17
    $region16: #{_selection_core.1} parent=1 // pred_region
      _
    $region17: #{_selection_core.1} parent=1 // pred_fallthru
      _
    // Predicated region
    $region18: #{_selection_core.1} parent=1 // pred_check
      _
    $region19: #{_selection_core.1} parent=1 // pred_check_branch
      %51 = sbr.rel (0) target = $region21
    $region20: #{_selection_core.1} parent=1 // pred_region
      _
    $region21: #{_selection_core.1} parent=1 // pred_fallthru
      _
    // Predicated region
    $region22: #{_selection_core.1} parent=1 // pred_check
      _
    $region23: #{_selection_core.1} parent=1 // pred_check_branch
      %53 = sbr.rel (0) target = $region25
    $region24: #{_selection_core.1} parent=1 // pred_region
      %s55 = ssub.s32 32, 32
      %56 = vsyncadd [#allocation6], %s55
      %s57 = sshll.u32 [#allocation5], 4
      %s58 = int_to_ptr.vmem [resolvable:$true] %s57
      %63 = dma.hbm_to_vmem [thread:$0]  %s5, 32, %s58, [#allocation6], 16, 16, 1
    $region25: #{_selection_core.1} parent=1 // pred_fallthru
      _
    // Predicated region
    $region26: #{_selection_core.1} parent=1 // pred_check
      _
    $region27: #{_selection_core.1} parent=1 // pred_check_branch
      %65 = sbr.rel (0) target = $region29
    $region28: #{_selection_core.1} parent=1 // pred_region
      %s67 = ssub.s32 1024, 1024
      %68 = vsyncadd [#allocation6], %s67
      %s69 = sshll.u32 [#allocation7], 4
      %s70 = int_to_ptr.vmem [resolvable:$true] %s69
      %75 = dma.hbm_to_vmem [thread:$0]  %s6, 1024, %s70, [#allocation6], 128, 128, 8
    $region29: #{_selection_core.1} parent=1 // pred_fallthru
      _
    // Predicated region
    $region30: #{_selection_core.1} parent=1 // pred_check
      _
    $region31: #{_selection_core.1} parent=1 // pred_check_branch
      %77 = sbr.rel (0) target = $region33
    $region32: #{_selection_core.1} parent=1 // pred_region
      %s79 = ssub.s32 32, 32
      %80 = vsyncadd [#allocation9], %s79
      %s81 = sshll.u32 [#allocation8], 4
      %s82 = int_to_ptr.vmem [resolvable:$true] %s81
      %87 = dma.hbm_to_vmem [thread:$0]  %s7, 32, %s82, [#allocation9], 16, 16, 1
    $region33: #{_selection_core.1} parent=1 // pred_fallthru
      _
    // Predicated region
    $region34: #{_selection_core.1} parent=1 // pred_check
      _
    $region35: #{_selection_core.1} parent=1 // pred_check_branch
      %89 = sbr.rel (0) target = $region37
    $region36: #{_selection_core.1} parent=1 // pred_region
      _
    $region37: #{_selection_core.1} parent=1 // pred_fallthru
      _
    // Predicated region
    $region38: #{_selection_core.1} parent=1 // pred_check
      _
    $region39: #{_selection_core.1} parent=1 // pred_check_branch
      %91 = sbr.rel (0) target = $region41
    $region40: #{_selection_core.1} parent=1 // pred_region
      _
    $region41: #{_selection_core.1} parent=1 // pred_fallthru
      _
    // Predicated region
    $region42: #{_selection_core.1} parent=1 // pred_check
      _
    $region43: #{_selection_core.1} parent=1 // pred_check_branch
      %93 = sbr.rel (0) target = $region45
    $region44: #{_selection_core.1} parent=1 // pred_region
      _
    $region45: #{_selection_core.1} parent=1 // pred_fallthru
      _
    // Predicated region
    $region46: #{_selection_core.1} parent=1 // pred_check
      _
    $region47: #{_selection_core.1} parent=1 // pred_check_branch
      %95 = sbr.rel (0) target = $region49
    $region48: #{_selection_core.1} parent=1 // pred_region
      _
    $region49: #{_selection_core.1} parent=1 // pred_fallthru
      _
    // Predicated region
    $region50: #{_selection_core.1} parent=1 // pred_check
      _
    $region51: #{_selection_core.1} parent=1 // pred_check_branch
      %97 = sbr.rel (0) target = $region53
    $region52: #{_selection_core.1} parent=1 // pred_region
      %s99 = ssub.s32 1024, 1024
      %100 = vsyncadd [#allocation9], %s99
      %s101 = sshll.u32 [#allocation10], 4
      %s102 = int_to_ptr.vmem [resolvable:$true] %s101
      %107 = dma.hbm_to_vmem [thread:$0]  %s12, 1024, %s102, [#allocation9], 128, 128, 8
    $region53: #{_selection_core.1} parent=1 // pred_fallthru
      _
    // Predicated region
    $region54: #{_selection_core.1} parent=1 // pred_check
      _
    $region55: #{_selection_core.1} parent=1 // pred_check_branch
      %109 = sbr.rel (0) target = $region57
    $region56: #{_selection_core.1} parent=1 // pred_region
      %s111 = ssub.s32 32, 32
      %112 = vsyncadd [#allocation12], %s111
      %s113 = sshll.u32 [#allocation11], 4
      %s114 = int_to_ptr.vmem [resolvable:$true] %s113
      %119 = dma.hbm_to_vmem [thread:$0]  %s13, 32, %s114, [#allocation12], 16, 16, 1
    $region57: #{_selection_core.1} parent=1 // pred_fallthru
      _
    // Predicated region
    $region58: #{_selection_core.1} parent=1 // pred_check
      _
    $region59: #{_selection_core.1} parent=1 // pred_check_branch
      %121 = sbr.rel (0) target = $region61
    $region60: #{_selection_core.1} parent=1 // pred_region
      _
    $region61: #{_selection_core.1} parent=1 // pred_fallthru
      _
    // Predicated region
    $region62: #{_selection_core.1} parent=1 // pred_check
      _
    $region63: #{_selection_core.1} parent=1 // pred_check_branch
      %123 = sbr.rel (0) target = $region65
    $region64: #{_selection_core.1} parent=1 // pred_region
      %s125 = ssub.s32 32, 32
      %126 = vsyncadd [#allocation12], %s125
      %s127 = sshll.u32 [#allocation13], 4
      %s128 = int_to_ptr.vmem [resolvable:$true] %s127
      %133 = dma.hbm_to_vmem [thread:$0]  %s15, 32, %s128, [#allocation12], 16, 16, 1
    $region65: #{_selection_core.1} parent=1 // pred_fallthru
      _
    // Predicated region
    $region66: #{_selection_core.1} parent=1 // pred_check
      _
    $region67: #{_selection_core.1} parent=1 // pred_check_branch
      %135 = sbr.rel (0) target = $region69
    $region68: #{_selection_core.1} parent=1 // pred_region
      _
    $region69: #{_selection_core.1} parent=1 // pred_fallthru
      _
    // Predicated region
    $region70: #{_selection_core.1} parent=1 // pred_check
      _
    $region71: #{_selection_core.1} parent=1 // pred_check_branch
      %137 = sbr.rel (0) target = $region73
    $region72: #{_selection_core.1} parent=1 // pred_region
      _
    $region73: #{_selection_core.1} parent=1 // pred_fallthru
      _
    // Predicated region
    $region74: #{_selection_core.1} parent=1 // pred_check
      _
    $region75: #{_selection_core.1} parent=1 // pred_check_branch
      %139 = sbr.rel (0) target = $region77
    $region76: #{_selection_core.1} parent=1 // pred_region
      %s141 = ssub.s32 16, 16
      %142 = vsyncadd [#allocation15], %s141
      %s144 = sshll.u32 [#allocation14], 4
      %s145 = int_to_ptr.vmem [resolvable:$true] %s144
      %147 = dma.hbm_to_vmem [thread:$0]  %s18, 16, %s145, [#allocation15]
    $region77: #{_selection_core.1} parent=1 // pred_fallthru
      _
    // Predicated region
    $region78: #{_selection_core.1} parent=1 // pred_check
      _
    $region79: #{_selection_core.1} parent=1 // pred_check_branch
      %149 = sbr.rel (0) target = $region81
    $region80: #{_selection_core.1} parent=1 // pred_region
      _
    $region81: #{_selection_core.1} parent=1 // pred_fallthru
      _
    // Predicated region
    $region82: #{_selection_core.1} parent=1 // pred_check
      _
    $region83: #{_selection_core.1} parent=1 // pred_check_branch
      %151 = sbr.rel (0) target = $region85
    $region84: #{_selection_core.1} parent=1 // pred_region
      %152 = dma.done [#allocation4], 256
    $region85: #{_selection_core.1} parent=1 // pred_fallthru
      _
    // Predicated region
    $region86: #{_selection_core.1} parent=1 // pred_check
      _
    $region87: #{_selection_core.1} parent=1 // pred_check_branch
      %154 = sbr.rel (0) target = $region89
    $region88: #{_selection_core.1} parent=1 // pred_region
      %155 = dma.done [#allocation6], 32
    $region89: #{_selection_core.1} parent=1 // pred_fallthru
      _
    // Predicated region
    $region90: #{_selection_core.1} parent=1 // pred_check
      _
    $region91: #{_selection_core.1} parent=1 // pred_check_branch
      %157 = sbr.rel (0) target = $region93
    $region92: #{_selection_core.1} parent=1 // pred_region
      %158 = dma.done [#allocation6], 1024
    $region93: #{_selection_core.1} parent=1 // pred_fallthru
      _
    // Predicated region
    $region94: #{_selection_core.1} parent=1 // pred_check
      _
    $region95: #{_selection_core.1} parent=1 // pred_check_branch
      %160 = sbr.rel (0) target = $region97
    $region96: #{_selection_core.1} parent=1 // pred_region
      %161 = dma.done [#allocation9], 32
    $region97: #{_selection_core.1} parent=1 // pred_fallthru
      _
    // Predicated region
    $region98: #{_selection_core.1} parent=1 // pred_check
      _
    $region99: #{_selection_core.1} parent=1 // pred_check_branch
      %163 = sbr.rel (0) target = $region101
    $region100: #{_selection_core.1} parent=1 // pred_region
      %164 = dma.done [#allocation9], 1024
    $region101: #{_selection_core.1} parent=1 // pred_fallthru
      _
    // Predicated region
    $region102: #{_selection_core.1} parent=1 // pred_check
      _
    $region103: #{_selection_core.1} parent=1 // pred_check_branch
      %166 = sbr.rel (0) target = $region105
    $region104: #{_selection_core.1} parent=1 // pred_region
      %167 = dma.done [#allocation12], 32
    $region105: #{_selection_core.1} parent=1 // pred_fallthru
      _
    // Predicated region
    $region106: #{_selection_core.1} parent=1 // pred_check
      _
    $region107: #{_selection_core.1} parent=1 // pred_check_branch
      %169 = sbr.rel (0) target = $region109
    $region108: #{_selection_core.1} parent=1 // pred_region
      %170 = dma.done [#allocation12], 32
    $region109: #{_selection_core.1} parent=1 // pred_fallthru
      _
    // Predicated region
    $region110: #{_selection_core.1} parent=1 // pred_check
      _
    $region111: #{_selection_core.1} parent=1 // pred_check_branch
      %172 = sbr.rel (0) target = $region113
    $region112: #{_selection_core.1} parent=1 // pred_region
      %173 = dma.done [#allocation15], 16
    $region113: #{_selection_core.1} parent=1 // pred_fallthru
      _
    %v174 = vld [vmem:[%s0] sm:$0xff]
    %v175 = vld [vmem:[%s0 + $0x8] sm:$0xff]
    %v176 = vld [vmem:[#allocation3] sm:$0xff]
    %v177 = vld [vmem:[#allocation3 + $0x8] sm:$0xff]
    %v178 = vld [vmem:[%s2] sm:$0xff]
    %v179 = vld [vmem:[%s2 + $0x8] sm:$0xff]
    %v180 = vld [vmem:[%s3] sm:$0xff]
    %v181 = vld [vmem:[%s3 + $0x8] sm:$0xff]
    %v182 = vld [vmem:[%s8] sm:$0xff]
    %v183 = vld [vmem:[%s8 + $0x8] sm:$0xff]
    %v184 = vld [vmem:[%s8 + $0x10] sm:$0xff]
    %v185 = vld [vmem:[%s8 + $0x18] sm:$0xff]
    %v186 = vld [vmem:[%s9] sm:$0x1]
    %v188 = vlaneseq
    %v189 = vshrl.u32 %v188, 7
    %v190 = vsub.s32 0, %v189
    %v191 = vrot.slane %v186, %v190
    %vm193 = vcmask 261120
    %v195 = vsel %vm193, %v176, 0
    %v198 = vsel %vm193, %v177, 0
    %200 = vmatprep.subr.mxu0 0.0
    %201 = vmatpush1.msra.mxu0 %v182
    %202 = vmatprep.subr.mxu0 0.0
    %203 = vmatpush1.msra.mxu0 %v183
    %204 = vmatprep.subr.mxu0 0.0
    %205 = vmatpush1.msra.mxu0 %v184
    %206 = vmatprep.subr.mxu0 0.0
    %207 = vmatpush1.msra.mxu0 %v185
    %208 = vmatprep.subr.mxu0 0.0
    %209 = vmatpush1.msra.mxu0 0.0
    %210 = vmatprep.subr.mxu0 0.0
    %211 = vmatpush1.msra.mxu0 0.0
    %212 = vmatprep.subr.mxu0 0.0
    %213 = vmatpush1.msra.mxu0 0.0
    %214 = vmatprep.subr.mxu0 0.0
    %215 = vmatpush1.msra.mxu0 0.0
    %216 = vmatprep.subr.mxu0 0.0
    %217 = vmatpush1.msra.mxu0 0.0
    %218 = vmatprep.subr.mxu0 0.0
    %219 = vmatpush1.msra.mxu0 0.0
    %220 = vmatprep.subr.mxu0 0.0
    %221 = vmatpush1.msra.mxu0 0.0
    %222 = vmatprep.subr.mxu0 0.0
    %223 = vmatpush1.msra.mxu0 0.0
    %224 = vmatprep.subr.mxu0 0.0
    %225 = vmatpush1.msra.mxu0 0.0
    %226 = vmatprep.subr.mxu0 0.0
    %227 = vmatpush1.msra.mxu0 0.0
    %228 = vmatprep.subr.mxu0 0.0
    %229 = vmatpush1.msra.mxu0 0.0
    %230 = vmatprep.subr.mxu0 0.0
    %231 = vmatpush1.msra.mxu0 0.0
    %232 = vmatprep.subr.mxu0 0.0
    %233 = vmatpush1.msra.mxu0 0.0
    %234 = vmatprep.subr.mxu0 0.0
    %235 = vmatpush1.msra.mxu0 0.0
    %236 = vmatprep.subr.mxu0 0.0
    %237 = vmatpush1.msra.mxu0 0.0
    %238 = vmatprep.subr.mxu0 0.0
    %239 = vmatpush1.msra.mxu0 0.0
    %240 = vmatprep.subr.mxu0 0.0
    %241 = vmatpush1.msra.mxu0 0.0
    %242 = vmatprep.subr.mxu0 0.0
    %243 = vmatpush1.msra.mxu0 0.0
    %244 = vmatprep.subr.mxu0 0.0
    %245 = vmatpush1.msra.mxu0 0.0
    %246 = vmatprep.subr.mxu0 0.0
    %247 = vmatpush1.msra.mxu0 0.0
    %248 = vmatprep.subr.mxu0 0.0
    %249 = vmatpush1.msra.mxu0 0.0
    %250 = vmatprep.subr.mxu0 0.0
    %251 = vmatpush1.msra.mxu0 0.0
    %252 = vmatprep.subr.mxu0 0.0
    %253 = vmatpush1.msra.mxu0 0.0
    %254 = vmatprep.subr.mxu0 0.0
    %255 = vmatpush1.msra.mxu0 0.0
    %256 = vmatprep.subr.mxu0 0.0
    %257 = vmatpush1.msra.mxu0 0.0
    %258 = vmatprep.subr.mxu0 0.0
    %259 = vmatpush1.msra.mxu0 0.0
    %260 = vmatprep.subr.mxu0 0.0
    %261 = vmatpush1.msra.mxu0 0.0
    %262 = vmatprep.subr.mxu0 0.0
    %263 = vmatpush1.msra.mxu0 0.0
    %264 = vmatprep.mubr.f32.mxu0 0.0
    %265 = vmatmul.mubr.f32.gmra.mrb[0].mxu0 %v195
    %v266 = vpop.f32.mrb[0].mxu0
    %v267 = vadd.f32 %v191, %v266
    %v268 = vpop.f32.mrb[0].mxu0
    %269 = vmatprep.mubr.f32.mxu0 0.0
    %270 = vmatmul.mubr.f32.gmra.mrb[0].mxu0 %v198
    %v271 = vpop.f32.mrb[0].mxu0
    %v272 = vadd.f32 %v191, %v271
    %v273 = vpop.f32.mrb[0].mxu0
    %274 = vdwg.mxu0
    %v275 = vld [vmem:[%s4] sm:$0xff]
    %v276 = vld [vmem:[%s4 + $0x8] sm:$0xff]
    %v277 = vld [vmem:[%s4 + $0x10] sm:$0xff]
    %v278 = vld [vmem:[%s4 + $0x18] sm:$0xff]
    %v279 = vld [vmem:[#allocation5] sm:$0x1]
    %v281 = vlaneseq
    %v282 = vshrl.u32 %v281, 7
    %v283 = vsub.s32 0, %v282
    %v284 = vrot.slane %v279, %v283
    %v287 = vsel %vm193, %v174, 0
    %v290 = vsel %vm193, %v175, 0
    %292 = vmatprep.subr.mxu0 0.0
    %293 = vmatpush1.msra.mxu0 %v275
    %294 = vmatprep.subr.mxu0 0.0
    %295 = vmatpush1.msra.mxu0 %v276
    %296 = vmatprep.subr.mxu0 0.0
    %297 = vmatpush1.msra.mxu0 %v277
    %298 = vmatprep.subr.mxu0 0.0
    %299 = vmatpush1.msra.mxu0 %v278
    %300 = vmatprep.subr.mxu0 0.0
    %301 = vmatpush1.msra.mxu0 0.0
    %302 = vmatprep.subr.mxu0 0.0
    %303 = vmatpush1.msra.mxu0 0.0
    %304 = vmatprep.subr.mxu0 0.0
    %305 = vmatpush1.msra.mxu0 0.0
    %306 = vmatprep.subr.mxu0 0.0
    %307 = vmatpush1.msra.mxu0 0.0
    %308 = vmatprep.subr.mxu0 0.0
    %309 = vmatpush1.msra.mxu0 0.0
    %310 = vmatprep.subr.mxu0 0.0
    %311 = vmatpush1.msra.mxu0 0.0
    %312 = vmatprep.subr.mxu0 0.0
    %313 = vmatpush1.msra.mxu0 0.0
    %314 = vmatprep.subr.mxu0 0.0
    %315 = vmatpush1.msra.mxu0 0.0
    %316 = vmatprep.subr.mxu0 0.0
    %317 = vmatpush1.msra.mxu0 0.0
    %318 = vmatprep.subr.mxu0 0.0
    %319 = vmatpush1.msra.mxu0 0.0
    %320 = vmatprep.subr.mxu0 0.0
    %321 = vmatpush1.msra.mxu0 0.0
    %322 = vmatprep.subr.mxu0 0.0
    %323 = vmatpush1.msra.mxu0 0.0
    %324 = vmatprep.subr.mxu0 0.0
    %325 = vmatpush1.msra.mxu0 0.0
    %326 = vmatprep.subr.mxu0 0.0
    %327 = vmatpush1.msra.mxu0 0.0
    %328 = vmatprep.subr.mxu0 0.0
    %329 = vmatpush1.msra.mxu0 0.0
    %330 = vmatprep.subr.mxu0 0.0
    %331 = vmatpush1.msra.mxu0 0.0
    %332 = vmatprep.subr.mxu0 0.0
    %333 = vmatpush1.msra.mxu0 0.0
    %334 = vmatprep.subr.mxu0 0.0
    %335 = vmatpush1.msra.mxu0 0.0
    %336 = vmatprep.subr.mxu0 0.0
    %337 = vmatpush1.msra.mxu0 0.0
    %338 = vmatprep.subr.mxu0 0.0
    %339 = vmatpush1.msra.mxu0 0.0
    %340 = vmatprep.subr.mxu0 0.0
    %341 = vmatpush1.msra.mxu0 0.0
    %342 = vmatprep.subr.mxu0 0.0
    %343 = vmatpush1.msra.mxu0 0.0
    %344 = vmatprep.subr.mxu0 0.0
    %345 = vmatpush1.msra.mxu0 0.0
    %346 = vmatprep.subr.mxu0 0.0
    %347 = vmatpush1.msra.mxu0 0.0
    %348 = vmatprep.subr.mxu0 0.0
    %349 = vmatpush1.msra.mxu0 0.0
    %350 = vmatprep.subr.mxu0 0.0
    %351 = vmatpush1.msra.mxu0 0.0
    %352 = vmatprep.subr.mxu0 0.0
    %353 = vmatpush1.msra.mxu0 0.0
    %354 = vmatprep.subr.mxu0 0.0
    %355 = vmatpush1.msra.mxu0 0.0
    %356 = vmatprep.mubr.f32.mxu0 0.0
    %357 = vmatmul.mubr.f32.gmra.mrb[0].mxu0 %v287
    %v358 = vpop.f32.mrb[0].mxu0
    %v359 = vadd.f32 %v284, %v358
    %v360 = vpop.f32.mrb[0].mxu0
    %361 = vmatprep.mubr.f32.mxu0 0.0
    %362 = vmatmul.mubr.f32.gmra.mrb[0].mxu0 %v290
    %v363 = vpop.f32.mrb[0].mxu0
    %v364 = vadd.f32 %v284, %v363
    %v365 = vpop.f32.mrb[0].mxu0
    %366 = vdwg.mxu0
    %369 = vrot.lane.b32.xlu0 %v359, 96
    %v370 = vpop.permute.xlu0 %369
    %371 = vrot.lane.b32.xlu0 %v364, 96
    %v372 = vpop.permute.xlu0 %371
    %vm373 = vcmask 64512
    %v374 = vsel %vm373, %v359, 0
    %v376 = vsel %vm373, %v364, 0
    %v378 = vsel %vm373, %v370, 0
    %v380 = vsel %vm373, %v372, 0
    %382 = vmatprep.subr.mxu0 0.0
    %383 = vmatpush1.xpose.msra.mxu0 %v378
    %384 = vmatprep.subr.mxu0 0.0
    %385 = vmatpush1.xpose.msra.mxu0 %v380
    %386 = vmatprep.subr.mxu0 0.0
    %387 = vmatpush1.xpose.msra.mxu0 0.0
    %388 = vmatprep.subr.mxu0 0.0
    %389 = vmatpush1.xpose.msra.mxu0 0.0
    %390 = vmatprep.subr.mxu0 0.0
    %391 = vmatpush1.xpose.msra.mxu0 0.0
    %392 = vmatprep.subr.mxu0 0.0
    %393 = vmatpush1.xpose.msra.mxu0 0.0
    %394 = vmatprep.subr.mxu0 0.0
    %395 = vmatpush1.xpose.msra.mxu0 0.0
    %396 = vmatprep.subr.mxu0 0.0
    %397 = vmatpush1.xpose.msra.mxu0 0.0
    %398 = vmatprep.subr.mxu0 0.0
    %399 = vmatpush1.xpose.msra.mxu0 0.0
    %400 = vmatprep.subr.mxu0 0.0
    %401 = vmatpush1.xpose.msra.mxu0 0.0
    %402 = vmatprep.subr.mxu0 0.0
    %403 = vmatpush1.xpose.msra.mxu0 0.0
    %404 = vmatprep.subr.mxu0 0.0
    %405 = vmatpush1.xpose.msra.mxu0 0.0
    %406 = vmatprep.subr.mxu0 0.0
    %407 = vmatpush1.xpose.msra.mxu0 0.0
    %408 = vmatprep.subr.mxu0 0.0
    %409 = vmatpush1.xpose.msra.mxu0 0.0
    %410 = vmatprep.subr.mxu0 0.0
    %411 = vmatpush1.xpose.msra.mxu0 0.0
    %412 = vmatprep.subr.mxu0 0.0
    %413 = vmatpush1.xpose.msra.mxu0 0.0
    %414 = vmatprep.subr.mxu0 0.0
    %415 = vmatpush1.xpose.msra.mxu0 0.0
    %416 = vmatprep.subr.mxu0 0.0
    %417 = vmatpush1.xpose.msra.mxu0 0.0
    %418 = vmatprep.subr.mxu0 0.0
    %419 = vmatpush1.xpose.msra.mxu0 0.0
    %420 = vmatprep.subr.mxu0 0.0
    %421 = vmatpush1.xpose.msra.mxu0 0.0
    %422 = vmatprep.subr.mxu0 0.0
    %423 = vmatpush1.xpose.msra.mxu0 0.0
    %424 = vmatprep.subr.mxu0 0.0
    %425 = vmatpush1.xpose.msra.mxu0 0.0
    %426 = vmatprep.subr.mxu0 0.0
    %427 = vmatpush1.xpose.msra.mxu0 0.0
    %428 = vmatprep.subr.mxu0 0.0
    %429 = vmatpush1.xpose.msra.mxu0 0.0
    %430 = vmatprep.subr.mxu0 0.0
    %431 = vmatpush1.xpose.msra.mxu0 0.0
    %432 = vmatprep.subr.mxu0 0.0
    %433 = vmatpush1.xpose.msra.mxu0 0.0
    %434 = vmatprep.subr.mxu0 0.0
    %435 = vmatpush1.xpose.msra.mxu0 0.0
    %436 = vmatprep.subr.mxu0 0.0
    %437 = vmatpush1.xpose.msra.mxu0 0.0
    %438 = vmatprep.subr.mxu0 0.0
    %439 = vmatpush1.xpose.msra.mxu0 0.0
    %440 = vmatprep.subr.mxu0 0.0
    %441 = vmatpush1.xpose.msra.mxu0 0.0
    %442 = vmatprep.subr.mxu0 0.0
    %443 = vmatpush1.xpose.msra.mxu0 0.0
    %444 = vmatprep.subr.mxu0 0.0
    %445 = vmatpush1.xpose.msra.mxu0 0.0
    %446 = vmatprep.mubr.f32.mxu0 0.0
    %447 = vmatmul.mubr.f32.gmra.mrb[0].mxu0 %v374
    %v448 = vpop.f32.mrb[0].mxu0
    %v449 = vadd.f32 %v178, %v448
    %v450 = vpop.f32.mrb[0].mxu0
    %451 = vmatprep.mubr.f32.mxu0 0.0
    %452 = vmatmul.mubr.f32.gmra.mrb[0].mxu0 %v376
    %v453 = vpop.f32.mrb[0].mxu0
    %v454 = vadd.f32 %v179, %v453
    %v455 = vpop.f32.mrb[0].mxu0
    %456 = vdwg.mxu0
    %vm457 = vcmask 130048
    %v458 = vsel %vm457, %v449, -inf
    %459 = vmax.xlane.f32.xlu0 %v458
    %v460 = vpop.xlane.xlu0 %459
    %v461 = vsel %vm457, %v454, -inf
    %462 = vmax.xlane.f32.xlu0 %v461
    %v463 = vpop.xlane.xlu0 %462
    %v464 = vsub.f32 %v449, %v460
    %v465 = vsub.f32 %v454, %v463
    %v466 = vmul.f32 %v464, 1.442695
    %v467 = vpow.pop %v466
    %v468 = vmul.f32 %v465, 1.442695
    %v469 = vpow.pop %v468
    %v470 = vsel %vm457, %v467, 0.0
    %471 = vadd.xlane.f32.xlu0 %v470
    %v472 = vpop.xlane.xlu0 %471
    %v473 = vsel %vm457, %v469, 0.0
    %474 = vadd.xlane.f32.xlu0 %v473
    %v475 = vpop.xlane.xlu0 %474
    %v476 = vrcp.pop %v472
    %v477 = vrcp.pop %v475
    %v478 = vmul.f32 %v467, %v476
    %v479 = vmul.f32 %v469, %v477
    %480 = vrot.lane.b32.xlu0 %v359, 64
    %v481 = vpop.permute.xlu0 %480
    %482 = vrot.lane.b32.xlu0 %v364, 64
    %v483 = vpop.permute.xlu0 %482
    %v487 = vsel %vm457, %v478, 0
    %v490 = vsel %vm457, %v479, 0
    %492 = vmatprep.subr.mxu0 0.0
    %493 = vmatpush1.msra.mxu0 %v481
    %494 = vmatprep.subr.mxu0 0.0
    %495 = vmatpush1.msra.mxu0 %v483
    %496 = vmatprep.subr.mxu0 0.0
    %497 = vmatpush1.msra.mxu0 0.0
    %498 = vmatprep.subr.mxu0 0.0
    %499 = vmatpush1.msra.mxu0 0.0
    %500 = vmatprep.subr.mxu0 0.0
    %501 = vmatpush1.msra.mxu0 0.0
    %502 = vmatprep.subr.mxu0 0.0
    %503 = vmatpush1.msra.mxu0 0.0
    %504 = vmatprep.subr.mxu0 0.0
    %505 = vmatpush1.msra.mxu0 0.0
    %506 = vmatprep.subr.mxu0 0.0
    %507 = vmatpush1.msra.mxu0 0.0
    %508 = vmatprep.subr.mxu0 0.0
    %509 = vmatpush1.msra.mxu0 0.0
    %510 = vmatprep.subr.mxu0 0.0
    %511 = vmatpush1.msra.mxu0 0.0
    %512 = vmatprep.subr.mxu0 0.0
    %513 = vmatpush1.msra.mxu0 0.0
    %514 = vmatprep.subr.mxu0 0.0
    %515 = vmatpush1.msra.mxu0 0.0
    %516 = vmatprep.subr.mxu0 0.0
    %517 = vmatpush1.msra.mxu0 0.0
    %518 = vmatprep.subr.mxu0 0.0
    %519 = vmatpush1.msra.mxu0 0.0
    %520 = vmatprep.subr.mxu0 0.0
    %521 = vmatpush1.msra.mxu0 0.0
    %522 = vmatprep.subr.mxu0 0.0
    %523 = vmatpush1.msra.mxu0 0.0
    %524 = vmatprep.subr.mxu0 0.0
    %525 = vmatpush1.msra.mxu0 0.0
    %526 = vmatprep.subr.mxu0 0.0
    %527 = vmatpush1.msra.mxu0 0.0
    %528 = vmatprep.subr.mxu0 0.0
    %529 = vmatpush1.msra.mxu0 0.0
    %530 = vmatprep.subr.mxu0 0.0
    %531 = vmatpush1.msra.mxu0 0.0
    %532 = vmatprep.subr.mxu0 0.0
    %533 = vmatpush1.msra.mxu0 0.0
    %534 = vmatprep.subr.mxu0 0.0
    %535 = vmatpush1.msra.mxu0 0.0
    %536 = vmatprep.subr.mxu0 0.0
    %537 = vmatpush1.msra.mxu0 0.0
    %538 = vmatprep.subr.mxu0 0.0
    %539 = vmatpush1.msra.mxu0 0.0
    %540 = vmatprep.subr.mxu0 0.0
    %541 = vmatpush1.msra.mxu0 0.0
    %542 = vmatprep.subr.mxu0 0.0
    %543 = vmatpush1.msra.mxu0 0.0
    %544 = vmatprep.subr.mxu0 0.0
    %545 = vmatpush1.msra.mxu0 0.0
    %546 = vmatprep.subr.mxu0 0.0
    %547 = vmatpush1.msra.mxu0 0.0
    %548 = vmatprep.subr.mxu0 0.0
    %549 = vmatpush1.msra.mxu0 0.0
    %550 = vmatprep.subr.mxu0 0.0
    %551 = vmatpush1.msra.mxu0 0.0
    %552 = vmatprep.subr.mxu0 0.0
    %553 = vmatpush1.msra.mxu0 0.0
    %554 = vmatprep.subr.mxu0 0.0
    %555 = vmatpush1.msra.mxu0 0.0
    %556 = vmatprep.mubr.f32.mxu0 0.0
    %557 = vmatmul.mubr.f32.gmra.mrb[0].mxu0 %v487
    %v558 = vpop.f32.mrb[0].mxu0
    %v559 = vadd.f32 0.0, %v558
    %v560 = vpop.f32.mrb[0].mxu0
    %561 = vmatprep.mubr.f32.mxu0 0.0
    %562 = vmatmul.mubr.f32.gmra.mrb[0].mxu0 %v490
    %v563 = vpop.f32.mrb[0].mxu0
    %v564 = vadd.f32 0.0, %v563
    %v565 = vpop.f32.mrb[0].mxu0
    %566 = vdwg.mxu0
    %567 = vrot.lane.b32.xlu0 %v359, 120
    %v568 = vpop.permute.xlu0 %567
    %569 = vrot.lane.b32.xlu0 %v364, 120
    %v570 = vpop.permute.xlu0 %569
    %571 = vrot.lane.b32.xlu0 %v359, 88
    %v572 = vpop.permute.xlu0 %571
    %573 = vrot.lane.b32.xlu0 %v364, 88
    %v574 = vpop.permute.xlu0 %573
    %v575 = vsel %vm373, %v568, 0
    %v577 = vsel %vm373, %v570, 0
    %v579 = vsel %vm373, %v572, 0
    %v581 = vsel %vm373, %v574, 0
    %583 = vmatprep.subr.mxu0 0.0
    %584 = vmatpush1.xpose.msra.mxu0 %v579
    %585 = vmatprep.subr.mxu0 0.0
    %586 = vmatpush1.xpose.msra.mxu0 %v581
    %587 = vmatprep.subr.mxu0 0.0
    %588 = vmatpush1.xpose.msra.mxu0 0.0
    %589 = vmatprep.subr.mxu0 0.0
    %590 = vmatpush1.xpose.msra.mxu0 0.0
    %591 = vmatprep.subr.mxu0 0.0
    %592 = vmatpush1.xpose.msra.mxu0 0.0
    %593 = vmatprep.subr.mxu0 0.0
    %594 = vmatpush1.xpose.msra.mxu0 0.0
    %595 = vmatprep.subr.mxu0 0.0
    %596 = vmatpush1.xpose.msra.mxu0 0.0
    %597 = vmatprep.subr.mxu0 0.0
    %598 = vmatpush1.xpose.msra.mxu0 0.0
    %599 = vmatprep.subr.mxu0 0.0
    %600 = vmatpush1.xpose.msra.mxu0 0.0
    %601 = vmatprep.subr.mxu0 0.0
    %602 = vmatpush1.xpose.msra.mxu0 0.0
    %603 = vmatprep.subr.mxu0 0.0
    %604 = vmatpush1.xpose.msra.mxu0 0.0
    %605 = vmatprep.subr.mxu0 0.0
    %606 = vmatpush1.xpose.msra.mxu0 0.0
    %607 = vmatprep.subr.mxu0 0.0
    %608 = vmatpush1.xpose.msra.mxu0 0.0
    %609 = vmatprep.subr.mxu0 0.0
    %610 = vmatpush1.xpose.msra.mxu0 0.0
    %611 = vmatprep.subr.mxu0 0.0
    %612 = vmatpush1.xpose.msra.mxu0 0.0
    %613 = vmatprep.subr.mxu0 0.0
    %614 = vmatpush1.xpose.msra.mxu0 0.0
    %615 = vmatprep.subr.mxu0 0.0
    %616 = vmatpush1.xpose.msra.mxu0 0.0
    %617 = vmatprep.subr.mxu0 0.0
    %618 = vmatpush1.xpose.msra.mxu0 0.0
    %619 = vmatprep.subr.mxu0 0.0
    %620 = vmatpush1.xpose.msra.mxu0 0.0
    %621 = vmatprep.subr.mxu0 0.0
    %622 = vmatpush1.xpose.msra.mxu0 0.0
    %623 = vmatprep.subr.mxu0 0.0
    %624 = vmatpush1.xpose.msra.mxu0 0.0
    %625 = vmatprep.subr.mxu0 0.0
    %626 = vmatpush1.xpose.msra.mxu0 0.0
    %627 = vmatprep.subr.mxu0 0.0
    %628 = vmatpush1.xpose.msra.mxu0 0.0
    %629 = vmatprep.subr.mxu0 0.0
    %630 = vmatpush1.xpose.msra.mxu0 0.0
    %631 = vmatprep.subr.mxu0 0.0
    %632 = vmatpush1.xpose.msra.mxu0 0.0
    %633 = vmatprep.subr.mxu0 0.0
    %634 = vmatpush1.xpose.msra.mxu0 0.0
    %635 = vmatprep.subr.mxu0 0.0
    %636 = vmatpush1.xpose.msra.mxu0 0.0
    %637 = vmatprep.subr.mxu0 0.0
    %638 = vmatpush1.xpose.msra.mxu0 0.0
    %639 = vmatprep.subr.mxu0 0.0
    %640 = vmatpush1.xpose.msra.mxu0 0.0
    %641 = vmatprep.subr.mxu0 0.0
    %642 = vmatpush1.xpose.msra.mxu0 0.0
    %643 = vmatprep.subr.mxu0 0.0
    %644 = vmatpush1.xpose.msra.mxu0 0.0
    %645 = vmatprep.subr.mxu0 0.0
    %646 = vmatpush1.xpose.msra.mxu0 0.0
    %647 = vmatprep.mubr.f32.mxu0 0.0
    %648 = vmatmul.mubr.f32.gmra.mrb[0].mxu0 %v575
    %v649 = vpop.f32.mrb[0].mxu0
    %v650 = vadd.f32 %v178, %v649
    %v651 = vpop.f32.mrb[0].mxu0
    %652 = vmatprep.mubr.f32.mxu0 0.0
    %653 = vmatmul.mubr.f32.gmra.mrb[0].mxu0 %v577
    %v654 = vpop.f32.mrb[0].mxu0
    %v655 = vadd.f32 %v179, %v654
    %v656 = vpop.f32.mrb[0].mxu0
    %657 = vdwg.mxu0
    %v658 = vsel %vm457, %v650, -inf
    %659 = vmax.xlane.f32.xlu0 %v658
    %v660 = vpop.xlane.xlu0 %659
    %v661 = vsel %vm457, %v655, -inf
    %662 = vmax.xlane.f32.xlu0 %v661
    %v663 = vpop.xlane.xlu0 %662
    %v664 = vsub.f32 %v650, %v660
    %v665 = vsub.f32 %v655, %v663
    %v666 = vmul.f32 %v664, 1.442695
    %v667 = vpow.pop %v666
    %v668 = vmul.f32 %v665, 1.442695
    %v669 = vpow.pop %v668
    %v670 = vsel %vm457, %v667, 0.0
    %671 = vadd.xlane.f32.xlu0 %v670
    %v672 = vpop.xlane.xlu0 %671
    %v673 = vsel %vm457, %v669, 0.0
    %674 = vadd.xlane.f32.xlu0 %v673
    %v675 = vpop.xlane.xlu0 %674
    %v676 = vrcp.pop %v672
    %v677 = vrcp.pop %v675
    %v678 = vmul.f32 %v667, %v676
    %v679 = vmul.f32 %v669, %v677
    %680 = vrot.lane.b32.xlu0 %v359, 56
    %v681 = vpop.permute.xlu0 %680
    %682 = vrot.lane.b32.xlu0 %v364, 56
    %v683 = vpop.permute.xlu0 %682
    %v687 = vsel %vm457, %v678, 0
    %v690 = vsel %vm457, %v679, 0
    %692 = vmatprep.subr.mxu0 0.0
    %693 = vmatpush1.msra.mxu0 %v681
    %694 = vmatprep.subr.mxu0 0.0
    %695 = vmatpush1.msra.mxu0 %v683
    %696 = vmatprep.subr.mxu0 0.0
    %697 = vmatpush1.msra.mxu0 0.0
    %698 = vmatprep.subr.mxu0 0.0
    %699 = vmatpush1.msra.mxu0 0.0
    %700 = vmatprep.subr.mxu0 0.0
    %701 = vmatpush1.msra.mxu0 0.0
    %702 = vmatprep.subr.mxu0 0.0
    %703 = vmatpush1.msra.mxu0 0.0
    %704 = vmatprep.subr.mxu0 0.0
    %705 = vmatpush1.msra.mxu0 0.0
    %706 = vmatprep.subr.mxu0 0.0
    %707 = vmatpush1.msra.mxu0 0.0
    %708 = vmatprep.subr.mxu0 0.0
    %709 = vmatpush1.msra.mxu0 0.0
    %710 = vmatprep.subr.mxu0 0.0
    %711 = vmatpush1.msra.mxu0 0.0
    %712 = vmatprep.subr.mxu0 0.0
    %713 = vmatpush1.msra.mxu0 0.0
    %714 = vmatprep.subr.mxu0 0.0
    %715 = vmatpush1.msra.mxu0 0.0
    %716 = vmatprep.subr.mxu0 0.0
    %717 = vmatpush1.msra.mxu0 0.0
    %718 = vmatprep.subr.mxu0 0.0
    %719 = vmatpush1.msra.mxu0 0.0
    %720 = vmatprep.subr.mxu0 0.0
    %721 = vmatpush1.msra.mxu0 0.0
    %722 = vmatprep.subr.mxu0 0.0
    %723 = vmatpush1.msra.mxu0 0.0
    %724 = vmatprep.subr.mxu0 0.0
    %725 = vmatpush1.msra.mxu0 0.0
    %726 = vmatprep.subr.mxu0 0.0
    %727 = vmatpush1.msra.mxu0 0.0
    %728 = vmatprep.subr.mxu0 0.0
    %729 = vmatpush1.msra.mxu0 0.0
    %730 = vmatprep.subr.mxu0 0.0
    %731 = vmatpush1.msra.mxu0 0.0
    %732 = vmatprep.subr.mxu0 0.0
    %733 = vmatpush1.msra.mxu0 0.0
    %734 = vmatprep.subr.mxu0 0.0
    %735 = vmatpush1.msra.mxu0 0.0
    %736 = vmatprep.subr.mxu0 0.0
    %737 = vmatpush1.msra.mxu0 0.0
    %738 = vmatprep.subr.mxu0 0.0
    %739 = vmatpush1.msra.mxu0 0.0
    %740 = vmatprep.subr.mxu0 0.0
    %741 = vmatpush1.msra.mxu0 0.0
    %742 = vmatprep.subr.mxu0 0.0
    %743 = vmatpush1.msra.mxu0 0.0
    %744 = vmatprep.subr.mxu0 0.0
    %745 = vmatpush1.msra.mxu0 0.0
    %746 = vmatprep.subr.mxu0 0.0
    %747 = vmatpush1.msra.mxu0 0.0
    %748 = vmatprep.subr.mxu0 0.0
    %749 = vmatpush1.msra.mxu0 0.0
    %750 = vmatprep.subr.mxu0 0.0
    %751 = vmatpush1.msra.mxu0 0.0
    %752 = vmatprep.subr.mxu0 0.0
    %753 = vmatpush1.msra.mxu0 0.0
    %754 = vmatprep.subr.mxu0 0.0
    %755 = vmatpush1.msra.mxu0 0.0
    %756 = vmatprep.mubr.f32.mxu0 0.0
    %757 = vmatmul.mubr.f32.gmra.mrb[0].mxu0 %v687
    %v758 = vpop.f32.mrb[0].mxu0
    %v759 = vadd.f32 0.0, %v758
    %v760 = vpop.f32.mrb[0].mxu0
    %761 = vmatprep.mubr.f32.mxu0 0.0
    %762 = vmatmul.mubr.f32.gmra.mrb[0].mxu0 %v690
    %v763 = vpop.f32.mrb[0].mxu0
    %v764 = vadd.f32 0.0, %v763
    %v765 = vpop.f32.mrb[0].mxu0
    %766 = vdwg.mxu0
    %767 = vrot.lane.b32.xlu0 %v359, 112
    %v768 = vpop.permute.xlu0 %767
    %769 = vrot.lane.b32.xlu0 %v364, 112
    %v770 = vpop.permute.xlu0 %769
    %771 = vrot.lane.b32.xlu0 %v359, 80
    %v772 = vpop.permute.xlu0 %771
    %773 = vrot.lane.b32.xlu0 %v364, 80
    %v774 = vpop.permute.xlu0 %773
    %v775 = vsel %vm373, %v768, 0
    %v777 = vsel %vm373, %v770, 0
    %v779 = vsel %vm373, %v772, 0
    %v781 = vsel %vm373, %v774, 0
    %783 = vmatprep.subr.mxu0 0.0
    %784 = vmatpush1.xpose.msra.mxu0 %v779
    %785 = vmatprep.subr.mxu0 0.0
    %786 = vmatpush1.xpose.msra.mxu0 %v781
    %787 = vmatprep.subr.mxu0 0.0
    %788 = vmatpush1.xpose.msra.mxu0 0.0
    %789 = vmatprep.subr.mxu0 0.0
    %790 = vmatpush1.xpose.msra.mxu0 0.0
    %791 = vmatprep.subr.mxu0 0.0
    %792 = vmatpush1.xpose.msra.mxu0 0.0
    %793 = vmatprep.subr.mxu0 0.0
    %794 = vmatpush1.xpose.msra.mxu0 0.0
    %795 = vmatprep.subr.mxu0 0.0
    %796 = vmatpush1.xpose.msra.mxu0 0.0
    %797 = vmatprep.subr.mxu0 0.0
    %798 = vmatpush1.xpose.msra.mxu0 0.0
    %799 = vmatprep.subr.mxu0 0.0
    %800 = vmatpush1.xpose.msra.mxu0 0.0
    %801 = vmatprep.subr.mxu0 0.0
    %802 = vmatpush1.xpose.msra.mxu0 0.0
    %803 = vmatprep.subr.mxu0 0.0
    %804 = vmatpush1.xpose.msra.mxu0 0.0
    %805 = vmatprep.subr.mxu0 0.0
    %806 = vmatpush1.xpose.msra.mxu0 0.0
    %807 = vmatprep.subr.mxu0 0.0
    %808 = vmatpush1.xpose.msra.mxu0 0.0
    %809 = vmatprep.subr.mxu0 0.0
    %810 = vmatpush1.xpose.msra.mxu0 0.0
    %811 = vmatprep.subr.mxu0 0.0
    %812 = vmatpush1.xpose.msra.mxu0 0.0
    %813 = vmatprep.subr.mxu0 0.0
    %814 = vmatpush1.xpose.msra.mxu0 0.0
    %815 = vmatprep.subr.mxu0 0.0
    %816 = vmatpush1.xpose.msra.mxu0 0.0
    %817 = vmatprep.subr.mxu0 0.0
    %818 = vmatpush1.xpose.msra.mxu0 0.0
    %819 = vmatprep.subr.mxu0 0.0
    %820 = vmatpush1.xpose.msra.mxu0 0.0
    %821 = vmatprep.subr.mxu0 0.0
    %822 = vmatpush1.xpose.msra.mxu0 0.0
    %823 = vmatprep.subr.mxu0 0.0
    %824 = vmatpush1.xpose.msra.mxu0 0.0
    %825 = vmatprep.subr.mxu0 0.0
    %826 = vmatpush1.xpose.msra.mxu0 0.0
    %827 = vmatprep.subr.mxu0 0.0
    %828 = vmatpush1.xpose.msra.mxu0 0.0
    %829 = vmatprep.subr.mxu0 0.0
    %830 = vmatpush1.xpose.msra.mxu0 0.0
    %831 = vmatprep.subr.mxu0 0.0
    %832 = vmatpush1.xpose.msra.mxu0 0.0
    %833 = vmatprep.subr.mxu0 0.0
    %834 = vmatpush1.xpose.msra.mxu0 0.0
    %835 = vmatprep.subr.mxu0 0.0
    %836 = vmatpush1.xpose.msra.mxu0 0.0
    %837 = vmatprep.subr.mxu0 0.0
    %838 = vmatpush1.xpose.msra.mxu0 0.0
    %839 = vmatprep.subr.mxu0 0.0
    %840 = vmatpush1.xpose.msra.mxu0 0.0
    %841 = vmatprep.subr.mxu0 0.0
    %842 = vmatpush1.xpose.msra.mxu0 0.0
    %843 = vmatprep.subr.mxu0 0.0
    %844 = vmatpush1.xpose.msra.mxu0 0.0
    %845 = vmatprep.subr.mxu0 0.0
    %846 = vmatpush1.xpose.msra.mxu0 0.0
    %847 = vmatprep.mubr.f32.mxu0 0.0
    %848 = vmatmul.mubr.f32.gmra.mrb[0].mxu0 %v775
    %v849 = vpop.f32.mrb[0].mxu0
    %v850 = vadd.f32 %v178, %v849
    %v851 = vpop.f32.mrb[0].mxu0
    %852 = vmatprep.mubr.f32.mxu0 0.0
    %853 = vmatmul.mubr.f32.gmra.mrb[0].mxu0 %v777
    %v854 = vpop.f32.mrb[0].mxu0
    %v855 = vadd.f32 %v179, %v854
    %v856 = vpop.f32.mrb[0].mxu0
    %857 = vdwg.mxu0
    %v858 = vsel %vm457, %v850, -inf
    %859 = vmax.xlane.f32.xlu0 %v858
    %v860 = vpop.xlane.xlu0 %859
    %v861 = vsel %vm457, %v855, -inf
    %862 = vmax.xlane.f32.xlu0 %v861
    %v863 = vpop.xlane.xlu0 %862
    %v864 = vsub.f32 %v850, %v860
    %v865 = vsub.f32 %v855, %v863
    %v866 = vmul.f32 %v864, 1.442695
    %v867 = vpow.pop %v866
    %v868 = vmul.f32 %v865, 1.442695
    %v869 = vpow.pop %v868
    %v870 = vsel %vm457, %v867, 0.0
    %871 = vadd.xlane.f32.xlu0 %v870
    %v872 = vpop.xlane.xlu0 %871
    %v873 = vsel %vm457, %v869, 0.0
    %874 = vadd.xlane.f32.xlu0 %v873
    %v875 = vpop.xlane.xlu0 %874
    %v876 = vrcp.pop %v872
    %v877 = vrcp.pop %v875
    %v878 = vmul.f32 %v867, %v876
    %v879 = vmul.f32 %v869, %v877
    %880 = vrot.lane.b32.xlu0 %v359, 48
    %v881 = vpop.permute.xlu0 %880
    %882 = vrot.lane.b32.xlu0 %v364, 48
    %v883 = vpop.permute.xlu0 %882
    %v887 = vsel %vm457, %v878, 0
    %v890 = vsel %vm457, %v879, 0
    %892 = vmatprep.subr.mxu0 0.0
    %893 = vmatpush1.msra.mxu0 %v881
    %894 = vmatprep.subr.mxu0 0.0
    %895 = vmatpush1.msra.mxu0 %v883
    %896 = vmatprep.subr.mxu0 0.0
    %897 = vmatpush1.msra.mxu0 0.0
    %898 = vmatprep.subr.mxu0 0.0
    %899 = vmatpush1.msra.mxu0 0.0
    %900 = vmatprep.subr.mxu0 0.0
    %901 = vmatpush1.msra.mxu0 0.0
    %902 = vmatprep.subr.mxu0 0.0
    %903 = vmatpush1.msra.mxu0 0.0
    %904 = vmatprep.subr.mxu0 0.0
    %905 = vmatpush1.msra.mxu0 0.0
    %906 = vmatprep.subr.mxu0 0.0
    %907 = vmatpush1.msra.mxu0 0.0
    %908 = vmatprep.subr.mxu0 0.0
    %909 = vmatpush1.msra.mxu0 0.0
    %910 = vmatprep.subr.mxu0 0.0
    %911 = vmatpush1.msra.mxu0 0.0
    %912 = vmatprep.subr.mxu0 0.0
    %913 = vmatpush1.msra.mxu0 0.0
    %914 = vmatprep.subr.mxu0 0.0
    %915 = vmatpush1.msra.mxu0 0.0
    %916 = vmatprep.subr.mxu0 0.0
    %917 = vmatpush1.msra.mxu0 0.0
    %918 = vmatprep.subr.mxu0 0.0
    %919 = vmatpush1.msra.mxu0 0.0
    %920 = vmatprep.subr.mxu0 0.0
    %921 = vmatpush1.msra.mxu0 0.0
    %922 = vmatprep.subr.mxu0 0.0
    %923 = vmatpush1.msra.mxu0 0.0
    %924 = vmatprep.subr.mxu0 0.0
    %925 = vmatpush1.msra.mxu0 0.0
    %926 = vmatprep.subr.mxu0 0.0
    %927 = vmatpush1.msra.mxu0 0.0
    %928 = vmatprep.subr.mxu0 0.0
    %929 = vmatpush1.msra.mxu0 0.0
    %930 = vmatprep.subr.mxu0 0.0
    %931 = vmatpush1.msra.mxu0 0.0
    %932 = vmatprep.subr.mxu0 0.0
    %933 = vmatpush1.msra.mxu0 0.0
    %934 = vmatprep.subr.mxu0 0.0
    %935 = vmatpush1.msra.mxu0 0.0
    %936 = vmatprep.subr.mxu0 0.0
    %937 = vmatpush1.msra.mxu0 0.0
    %938 = vmatprep.subr.mxu0 0.0
    %939 = vmatpush1.msra.mxu0 0.0
    %940 = vmatprep.subr.mxu0 0.0
    %941 = vmatpush1.msra.mxu0 0.0
    %942 = vmatprep.subr.mxu0 0.0
    %943 = vmatpush1.msra.mxu0 0.0
    %944 = vmatprep.subr.mxu0 0.0
    %945 = vmatpush1.msra.mxu0 0.0
    %946 = vmatprep.subr.mxu0 0.0
    %947 = vmatpush1.msra.mxu0 0.0
    %948 = vmatprep.subr.mxu0 0.0
    %949 = vmatpush1.msra.mxu0 0.0
    %950 = vmatprep.subr.mxu0 0.0
    %951 = vmatpush1.msra.mxu0 0.0
    %952 = vmatprep.subr.mxu0 0.0
    %953 = vmatpush1.msra.mxu0 0.0
    %954 = vmatprep.subr.mxu0 0.0
    %955 = vmatpush1.msra.mxu0 0.0
    %956 = vmatprep.mubr.f32.mxu0 0.0
    %957 = vmatmul.mubr.f32.gmra.mrb[0].mxu0 %v887
    %v958 = vpop.f32.mrb[0].mxu0
    %v959 = vadd.f32 0.0, %v958
    %v960 = vpop.f32.mrb[0].mxu0
    %961 = vmatprep.mubr.f32.mxu0 0.0
    %962 = vmatmul.mubr.f32.gmra.mrb[0].mxu0 %v890
    %v963 = vpop.f32.mrb[0].mxu0
    %v964 = vadd.f32 0.0, %v963
    %v965 = vpop.f32.mrb[0].mxu0
    %966 = vdwg.mxu0
    %967 = vrot.lane.b32.xlu0 %v359, 104
    %v968 = vpop.permute.xlu0 %967
    %969 = vrot.lane.b32.xlu0 %v364, 104
    %v970 = vpop.permute.xlu0 %969
    %971 = vrot.lane.b32.xlu0 %v359, 72
    %v972 = vpop.permute.xlu0 %971
    %973 = vrot.lane.b32.xlu0 %v364, 72
    %v974 = vpop.permute.xlu0 %973
    %v975 = vsel %vm373, %v968, 0
    %v977 = vsel %vm373, %v970, 0
    %v979 = vsel %vm373, %v972, 0
    %v981 = vsel %vm373, %v974, 0
    %983 = vmatprep.subr.mxu0 0.0
    %984 = vmatpush1.xpose.msra.mxu0 %v979
    %985 = vmatprep.subr.mxu0 0.0
    %986 = vmatpush1.xpose.msra.mxu0 %v981
    %987 = vmatprep.subr.mxu0 0.0
    %988 = vmatpush1.xpose.msra.mxu0 0.0
    %989 = vmatprep.subr.mxu0 0.0
    %990 = vmatpush1.xpose.msra.mxu0 0.0
    %991 = vmatprep.subr.mxu0 0.0
    %992 = vmatpush1.xpose.msra.mxu0 0.0
    %993 = vmatprep.subr.mxu0 0.0
    %994 = vmatpush1.xpose.msra.mxu0 0.0
    %995 = vmatprep.subr.mxu0 0.0
    %996 = vmatpush1.xpose.msra.mxu0 0.0
    %997 = vmatprep.subr.mxu0 0.0
    %998 = vmatpush1.xpose.msra.mxu0 0.0
    %999 = vmatprep.subr.mxu0 0.0
    %1000 = vmatpush1.xpose.msra.mxu0 0.0
    %1001 = vmatprep.subr.mxu0 0.0
    %1002 = vmatpush1.xpose.msra.mxu0 0.0
    %1003 = vmatprep.subr.mxu0 0.0
    %1004 = vmatpush1.xpose.msra.mxu0 0.0
    %1005 = vmatprep.subr.mxu0 0.0
    %1006 = vmatpush1.xpose.msra.mxu0 0.0
    %1007 = vmatprep.subr.mxu0 0.0
    %1008 = vmatpush1.xpose.msra.mxu0 0.0
    %1009 = vmatprep.subr.mxu0 0.0
    %1010 = vmatpush1.xpose.msra.mxu0 0.0
    %1011 = vmatprep.subr.mxu0 0.0
    %1012 = vmatpush1.xpose.msra.mxu0 0.0
    %1013 = vmatprep.subr.mxu0 0.0
    %1014 = vmatpush1.xpose.msra.mxu0 0.0
    %1015 = vmatprep.subr.mxu0 0.0
    %1016 = vmatpush1.xpose.msra.mxu0 0.0
    %1017 = vmatprep.subr.mxu0 0.0
    %1018 = vmatpush1.xpose.msra.mxu0 0.0
    %1019 = vmatprep.subr.mxu0 0.0
    %1020 = vmatpush1.xpose.msra.mxu0 0.0
    %1021 = vmatprep.subr.mxu0 0.0
    %1022 = vmatpush1.xpose.msra.mxu0 0.0
    %1023 = vmatprep.subr.mxu0 0.0
    %1024 = vmatpush1.xpose.msra.mxu0 0.0
    %1025 = vmatprep.subr.mxu0 0.0
    %1026 = vmatpush1.xpose.msra.mxu0 0.0
    %1027 = vmatprep.subr.mxu0 0.0
    %1028 = vmatpush1.xpose.msra.mxu0 0.0
    %1029 = vmatprep.subr.mxu0 0.0
    %1030 = vmatpush1.xpose.msra.mxu0 0.0
    %1031 = vmatprep.subr.mxu0 0.0
    %1032 = vmatpush1.xpose.msra.mxu0 0.0
    %1033 = vmatprep.subr.mxu0 0.0
    %1034 = vmatpush1.xpose.msra.mxu0 0.0
    %1035 = vmatprep.subr.mxu0 0.0
    %1036 = vmatpush1.xpose.msra.mxu0 0.0
    %1037 = vmatprep.subr.mxu0 0.0
    %1038 = vmatpush1.xpose.msra.mxu0 0.0
    %1039 = vmatprep.subr.mxu0 0.0
    %1040 = vmatpush1.xpose.msra.mxu0 0.0
    %1041 = vmatprep.subr.mxu0 0.0
    %1042 = vmatpush1.xpose.msra.mxu0 0.0
    %1043 = vmatprep.subr.mxu0 0.0
    %1044 = vmatpush1.xpose.msra.mxu0 0.0
    %1045 = vmatprep.subr.mxu0 0.0
    %1046 = vmatpush1.xpose.msra.mxu0 0.0
    %1047 = vmatprep.mubr.f32.mxu0 0.0
    %1048 = vmatmul.mubr.f32.gmra.mrb[0].mxu0 %v975
    %v1049 = vpop.f32.mrb[0].mxu0
    %v1050 = vadd.f32 %v178, %v1049
    %v1051 = vpop.f32.mrb[0].mxu0
    %1052 = vmatprep.mubr.f32.mxu0 0.0
    %1053 = vmatmul.mubr.f32.gmra.mrb[0].mxu0 %v977
    %v1054 = vpop.f32.mrb[0].mxu0
    %v1055 = vadd.f32 %v179, %v1054
    %v1056 = vpop.f32.mrb[0].mxu0
    %1057 = vdwg.mxu0
    %v1058 = vsel %vm457, %v1050, -inf
    %1059 = vmax.xlane.f32.xlu0 %v1058
    %v1060 = vpop.xlane.xlu0 %1059
    %v1061 = vsel %vm457, %v1055, -inf
    %1062 = vmax.xlane.f32.xlu0 %v1061
    %v1063 = vpop.xlane.xlu0 %1062
    %v1064 = vsub.f32 %v1050, %v1060
    %v1065 = vsub.f32 %v1055, %v1063
    %v1066 = vmul.f32 %v1064, 1.442695
    %v1067 = vpow.pop %v1066
    %v1068 = vmul.f32 %v1065, 1.442695
    %v1069 = vpow.pop %v1068
    %v1070 = vsel %vm457, %v1067, 0.0
    %1071 = vadd.xlane.f32.xlu0 %v1070
    %v1072 = vpop.xlane.xlu0 %1071
    %v1073 = vsel %vm457, %v1069, 0.0
    %1074 = vadd.xlane.f32.xlu0 %v1073
    %v1075 = vpop.xlane.xlu0 %1074
    %v1076 = vrcp.pop %v1072
    %v1077 = vrcp.pop %v1075
    %v1078 = vmul.f32 %v1067, %v1076
    %v1079 = vmul.f32 %v1069, %v1077
    %1080 = vrot.lane.b32.xlu0 %v359, 40
    %v1081 = vpop.permute.xlu0 %1080
    %1082 = vrot.lane.b32.xlu0 %v364, 40
    %v1083 = vpop.permute.xlu0 %1082
    %v1087 = vsel %vm457, %v1078, 0
    %v1090 = vsel %vm457, %v1079, 0
    %1092 = vmatprep.subr.mxu0 0.0
    %1093 = vmatpush1.msra.mxu0 %v1081
    %1094 = vmatprep.subr.mxu0 0.0
    %1095 = vmatpush1.msra.mxu0 %v1083
    %1096 = vmatprep.subr.mxu0 0.0
    %1097 = vmatpush1.msra.mxu0 0.0
    %1098 = vmatprep.subr.mxu0 0.0
    %1099 = vmatpush1.msra.mxu0 0.0
    %1100 = vmatprep.subr.mxu0 0.0
    %1101 = vmatpush1.msra.mxu0 0.0
    %1102 = vmatprep.subr.mxu0 0.0
    %1103 = vmatpush1.msra.mxu0 0.0
    %1104 = vmatprep.subr.mxu0 0.0
    %1105 = vmatpush1.msra.mxu0 0.0
    %1106 = vmatprep.subr.mxu0 0.0
    %1107 = vmatpush1.msra.mxu0 0.0
    %1108 = vmatprep.subr.mxu0 0.0
    %1109 = vmatpush1.msra.mxu0 0.0
    %1110 = vmatprep.subr.mxu0 0.0
    %1111 = vmatpush1.msra.mxu0 0.0
    %1112 = vmatprep.subr.mxu0 0.0
    %1113 = vmatpush1.msra.mxu0 0.0
    %1114 = vmatprep.subr.mxu0 0.0
    %1115 = vmatpush1.msra.mxu0 0.0
    %1116 = vmatprep.subr.mxu0 0.0
    %1117 = vmatpush1.msra.mxu0 0.0
    %1118 = vmatprep.subr.mxu0 0.0
    %1119 = vmatpush1.msra.mxu0 0.0
    %1120 = vmatprep.subr.mxu0 0.0
    %1121 = vmatpush1.msra.mxu0 0.0
    %1122 = vmatprep.subr.mxu0 0.0
    %1123 = vmatpush1.msra.mxu0 0.0
    %1124 = vmatprep.subr.mxu0 0.0
    %1125 = vmatpush1.msra.mxu0 0.0
    %1126 = vmatprep.subr.mxu0 0.0
    %1127 = vmatpush1.msra.mxu0 0.0
    %1128 = vmatprep.subr.mxu0 0.0
    %1129 = vmatpush1.msra.mxu0 0.0
    %1130 = vmatprep.subr.mxu0 0.0
    %1131 = vmatpush1.msra.mxu0 0.0
    %1132 = vmatprep.subr.mxu0 0.0
    %1133 = vmatpush1.msra.mxu0 0.0
    %1134 = vmatprep.subr.mxu0 0.0
    %1135 = vmatpush1.msra.mxu0 0.0
    %1136 = vmatprep.subr.mxu0 0.0
    %1137 = vmatpush1.msra.mxu0 0.0
    %1138 = vmatprep.subr.mxu0 0.0
    %1139 = vmatpush1.msra.mxu0 0.0
    %1140 = vmatprep.subr.mxu0 0.0
    %1141 = vmatpush1.msra.mxu0 0.0
    %1142 = vmatprep.subr.mxu0 0.0
    %1143 = vmatpush1.msra.mxu0 0.0
    %1144 = vmatprep.subr.mxu0 0.0
    %1145 = vmatpush1.msra.mxu0 0.0
    %1146 = vmatprep.subr.mxu0 0.0
    %1147 = vmatpush1.msra.mxu0 0.0
    %1148 = vmatprep.subr.mxu0 0.0
    %1149 = vmatpush1.msra.mxu0 0.0
    %1150 = vmatprep.subr.mxu0 0.0
    %1151 = vmatpush1.msra.mxu0 0.0
    %1152 = vmatprep.subr.mxu0 0.0
    %1153 = vmatpush1.msra.mxu0 0.0
    %1154 = vmatprep.subr.mxu0 0.0
    %1155 = vmatpush1.msra.mxu0 0.0
    %1156 = vmatprep.mubr.f32.mxu0 0.0
    %1157 = vmatmul.mubr.f32.gmra.mrb[0].mxu0 %v1087
    %v1158 = vpop.f32.mrb[0].mxu0
    %v1159 = vadd.f32 0.0, %v1158
    %v1160 = vpop.f32.mrb[0].mxu0
    %1161 = vmatprep.mubr.f32.mxu0 0.0
    %1162 = vmatmul.mubr.f32.gmra.mrb[0].mxu0 %v1090
    %v1163 = vpop.f32.mrb[0].mxu0
    %v1164 = vadd.f32 0.0, %v1163
    %v1165 = vpop.f32.mrb[0].mxu0
    %1166 = vdwg.mxu0
    %1169 = vrot.lane.b32.xlu0 %v759, 8
    %v1170 = vpop.permute.xlu0 %1169
    %1171 = vrot.lane.b32.xlu0 %v764, 8
    %v1172 = vpop.permute.xlu0 %1171
    %1177 = vrot.lane.b32.xlu0 %v959, 16
    %v1178 = vpop.permute.xlu0 %1177
    %1179 = vrot.lane.b32.xlu0 %v964, 16
    %v1180 = vpop.permute.xlu0 %1179
    %1185 = vrot.lane.b32.xlu0 %v1159, 24
    %v1186 = vpop.permute.xlu0 %1185
    %1187 = vrot.lane.b32.xlu0 %v1164, 24
    %v1188 = vpop.permute.xlu0 %1187
    %v1191 = vsel %vm373, %v559, %v1170
    %v1192 = vsel %vm373, %v564, %v1172
    %v1193 = vsel %vm457, %v1191, %v1178
    %v1194 = vsel %vm457, %v1192, %v1180
    %vm1195 = vcmask 195584
    %v1196 = vsel %vm1195, %v1193, %v1186
    %v1197 = vsel %vm1195, %v1194, %v1188
    %v1198 = vld [vmem:[%s10] sm:$0xff]
    %v1199 = vld [vmem:[%s10 + $0x8] sm:$0xff]
    %v1200 = vld [vmem:[%s10 + $0x10] sm:$0xff]
    %v1201 = vld [vmem:[%s10 + $0x18] sm:$0xff]
    %v1202 = vld [vmem:[%s11] sm:$0x1]
    %v1204 = vlaneseq
    %v1205 = vshrl.u32 %v1204, 7
    %v1206 = vsub.s32 0, %v1205
    %v1207 = vrot.slane %v1202, %v1206
    %v1210 = vsel %vm193, %v1196, 0
    %v1213 = vsel %vm193, %v1197, 0
    %1215 = vmatprep.subr.mxu0 0.0
    %1216 = vmatpush1.msra.mxu0 %v1198
    %1217 = vmatprep.subr.mxu0 0.0
    %1218 = vmatpush1.msra.mxu0 %v1199
    %1219 = vmatprep.subr.mxu0 0.0
    %1220 = vmatpush1.msra.mxu0 %v1200
    %1221 = vmatprep.subr.mxu0 0.0
    %1222 = vmatpush1.msra.mxu0 %v1201
    %1223 = vmatprep.subr.mxu0 0.0
    %1224 = vmatpush1.msra.mxu0 0.0
    %1225 = vmatprep.subr.mxu0 0.0
    %1226 = vmatpush1.msra.mxu0 0.0
    %1227 = vmatprep.subr.mxu0 0.0
    %1228 = vmatpush1.msra.mxu0 0.0
    %1229 = vmatprep.subr.mxu0 0.0
    %1230 = vmatpush1.msra.mxu0 0.0
    %1231 = vmatprep.subr.mxu0 0.0
    %1232 = vmatpush1.msra.mxu0 0.0
    %1233 = vmatprep.subr.mxu0 0.0
    %1234 = vmatpush1.msra.mxu0 0.0
    %1235 = vmatprep.subr.mxu0 0.0
    %1236 = vmatpush1.msra.mxu0 0.0
    %1237 = vmatprep.subr.mxu0 0.0
    %1238 = vmatpush1.msra.mxu0 0.0
    %1239 = vmatprep.subr.mxu0 0.0
    %1240 = vmatpush1.msra.mxu0 0.0
    %1241 = vmatprep.subr.mxu0 0.0
    %1242 = vmatpush1.msra.mxu0 0.0
    %1243 = vmatprep.subr.mxu0 0.0
    %1244 = vmatpush1.msra.mxu0 0.0
    %1245 = vmatprep.subr.mxu0 0.0
    %1246 = vmatpush1.msra.mxu0 0.0
    %1247 = vmatprep.subr.mxu0 0.0
    %1248 = vmatpush1.msra.mxu0 0.0
    %1249 = vmatprep.subr.mxu0 0.0
    %1250 = vmatpush1.msra.mxu0 0.0
    %1251 = vmatprep.subr.mxu0 0.0
    %1252 = vmatpush1.msra.mxu0 0.0
    %1253 = vmatprep.subr.mxu0 0.0
    %1254 = vmatpush1.msra.mxu0 0.0
    %1255 = vmatprep.subr.mxu0 0.0
    %1256 = vmatpush1.msra.mxu0 0.0
    %1257 = vmatprep.subr.mxu0 0.0
    %1258 = vmatpush1.msra.mxu0 0.0
    %1259 = vmatprep.subr.mxu0 0.0
    %1260 = vmatpush1.msra.mxu0 0.0
    %1261 = vmatprep.subr.mxu0 0.0
    %1262 = vmatpush1.msra.mxu0 0.0
    %1263 = vmatprep.subr.mxu0 0.0
    %1264 = vmatpush1.msra.mxu0 0.0
    %1265 = vmatprep.subr.mxu0 0.0
    %1266 = vmatpush1.msra.mxu0 0.0
    %1267 = vmatprep.subr.mxu0 0.0
    %1268 = vmatpush1.msra.mxu0 0.0
    %1269 = vmatprep.subr.mxu0 0.0
    %1270 = vmatpush1.msra.mxu0 0.0
    %1271 = vmatprep.subr.mxu0 0.0
    %1272 = vmatpush1.msra.mxu0 0.0
    %1273 = vmatprep.subr.mxu0 0.0
    %1274 = vmatpush1.msra.mxu0 0.0
    %1275 = vmatprep.subr.mxu0 0.0
    %1276 = vmatpush1.msra.mxu0 0.0
    %1277 = vmatprep.subr.mxu0 0.0
    %1278 = vmatpush1.msra.mxu0 0.0
    %1279 = vmatprep.mubr.f32.mxu0 0.0
    %1280 = vmatmul.mubr.f32.gmra.mrb[0].mxu0 %v1210
    %v1281 = vpop.f32.mrb[0].mxu0
    %v1282 = vadd.f32 %v1207, %v1281
    %v1283 = vpop.f32.mrb[0].mxu0
    %1284 = vmatprep.mubr.f32.mxu0 0.0
    %1285 = vmatmul.mubr.f32.gmra.mrb[0].mxu0 %v1213
    %v1286 = vpop.f32.mrb[0].mxu0
    %v1287 = vadd.f32 %v1207, %v1286
    %v1288 = vpop.f32.mrb[0].mxu0
    %1289 = vdwg.mxu0
    %v1290 = vadd.f32 %v174, %v1282
    %v1291 = vadd.f32 %v175, %v1287
    %v1292 = vld [vmem:[%s16] sm:$0x1]
    %v1293 = vld [vmem:[%s17] sm:$0x1]
    %v1294 = vsel %vm193, %v1290, 0.0
    %1295 = vadd.xlane.f32.xlu0 %v1294
    %v1296 = vpop.xlane.xlu0 %1295
    %v1297 = vsel %vm193, %v1291, 0.0
    %1298 = vadd.xlane.f32.xlu0 %v1297
    %v1299 = vpop.xlane.xlu0 %1298
    %v1300 = vmul.f32 %v1290, %v1290
    %v1301 = vmul.f32 %v1291, %v1291
    %v1302 = vsel %vm193, %v1300, 0.0
    %1303 = vadd.xlane.f32.xlu0 %v1302
    %v1304 = vpop.xlane.xlu0 %1303
    %v1305 = vsel %vm193, %v1301, 0.0
    %1306 = vadd.xlane.f32.xlu0 %v1305
    %v1307 = vpop.xlane.xlu0 %1306
    %v1308 = vmul.f32 %v1296, 0.03125
    %v1309 = vmul.f32 %v1299, 0.03125
    %v1310 = vmul.f32 %v1304, 0.03125
    %v1311 = vmul.f32 %v1307, 0.03125
    %v1312 = vmul.f32 %v1308, %v1308
    %v1313 = vmul.f32 %v1309, %v1309
    %v1314 = vsub.f32 %v1310, %v1312
    %v1315 = vsub.f32 %v1311, %v1313
    %v1316 = vmax.f32 %v1314, 0.0
    %v1317 = vmax.f32 %v1315, 0.0
    %v1318 = vsub.f32 %v1290, %v1308
    %v1319 = vsub.f32 %v1291, %v1309
    %v1320 = vadd.f32 %v1316, 1e-05
    %v1321 = vadd.f32 %v1317, 1e-05
    %v1322 = vrsqrt.pop %v1320
    %v1323 = vrsqrt.pop %v1321
    %v1324 = vmul.f32 %v1318, %v1322
    %v1325 = vmul.f32 %v1319, %v1323
    %v1327 = vlaneseq
    %v1328 = vshrl.u32 %v1327, 7
    %v1329 = vsub.s32 0, %v1328
    %v1330 = vrot.slane %v1292, %v1329
    %v1332 = vmul.f32 %v1324, %v1330
    %v1333 = vmul.f32 %v1325, %v1330
    %v1335 = vlaneseq
    %v1336 = vshrl.u32 %v1335, 7
    %v1337 = vsub.s32 0, %v1336
    %v1338 = vrot.slane %v1293, %v1337
    %v1340 = vadd.f32 %v1332, %v1338
    %v1341 = vadd.f32 %v1333, %v1338
    %v1342 = vld [vmem:[#allocation7] sm:$0xff]
    %v1343 = vld [vmem:[#allocation7 + $0x8] sm:$0xff]
    %v1344 = vld [vmem:[#allocation7 + $0x10] sm:$0xff]
    %v1345 = vld [vmem:[#allocation7 + $0x18] sm:$0xff]
    %v1346 = vld [vmem:[#allocation8] sm:$0x1]
    %v1348 = vlaneseq
    %v1349 = vshrl.u32 %v1348, 7
    %v1350 = vsub.s32 0, %v1349
    %v1351 = vrot.slane %v1346, %v1350
    %v1354 = vsel %vm193, %v1340, 0
    %v1357 = vsel %vm193, %v1341, 0
    %1359 = vmatprep.subr.mxu0 0.0
    %1360 = vmatpush1.msra.mxu0 %v1342
    %1361 = vmatprep.subr.mxu0 0.0
    %1362 = vmatpush1.msra.mxu0 %v1343
    %1363 = vmatprep.subr.mxu0 0.0
    %1364 = vmatpush1.msra.mxu0 %v1344
    %1365 = vmatprep.subr.mxu0 0.0
    %1366 = vmatpush1.msra.mxu0 %v1345
    %1367 = vmatprep.subr.mxu0 0.0
    %1368 = vmatpush1.msra.mxu0 0.0
    %1369 = vmatprep.subr.mxu0 0.0
    %1370 = vmatpush1.msra.mxu0 0.0
    %1371 = vmatprep.subr.mxu0 0.0
    %1372 = vmatpush1.msra.mxu0 0.0
    %1373 = vmatprep.subr.mxu0 0.0
    %1374 = vmatpush1.msra.mxu0 0.0
    %1375 = vmatprep.subr.mxu0 0.0
    %1376 = vmatpush1.msra.mxu0 0.0
    %1377 = vmatprep.subr.mxu0 0.0
    %1378 = vmatpush1.msra.mxu0 0.0
    %1379 = vmatprep.subr.mxu0 0.0
    %1380 = vmatpush1.msra.mxu0 0.0
    %1381 = vmatprep.subr.mxu0 0.0
    %1382 = vmatpush1.msra.mxu0 0.0
    %1383 = vmatprep.subr.mxu0 0.0
    %1384 = vmatpush1.msra.mxu0 0.0
    %1385 = vmatprep.subr.mxu0 0.0
    %1386 = vmatpush1.msra.mxu0 0.0
    %1387 = vmatprep.subr.mxu0 0.0
    %1388 = vmatpush1.msra.mxu0 0.0
    %1389 = vmatprep.subr.mxu0 0.0
    %1390 = vmatpush1.msra.mxu0 0.0
    %1391 = vmatprep.subr.mxu0 0.0
    %1392 = vmatpush1.msra.mxu0 0.0
    %1393 = vmatprep.subr.mxu0 0.0
    %1394 = vmatpush1.msra.mxu0 0.0
    %1395 = vmatprep.subr.mxu0 0.0
    %1396 = vmatpush1.msra.mxu0 0.0
    %1397 = vmatprep.subr.mxu0 0.0
    %1398 = vmatpush1.msra.mxu0 0.0
    %1399 = vmatprep.subr.mxu0 0.0
    %1400 = vmatpush1.msra.mxu0 0.0
    %1401 = vmatprep.subr.mxu0 0.0
    %1402 = vmatpush1.msra.mxu0 0.0
    %1403 = vmatprep.subr.mxu0 0.0
    %1404 = vmatpush1.msra.mxu0 0.0
    %1405 = vmatprep.subr.mxu0 0.0
    %1406 = vmatpush1.msra.mxu0 0.0
    %1407 = vmatprep.subr.mxu0 0.0
    %1408 = vmatpush1.msra.mxu0 0.0
    %1409 = vmatprep.subr.mxu0 0.0
    %1410 = vmatpush1.msra.mxu0 0.0
    %1411 = vmatprep.subr.mxu0 0.0
    %1412 = vmatpush1.msra.mxu0 0.0
    %1413 = vmatprep.subr.mxu0 0.0
    %1414 = vmatpush1.msra.mxu0 0.0
    %1415 = vmatprep.subr.mxu0 0.0
    %1416 = vmatpush1.msra.mxu0 0.0
    %1417 = vmatprep.subr.mxu0 0.0
    %1418 = vmatpush1.msra.mxu0 0.0
    %1419 = vmatprep.subr.mxu0 0.0
    %1420 = vmatpush1.msra.mxu0 0.0
    %1421 = vmatprep.subr.mxu0 0.0
    %1422 = vmatpush1.msra.mxu0 0.0
    %1423 = vmatprep.mubr.f32.mxu0 0.0
    %1424 = vmatmul.mubr.f32.gmra.mrb[0].mxu0 %v1354
    %v1425 = vpop.f32.mrb[0].mxu0
    %v1426 = vadd.f32 %v1351, %v1425
    %v1427 = vpop.f32.mrb[0].mxu0
    %1428 = vmatprep.mubr.f32.mxu0 0.0
    %1429 = vmatmul.mubr.f32.gmra.mrb[0].mxu0 %v1357
    %v1430 = vpop.f32.mrb[0].mxu0
    %v1431 = vadd.f32 %v1351, %v1430
    %v1432 = vpop.f32.mrb[0].mxu0
    %1433 = vdwg.mxu0
    %v1435 = vsel %vm373, %v1426, 0
    %v1438 = vsel %vm373, %v1431, 0
    %v1441 = vsel %vm373, %v267, 0
    %v1444 = vsel %vm373, %v272, 0
    %1446 = vmatprep.subr.mxu0 0.0
    %1447 = vmatpush1.xpose.msra.mxu0 %v1441
    %1448 = vmatprep.subr.mxu0 0.0
    %1449 = vmatpush1.xpose.msra.mxu0 %v1444
    %1450 = vmatprep.subr.mxu0 0.0
    %1451 = vmatpush1.xpose.msra.mxu0 0.0
    %1452 = vmatprep.subr.mxu0 0.0
    %1453 = vmatpush1.xpose.msra.mxu0 0.0
    %1454 = vmatprep.subr.mxu0 0.0
    %1455 = vmatpush1.xpose.msra.mxu0 0.0
    %1456 = vmatprep.subr.mxu0 0.0
    %1457 = vmatpush1.xpose.msra.mxu0 0.0
    %1458 = vmatprep.subr.mxu0 0.0
    %1459 = vmatpush1.xpose.msra.mxu0 0.0
    %1460 = vmatprep.subr.mxu0 0.0
    %1461 = vmatpush1.xpose.msra.mxu0 0.0
    %1462 = vmatprep.subr.mxu0 0.0
    %1463 = vmatpush1.xpose.msra.mxu0 0.0
    %1464 = vmatprep.subr.mxu0 0.0
    %1465 = vmatpush1.xpose.msra.mxu0 0.0
    %1466 = vmatprep.subr.mxu0 0.0
    %1467 = vmatpush1.xpose.msra.mxu0 0.0
    %1468 = vmatprep.subr.mxu0 0.0
    %1469 = vmatpush1.xpose.msra.mxu0 0.0
    %1470 = vmatprep.subr.mxu0 0.0
    %1471 = vmatpush1.xpose.msra.mxu0 0.0
    %1472 = vmatprep.subr.mxu0 0.0
    %1473 = vmatpush1.xpose.msra.mxu0 0.0
    %1474 = vmatprep.subr.mxu0 0.0
    %1475 = vmatpush1.xpose.msra.mxu0 0.0
    %1476 = vmatprep.subr.mxu0 0.0
    %1477 = vmatpush1.xpose.msra.mxu0 0.0
    %1478 = vmatprep.subr.mxu0 0.0
    %1479 = vmatpush1.xpose.msra.mxu0 0.0
    %1480 = vmatprep.subr.mxu0 0.0
    %1481 = vmatpush1.xpose.msra.mxu0 0.0
    %1482 = vmatprep.subr.mxu0 0.0
    %1483 = vmatpush1.xpose.msra.mxu0 0.0
    %1484 = vmatprep.subr.mxu0 0.0
    %1485 = vmatpush1.xpose.msra.mxu0 0.0
    %1486 = vmatprep.subr.mxu0 0.0
    %1487 = vmatpush1.xpose.msra.mxu0 0.0
    %1488 = vmatprep.subr.mxu0 0.0
    %1489 = vmatpush1.xpose.msra.mxu0 0.0
    %1490 = vmatprep.subr.mxu0 0.0
    %1491 = vmatpush1.xpose.msra.mxu0 0.0
    %1492 = vmatprep.subr.mxu0 0.0
    %1493 = vmatpush1.xpose.msra.mxu0 0.0
    %1494 = vmatprep.subr.mxu0 0.0
    %1495 = vmatpush1.xpose.msra.mxu0 0.0
    %1496 = vmatprep.subr.mxu0 0.0
    %1497 = vmatpush1.xpose.msra.mxu0 0.0
    %1498 = vmatprep.subr.mxu0 0.0
    %1499 = vmatpush1.xpose.msra.mxu0 0.0
    %1500 = vmatprep.subr.mxu0 0.0
    %1501 = vmatpush1.xpose.msra.mxu0 0.0
    %1502 = vmatprep.subr.mxu0 0.0
    %1503 = vmatpush1.xpose.msra.mxu0 0.0
    %1504 = vmatprep.subr.mxu0 0.0
    %1505 = vmatpush1.xpose.msra.mxu0 0.0
    %1506 = vmatprep.subr.mxu0 0.0
    %1507 = vmatpush1.xpose.msra.mxu0 0.0
    %1508 = vmatprep.subr.mxu0 0.0
    %1509 = vmatpush1.xpose.msra.mxu0 0.0
    %1510 = vmatprep.mubr.f32.mxu0 0.0
    %1511 = vmatmul.mubr.f32.gmra.mrb[0].mxu0 %v1435
    %v1512 = vpop.f32.mrb[0].mxu0
    %v1513 = vadd.f32 %v180, %v1512
    %v1514 = vpop.f32.mrb[0].mxu0
    %1515 = vmatprep.mubr.f32.mxu0 0.0
    %1516 = vmatmul.mubr.f32.gmra.mrb[0].mxu0 %v1438
    %v1517 = vpop.f32.mrb[0].mxu0
    %v1518 = vadd.f32 %v181, %v1517
    %v1519 = vpop.f32.mrb[0].mxu0
    %1520 = vdwg.mxu0
    %v1521 = vsel %vm457, %v1513, -inf
    %1522 = vmax.xlane.f32.xlu0 %v1521
    %v1523 = vpop.xlane.xlu0 %1522
    %v1524 = vsel %vm457, %v1518, -inf
    %1525 = vmax.xlane.f32.xlu0 %v1524
    %v1526 = vpop.xlane.xlu0 %1525
    %v1527 = vsub.f32 %v1513, %v1523
    %v1528 = vsub.f32 %v1518, %v1526
    %v1529 = vmul.f32 %v1527, 1.442695
    %v1530 = vpow.pop %v1529
    %v1531 = vmul.f32 %v1528, 1.442695
    %v1532 = vpow.pop %v1531
    %v1533 = vsel %vm457, %v1530, 0.0
    %1534 = vadd.xlane.f32.xlu0 %v1533
    %v1535 = vpop.xlane.xlu0 %1534
    %v1536 = vsel %vm457, %v1532, 0.0
    %1537 = vadd.xlane.f32.xlu0 %v1536
    %v1538 = vpop.xlane.xlu0 %1537
    %v1539 = vrcp.pop %v1535
    %v1540 = vrcp.pop %v1538
    %v1541 = vmul.f32 %v1530, %v1539
    %v1542 = vmul.f32 %v1532, %v1540
    %1543 = vrot.lane.b32.xlu0 %v267, 96
    %v1544 = vpop.permute.xlu0 %1543
    %1545 = vrot.lane.b32.xlu0 %v272, 96
    %v1546 = vpop.permute.xlu0 %1545
    %v1550 = vsel %vm457, %v1541, 0
    %v1553 = vsel %vm457, %v1542, 0
    %1555 = vmatprep.subr.mxu0 0.0
    %1556 = vmatpush1.msra.mxu0 %v1544
    %1557 = vmatprep.subr.mxu0 0.0
    %1558 = vmatpush1.msra.mxu0 %v1546
    %1559 = vmatprep.subr.mxu0 0.0
    %1560 = vmatpush1.msra.mxu0 0.0
    %1561 = vmatprep.subr.mxu0 0.0
    %1562 = vmatpush1.msra.mxu0 0.0
    %1563 = vmatprep.subr.mxu0 0.0
    %1564 = vmatpush1.msra.mxu0 0.0
    %1565 = vmatprep.subr.mxu0 0.0
    %1566 = vmatpush1.msra.mxu0 0.0
    %1567 = vmatprep.subr.mxu0 0.0
    %1568 = vmatpush1.msra.mxu0 0.0
    %1569 = vmatprep.subr.mxu0 0.0
    %1570 = vmatpush1.msra.mxu0 0.0
    %1571 = vmatprep.subr.mxu0 0.0
    %1572 = vmatpush1.msra.mxu0 0.0
    %1573 = vmatprep.subr.mxu0 0.0
    %1574 = vmatpush1.msra.mxu0 0.0
    %1575 = vmatprep.subr.mxu0 0.0
    %1576 = vmatpush1.msra.mxu0 0.0
    %1577 = vmatprep.subr.mxu0 0.0
    %1578 = vmatpush1.msra.mxu0 0.0
    %1579 = vmatprep.subr.mxu0 0.0
    %1580 = vmatpush1.msra.mxu0 0.0
    %1581 = vmatprep.subr.mxu0 0.0
    %1582 = vmatpush1.msra.mxu0 0.0
    %1583 = vmatprep.subr.mxu0 0.0
    %1584 = vmatpush1.msra.mxu0 0.0
    %1585 = vmatprep.subr.mxu0 0.0
    %1586 = vmatpush1.msra.mxu0 0.0
    %1587 = vmatprep.subr.mxu0 0.0
    %1588 = vmatpush1.msra.mxu0 0.0
    %1589 = vmatprep.subr.mxu0 0.0
    %1590 = vmatpush1.msra.mxu0 0.0
    %1591 = vmatprep.subr.mxu0 0.0
    %1592 = vmatpush1.msra.mxu0 0.0
    %1593 = vmatprep.subr.mxu0 0.0
    %1594 = vmatpush1.msra.mxu0 0.0
    %1595 = vmatprep.subr.mxu0 0.0
    %1596 = vmatpush1.msra.mxu0 0.0
    %1597 = vmatprep.subr.mxu0 0.0
    %1598 = vmatpush1.msra.mxu0 0.0
    %1599 = vmatprep.subr.mxu0 0.0
    %1600 = vmatpush1.msra.mxu0 0.0
    %1601 = vmatprep.subr.mxu0 0.0
    %1602 = vmatpush1.msra.mxu0 0.0
    %1603 = vmatprep.subr.mxu0 0.0
    %1604 = vmatpush1.msra.mxu0 0.0
    %1605 = vmatprep.subr.mxu0 0.0
    %1606 = vmatpush1.msra.mxu0 0.0
    %1607 = vmatprep.subr.mxu0 0.0
    %1608 = vmatpush1.msra.mxu0 0.0
    %1609 = vmatprep.subr.mxu0 0.0
    %1610 = vmatpush1.msra.mxu0 0.0
    %1611 = vmatprep.subr.mxu0 0.0
    %1612 = vmatpush1.msra.mxu0 0.0
    %1613 = vmatprep.subr.mxu0 0.0
    %1614 = vmatpush1.msra.mxu0 0.0
    %1615 = vmatprep.subr.mxu0 0.0
    %1616 = vmatpush1.msra.mxu0 0.0
    %1617 = vmatprep.subr.mxu0 0.0
    %1618 = vmatpush1.msra.mxu0 0.0
    %1619 = vmatprep.mubr.f32.mxu0 0.0
    %1620 = vmatmul.mubr.f32.gmra.mrb[0].mxu0 %v1550
    %v1621 = vpop.f32.mrb[0].mxu0
    %v1622 = vadd.f32 0.0, %v1621
    %v1623 = vpop.f32.mrb[0].mxu0
    %1624 = vmatprep.mubr.f32.mxu0 0.0
    %1625 = vmatmul.mubr.f32.gmra.mrb[0].mxu0 %v1553
    %v1626 = vpop.f32.mrb[0].mxu0
    %v1627 = vadd.f32 0.0, %v1626
    %v1628 = vpop.f32.mrb[0].mxu0
    %1629 = vdwg.mxu0
    %1630 = vrot.lane.b32.xlu0 %v1426, 120
    %v1631 = vpop.permute.xlu0 %1630
    %1632 = vrot.lane.b32.xlu0 %v1431, 120
    %v1633 = vpop.permute.xlu0 %1632
    %1634 = vrot.lane.b32.xlu0 %v267, 120
    %v1635 = vpop.permute.xlu0 %1634
    %1636 = vrot.lane.b32.xlu0 %v272, 120
    %v1637 = vpop.permute.xlu0 %1636
    %v1638 = vsel %vm373, %v1631, 0
    %v1640 = vsel %vm373, %v1633, 0
    %v1642 = vsel %vm373, %v1635, 0
    %v1644 = vsel %vm373, %v1637, 0
    %1646 = vmatprep.subr.mxu0 0.0
    %1647 = vmatpush1.xpose.msra.mxu0 %v1642
    %1648 = vmatprep.subr.mxu0 0.0
    %1649 = vmatpush1.xpose.msra.mxu0 %v1644
    %1650 = vmatprep.subr.mxu0 0.0
    %1651 = vmatpush1.xpose.msra.mxu0 0.0
    %1652 = vmatprep.subr.mxu0 0.0
    %1653 = vmatpush1.xpose.msra.mxu0 0.0
    %1654 = vmatprep.subr.mxu0 0.0
    %1655 = vmatpush1.xpose.msra.mxu0 0.0
    %1656 = vmatprep.subr.mxu0 0.0
    %1657 = vmatpush1.xpose.msra.mxu0 0.0
    %1658 = vmatprep.subr.mxu0 0.0
    %1659 = vmatpush1.xpose.msra.mxu0 0.0
    %1660 = vmatprep.subr.mxu0 0.0
    %1661 = vmatpush1.xpose.msra.mxu0 0.0
    %1662 = vmatprep.subr.mxu0 0.0
    %1663 = vmatpush1.xpose.msra.mxu0 0.0
    %1664 = vmatprep.subr.mxu0 0.0
    %1665 = vmatpush1.xpose.msra.mxu0 0.0
    %1666 = vmatprep.subr.mxu0 0.0
    %1667 = vmatpush1.xpose.msra.mxu0 0.0
    %1668 = vmatprep.subr.mxu0 0.0
    %1669 = vmatpush1.xpose.msra.mxu0 0.0
    %1670 = vmatprep.subr.mxu0 0.0
    %1671 = vmatpush1.xpose.msra.mxu0 0.0
    %1672 = vmatprep.subr.mxu0 0.0
    %1673 = vmatpush1.xpose.msra.mxu0 0.0
    %1674 = vmatprep.subr.mxu0 0.0
    %1675 = vmatpush1.xpose.msra.mxu0 0.0
    %1676 = vmatprep.subr.mxu0 0.0
    %1677 = vmatpush1.xpose.msra.mxu0 0.0
    %1678 = vmatprep.subr.mxu0 0.0
    %1679 = vmatpush1.xpose.msra.mxu0 0.0
    %1680 = vmatprep.subr.mxu0 0.0
    %1681 = vmatpush1.xpose.msra.mxu0 0.0
    %1682 = vmatprep.subr.mxu0 0.0
    %1683 = vmatpush1.xpose.msra.mxu0 0.0
    %1684 = vmatprep.subr.mxu0 0.0
    %1685 = vmatpush1.xpose.msra.mxu0 0.0
    %1686 = vmatprep.subr.mxu0 0.0
    %1687 = vmatpush1.xpose.msra.mxu0 0.0
    %1688 = vmatprep.subr.mxu0 0.0
    %1689 = vmatpush1.xpose.msra.mxu0 0.0
    %1690 = vmatprep.subr.mxu0 0.0
    %1691 = vmatpush1.xpose.msra.mxu0 0.0
    %1692 = vmatprep.subr.mxu0 0.0
    %1693 = vmatpush1.xpose.msra.mxu0 0.0
    %1694 = vmatprep.subr.mxu0 0.0
    %1695 = vmatpush1.xpose.msra.mxu0 0.0
    %1696 = vmatprep.subr.mxu0 0.0
    %1697 = vmatpush1.xpose.msra.mxu0 0.0
    %1698 = vmatprep.subr.mxu0 0.0
    %1699 = vmatpush1.xpose.msra.mxu0 0.0
    %1700 = vmatprep.subr.mxu0 0.0
    %1701 = vmatpush1.xpose.msra.mxu0 0.0
    %1702 = vmatprep.subr.mxu0 0.0
    %1703 = vmatpush1.xpose.msra.mxu0 0.0
    %1704 = vmatprep.subr.mxu0 0.0
    %1705 = vmatpush1.xpose.msra.mxu0 0.0
    %1706 = vmatprep.subr.mxu0 0.0
    %1707 = vmatpush1.xpose.msra.mxu0 0.0
    %1708 = vmatprep.subr.mxu0 0.0
    %1709 = vmatpush1.xpose.msra.mxu0 0.0
    %1710 = vmatprep.mubr.f32.mxu0 0.0
    %1711 = vmatmul.mubr.f32.gmra.mrb[0].mxu0 %v1638
    %v1712 = vpop.f32.mrb[0].mxu0
    %v1713 = vadd.f32 %v180, %v1712
    %v1714 = vpop.f32.mrb[0].mxu0
    %1715 = vmatprep.mubr.f32.mxu0 0.0
    %1716 = vmatmul.mubr.f32.gmra.mrb[0].mxu0 %v1640
    %v1717 = vpop.f32.mrb[0].mxu0
    %v1718 = vadd.f32 %v181, %v1717
    %v1719 = vpop.f32.mrb[0].mxu0
    %1720 = vdwg.mxu0
    %v1721 = vsel %vm457, %v1713, -inf
    %1722 = vmax.xlane.f32.xlu0 %v1721
    %v1723 = vpop.xlane.xlu0 %1722
    %v1724 = vsel %vm457, %v1718, -inf
    %1725 = vmax.xlane.f32.xlu0 %v1724
    %v1726 = vpop.xlane.xlu0 %1725
    %v1727 = vsub.f32 %v1713, %v1723
    %v1728 = vsub.f32 %v1718, %v1726
    %v1729 = vmul.f32 %v1727, 1.442695
    %v1730 = vpow.pop %v1729
    %v1731 = vmul.f32 %v1728, 1.442695
    %v1732 = vpow.pop %v1731
    %v1733 = vsel %vm457, %v1730, 0.0
    %1734 = vadd.xlane.f32.xlu0 %v1733
    %v1735 = vpop.xlane.xlu0 %1734
    %v1736 = vsel %vm457, %v1732, 0.0
    %1737 = vadd.xlane.f32.xlu0 %v1736
    %v1738 = vpop.xlane.xlu0 %1737
    %v1739 = vrcp.pop %v1735
    %v1740 = vrcp.pop %v1738
    %v1741 = vmul.f32 %v1730, %v1739
    %v1742 = vmul.f32 %v1732, %v1740
    %1743 = vrot.lane.b32.xlu0 %v267, 88
    %v1744 = vpop.permute.xlu0 %1743
    %1745 = vrot.lane.b32.xlu0 %v272, 88
    %v1746 = vpop.permute.xlu0 %1745
    %v1750 = vsel %vm457, %v1741, 0
    %v1753 = vsel %vm457, %v1742, 0
    %1755 = vmatprep.subr.mxu0 0.0
    %1756 = vmatpush1.msra.mxu0 %v1744
    %1757 = vmatprep.subr.mxu0 0.0
    %1758 = vmatpush1.msra.mxu0 %v1746
    %1759 = vmatprep.subr.mxu0 0.0
    %1760 = vmatpush1.msra.mxu0 0.0
    %1761 = vmatprep.subr.mxu0 0.0
    %1762 = vmatpush1.msra.mxu0 0.0
    %1763 = vmatprep.subr.mxu0 0.0
    %1764 = vmatpush1.msra.mxu0 0.0
    %1765 = vmatprep.subr.mxu0 0.0
    %1766 = vmatpush1.msra.mxu0 0.0
    %1767 = vmatprep.subr.mxu0 0.0
    %1768 = vmatpush1.msra.mxu0 0.0
    %1769 = vmatprep.subr.mxu0 0.0
    %1770 = vmatpush1.msra.mxu0 0.0
    %1771 = vmatprep.subr.mxu0 0.0
    %1772 = vmatpush1.msra.mxu0 0.0
    %1773 = vmatprep.subr.mxu0 0.0
    %1774 = vmatpush1.msra.mxu0 0.0
    %1775 = vmatprep.subr.mxu0 0.0
    %1776 = vmatpush1.msra.mxu0 0.0
    %1777 = vmatprep.subr.mxu0 0.0
    %1778 = vmatpush1.msra.mxu0 0.0
    %1779 = vmatprep.subr.mxu0 0.0
    %1780 = vmatpush1.msra.mxu0 0.0
    %1781 = vmatprep.subr.mxu0 0.0
    %1782 = vmatpush1.msra.mxu0 0.0
    %1783 = vmatprep.subr.mxu0 0.0
    %1784 = vmatpush1.msra.mxu0 0.0
    %1785 = vmatprep.subr.mxu0 0.0
    %1786 = vmatpush1.msra.mxu0 0.0
    %1787 = vmatprep.subr.mxu0 0.0
    %1788 = vmatpush1.msra.mxu0 0.0
    %1789 = vmatprep.subr.mxu0 0.0
    %1790 = vmatpush1.msra.mxu0 0.0
    %1791 = vmatprep.subr.mxu0 0.0
    %1792 = vmatpush1.msra.mxu0 0.0
    %1793 = vmatprep.subr.mxu0 0.0
    %1794 = vmatpush1.msra.mxu0 0.0
    %1795 = vmatprep.subr.mxu0 0.0
    %1796 = vmatpush1.msra.mxu0 0.0
    %1797 = vmatprep.subr.mxu0 0.0
    %1798 = vmatpush1.msra.mxu0 0.0
    %1799 = vmatprep.subr.mxu0 0.0
    %1800 = vmatpush1.msra.mxu0 0.0
    %1801 = vmatprep.subr.mxu0 0.0
    %1802 = vmatpush1.msra.mxu0 0.0
    %1803 = vmatprep.subr.mxu0 0.0
    %1804 = vmatpush1.msra.mxu0 0.0
    %1805 = vmatprep.subr.mxu0 0.0
    %1806 = vmatpush1.msra.mxu0 0.0
    %1807 = vmatprep.subr.mxu0 0.0
    %1808 = vmatpush1.msra.mxu0 0.0
    %1809 = vmatprep.subr.mxu0 0.0
    %1810 = vmatpush1.msra.mxu0 0.0
    %1811 = vmatprep.subr.mxu0 0.0
    %1812 = vmatpush1.msra.mxu0 0.0
    %1813 = vmatprep.subr.mxu0 0.0
    %1814 = vmatpush1.msra.mxu0 0.0
    %1815 = vmatprep.subr.mxu0 0.0
    %1816 = vmatpush1.msra.mxu0 0.0
    %1817 = vmatprep.subr.mxu0 0.0
    %1818 = vmatpush1.msra.mxu0 0.0
    %1819 = vmatprep.mubr.f32.mxu0 0.0
    %1820 = vmatmul.mubr.f32.gmra.mrb[0].mxu0 %v1750
    %v1821 = vpop.f32.mrb[0].mxu0
    %v1822 = vadd.f32 0.0, %v1821
    %v1823 = vpop.f32.mrb[0].mxu0
    %1824 = vmatprep.mubr.f32.mxu0 0.0
    %1825 = vmatmul.mubr.f32.gmra.mrb[0].mxu0 %v1753
    %v1826 = vpop.f32.mrb[0].mxu0
    %v1827 = vadd.f32 0.0, %v1826
    %v1828 = vpop.f32.mrb[0].mxu0
    %1829 = vdwg.mxu0
    %1830 = vrot.lane.b32.xlu0 %v1426, 112
    %v1831 = vpop.permute.xlu0 %1830
    %1832 = vrot.lane.b32.xlu0 %v1431, 112
    %v1833 = vpop.permute.xlu0 %1832
    %1834 = vrot.lane.b32.xlu0 %v267, 112
    %v1835 = vpop.permute.xlu0 %1834
    %1836 = vrot.lane.b32.xlu0 %v272, 112
    %v1837 = vpop.permute.xlu0 %1836
    %v1838 = vsel %vm373, %v1831, 0
    %v1840 = vsel %vm373, %v1833, 0
    %v1842 = vsel %vm373, %v1835, 0
    %v1844 = vsel %vm373, %v1837, 0
    %1846 = vmatprep.subr.mxu0 0.0
    %1847 = vmatpush1.xpose.msra.mxu0 %v1842
    %1848 = vmatprep.subr.mxu0 0.0
    %1849 = vmatpush1.xpose.msra.mxu0 %v1844
    %1850 = vmatprep.subr.mxu0 0.0
    %1851 = vmatpush1.xpose.msra.mxu0 0.0
    %1852 = vmatprep.subr.mxu0 0.0
    %1853 = vmatpush1.xpose.msra.mxu0 0.0
    %1854 = vmatprep.subr.mxu0 0.0
    %1855 = vmatpush1.xpose.msra.mxu0 0.0
    %1856 = vmatprep.subr.mxu0 0.0
    %1857 = vmatpush1.xpose.msra.mxu0 0.0
    %1858 = vmatprep.subr.mxu0 0.0
    %1859 = vmatpush1.xpose.msra.mxu0 0.0
    %1860 = vmatprep.subr.mxu0 0.0
    %1861 = vmatpush1.xpose.msra.mxu0 0.0
    %1862 = vmatprep.subr.mxu0 0.0
    %1863 = vmatpush1.xpose.msra.mxu0 0.0
    %1864 = vmatprep.subr.mxu0 0.0
    %1865 = vmatpush1.xpose.msra.mxu0 0.0
    %1866 = vmatprep.subr.mxu0 0.0
    %1867 = vmatpush1.xpose.msra.mxu0 0.0
    %1868 = vmatprep.subr.mxu0 0.0
    %1869 = vmatpush1.xpose.msra.mxu0 0.0
    %1870 = vmatprep.subr.mxu0 0.0
    %1871 = vmatpush1.xpose.msra.mxu0 0.0
    %1872 = vmatprep.subr.mxu0 0.0
    %1873 = vmatpush1.xpose.msra.mxu0 0.0
    %1874 = vmatprep.subr.mxu0 0.0
    %1875 = vmatpush1.xpose.msra.mxu0 0.0
    %1876 = vmatprep.subr.mxu0 0.0
    %1877 = vmatpush1.xpose.msra.mxu0 0.0
    %1878 = vmatprep.subr.mxu0 0.0
    %1879 = vmatpush1.xpose.msra.mxu0 0.0
    %1880 = vmatprep.subr.mxu0 0.0
    %1881 = vmatpush1.xpose.msra.mxu0 0.0
    %1882 = vmatprep.subr.mxu0 0.0
    %1883 = vmatpush1.xpose.msra.mxu0 0.0
    %1884 = vmatprep.subr.mxu0 0.0
    %1885 = vmatpush1.xpose.msra.mxu0 0.0
    %1886 = vmatprep.subr.mxu0 0.0
    %1887 = vmatpush1.xpose.msra.mxu0 0.0
    %1888 = vmatprep.subr.mxu0 0.0
    %1889 = vmatpush1.xpose.msra.mxu0 0.0
    %1890 = vmatprep.subr.mxu0 0.0
    %1891 = vmatpush1.xpose.msra.mxu0 0.0
    %1892 = vmatprep.subr.mxu0 0.0
    %1893 = vmatpush1.xpose.msra.mxu0 0.0
    %1894 = vmatprep.subr.mxu0 0.0
    %1895 = vmatpush1.xpose.msra.mxu0 0.0
    %1896 = vmatprep.subr.mxu0 0.0
    %1897 = vmatpush1.xpose.msra.mxu0 0.0
    %1898 = vmatprep.subr.mxu0 0.0
    %1899 = vmatpush1.xpose.msra.mxu0 0.0
    %1900 = vmatprep.subr.mxu0 0.0
    %1901 = vmatpush1.xpose.msra.mxu0 0.0
    %1902 = vmatprep.subr.mxu0 0.0
    %1903 = vmatpush1.xpose.msra.mxu0 0.0
    %1904 = vmatprep.subr.mxu0 0.0
    %1905 = vmatpush1.xpose.msra.mxu0 0.0
    %1906 = vmatprep.subr.mxu0 0.0
    %1907 = vmatpush1.xpose.msra.mxu0 0.0
    %1908 = vmatprep.subr.mxu0 0.0
    %1909 = vmatpush1.xpose.msra.mxu0 0.0
    %1910 = vmatprep.mubr.f32.mxu0 0.0
    %1911 = vmatmul.mubr.f32.gmra.mrb[0].mxu0 %v1838
    %v1912 = vpop.f32.mrb[0].mxu0
    %v1913 = vadd.f32 %v180, %v1912
    %v1914 = vpop.f32.mrb[0].mxu0
    %1915 = vmatprep.mubr.f32.mxu0 0.0
    %1916 = vmatmul.mubr.f32.gmra.mrb[0].mxu0 %v1840
    %v1917 = vpop.f32.mrb[0].mxu0
    %v1918 = vadd.f32 %v181, %v1917
    %v1919 = vpop.f32.mrb[0].mxu0
    %1920 = vdwg.mxu0
    %v1921 = vsel %vm457, %v1913, -inf
    %1922 = vmax.xlane.f32.xlu0 %v1921
    %v1923 = vpop.xlane.xlu0 %1922
    %v1924 = vsel %vm457, %v1918, -inf
    %1925 = vmax.xlane.f32.xlu0 %v1924
    %v1926 = vpop.xlane.xlu0 %1925
    %v1927 = vsub.f32 %v1913, %v1923
    %v1928 = vsub.f32 %v1918, %v1926
    %v1929 = vmul.f32 %v1927, 1.442695
    %v1930 = vpow.pop %v1929
    %v1931 = vmul.f32 %v1928, 1.442695
    %v1932 = vpow.pop %v1931
    %v1933 = vsel %vm457, %v1930, 0.0
    %1934 = vadd.xlane.f32.xlu0 %v1933
    %v1935 = vpop.xlane.xlu0 %1934
    %v1936 = vsel %vm457, %v1932, 0.0
    %1937 = vadd.xlane.f32.xlu0 %v1936
    %v1938 = vpop.xlane.xlu0 %1937
    %v1939 = vrcp.pop %v1935
    %v1940 = vrcp.pop %v1938
    %v1941 = vmul.f32 %v1930, %v1939
    %v1942 = vmul.f32 %v1932, %v1940
    %1943 = vrot.lane.b32.xlu0 %v267, 80
    %v1944 = vpop.permute.xlu0 %1943
    %1945 = vrot.lane.b32.xlu0 %v272, 80
    %v1946 = vpop.permute.xlu0 %1945
    %v1950 = vsel %vm457, %v1941, 0
    %v1953 = vsel %vm457, %v1942, 0
    %1955 = vmatprep.subr.mxu0 0.0
    %1956 = vmatpush1.msra.mxu0 %v1944
    %1957 = vmatprep.subr.mxu0 0.0
    %1958 = vmatpush1.msra.mxu0 %v1946
    %1959 = vmatprep.subr.mxu0 0.0
    %1960 = vmatpush1.msra.mxu0 0.0
    %1961 = vmatprep.subr.mxu0 0.0
    %1962 = vmatpush1.msra.mxu0 0.0
    %1963 = vmatprep.subr.mxu0 0.0
    %1964 = vmatpush1.msra.mxu0 0.0
    %1965 = vmatprep.subr.mxu0 0.0
    %1966 = vmatpush1.msra.mxu0 0.0
    %1967 = vmatprep.subr.mxu0 0.0
    %1968 = vmatpush1.msra.mxu0 0.0
    %1969 = vmatprep.subr.mxu0 0.0
    %1970 = vmatpush1.msra.mxu0 0.0
    %1971 = vmatprep.subr.mxu0 0.0
    %1972 = vmatpush1.msra.mxu0 0.0
    %1973 = vmatprep.subr.mxu0 0.0
    %1974 = vmatpush1.msra.mxu0 0.0
    %1975 = vmatprep.subr.mxu0 0.0
    %1976 = vmatpush1.msra.mxu0 0.0
    %1977 = vmatprep.subr.mxu0 0.0
    %1978 = vmatpush1.msra.mxu0 0.0
    %1979 = vmatprep.subr.mxu0 0.0
    %1980 = vmatpush1.msra.mxu0 0.0
    %1981 = vmatprep.subr.mxu0 0.0
    %1982 = vmatpush1.msra.mxu0 0.0
    %1983 = vmatprep.subr.mxu0 0.0
    %1984 = vmatpush1.msra.mxu0 0.0
    %1985 = vmatprep.subr.mxu0 0.0
    %1986 = vmatpush1.msra.mxu0 0.0
    %1987 = vmatprep.subr.mxu0 0.0
    %1988 = vmatpush1.msra.mxu0 0.0
    %1989 = vmatprep.subr.mxu0 0.0
    %1990 = vmatpush1.msra.mxu0 0.0
    %1991 = vmatprep.subr.mxu0 0.0
    %1992 = vmatpush1.msra.mxu0 0.0
    %1993 = vmatprep.subr.mxu0 0.0
    %1994 = vmatpush1.msra.mxu0 0.0
    %1995 = vmatprep.subr.mxu0 0.0
    %1996 = vmatpush1.msra.mxu0 0.0
    %1997 = vmatprep.subr.mxu0 0.0
    %1998 = vmatpush1.msra.mxu0 0.0
    %1999 = vmatprep.subr.mxu0 0.0
    %2000 = vmatpush1.msra.mxu0 0.0
    %2001 = vmatprep.subr.mxu0 0.0
    %2002 = vmatpush1.msra.mxu0 0.0
    %2003 = vmatprep.subr.mxu0 0.0
    %2004 = vmatpush1.msra.mxu0 0.0
    %2005 = vmatprep.subr.mxu0 0.0
    %2006 = vmatpush1.msra.mxu0 0.0
    %2007 = vmatprep.subr.mxu0 0.0
    %2008 = vmatpush1.msra.mxu0 0.0
    %2009 = vmatprep.subr.mxu0 0.0
    %2010 = vmatpush1.msra.mxu0 0.0
    %2011 = vmatprep.subr.mxu0 0.0
    %2012 = vmatpush1.msra.mxu0 0.0
    %2013 = vmatprep.subr.mxu0 0.0
    %2014 = vmatpush1.msra.mxu0 0.0
    %2015 = vmatprep.subr.mxu0 0.0
    %2016 = vmatpush1.msra.mxu0 0.0
    %2017 = vmatprep.subr.mxu0 0.0
    %2018 = vmatpush1.msra.mxu0 0.0
    %2019 = vmatprep.mubr.f32.mxu0 0.0
    %2020 = vmatmul.mubr.f32.gmra.mrb[0].mxu0 %v1950
    %v2021 = vpop.f32.mrb[0].mxu0
    %v2022 = vadd.f32 0.0, %v2021
    %v2023 = vpop.f32.mrb[0].mxu0
    %2024 = vmatprep.mubr.f32.mxu0 0.0
    %2025 = vmatmul.mubr.f32.gmra.mrb[0].mxu0 %v1953
    %v2026 = vpop.f32.mrb[0].mxu0
    %v2027 = vadd.f32 0.0, %v2026
    %v2028 = vpop.f32.mrb[0].mxu0
    %2029 = vdwg.mxu0
    %2030 = vrot.lane.b32.xlu0 %v1426, 104
    %v2031 = vpop.permute.xlu0 %2030
    %2032 = vrot.lane.b32.xlu0 %v1431, 104
    %v2033 = vpop.permute.xlu0 %2032
    %2034 = vrot.lane.b32.xlu0 %v267, 104
    %v2035 = vpop.permute.xlu0 %2034
    %2036 = vrot.lane.b32.xlu0 %v272, 104
    %v2037 = vpop.permute.xlu0 %2036
    %v2038 = vsel %vm373, %v2031, 0
    %v2040 = vsel %vm373, %v2033, 0
    %v2042 = vsel %vm373, %v2035, 0
    %v2044 = vsel %vm373, %v2037, 0
    %2046 = vmatprep.subr.mxu0 0.0
    %2047 = vmatpush1.xpose.msra.mxu0 %v2042
    %2048 = vmatprep.subr.mxu0 0.0
    %2049 = vmatpush1.xpose.msra.mxu0 %v2044
    %2050 = vmatprep.subr.mxu0 0.0
    %2051 = vmatpush1.xpose.msra.mxu0 0.0
    %2052 = vmatprep.subr.mxu0 0.0
    %2053 = vmatpush1.xpose.msra.mxu0 0.0
    %2054 = vmatprep.subr.mxu0 0.0
    %2055 = vmatpush1.xpose.msra.mxu0 0.0
    %2056 = vmatprep.subr.mxu0 0.0
    %2057 = vmatpush1.xpose.msra.mxu0 0.0
    %2058 = vmatprep.subr.mxu0 0.0
    %2059 = vmatpush1.xpose.msra.mxu0 0.0
    %2060 = vmatprep.subr.mxu0 0.0
    %2061 = vmatpush1.xpose.msra.mxu0 0.0
    %2062 = vmatprep.subr.mxu0 0.0
    %2063 = vmatpush1.xpose.msra.mxu0 0.0
    %2064 = vmatprep.subr.mxu0 0.0
    %2065 = vmatpush1.xpose.msra.mxu0 0.0
    %2066 = vmatprep.subr.mxu0 0.0
    %2067 = vmatpush1.xpose.msra.mxu0 0.0
    %2068 = vmatprep.subr.mxu0 0.0
    %2069 = vmatpush1.xpose.msra.mxu0 0.0
    %2070 = vmatprep.subr.mxu0 0.0
    %2071 = vmatpush1.xpose.msra.mxu0 0.0
    %2072 = vmatprep.subr.mxu0 0.0
    %2073 = vmatpush1.xpose.msra.mxu0 0.0
    %2074 = vmatprep.subr.mxu0 0.0
    %2075 = vmatpush1.xpose.msra.mxu0 0.0
    %2076 = vmatprep.subr.mxu0 0.0
    %2077 = vmatpush1.xpose.msra.mxu0 0.0
    %2078 = vmatprep.subr.mxu0 0.0
    %2079 = vmatpush1.xpose.msra.mxu0 0.0
    %2080 = vmatprep.subr.mxu0 0.0
    %2081 = vmatpush1.xpose.msra.mxu0 0.0
    %2082 = vmatprep.subr.mxu0 0.0
    %2083 = vmatpush1.xpose.msra.mxu0 0.0
    %2084 = vmatprep.subr.mxu0 0.0
    %2085 = vmatpush1.xpose.msra.mxu0 0.0
    %2086 = vmatprep.subr.mxu0 0.0
    %2087 = vmatpush1.xpose.msra.mxu0 0.0
    %2088 = vmatprep.subr.mxu0 0.0
    %2089 = vmatpush1.xpose.msra.mxu0 0.0
    %2090 = vmatprep.subr.mxu0 0.0
    %2091 = vmatpush1.xpose.msra.mxu0 0.0
    %2092 = vmatprep.subr.mxu0 0.0
    %2093 = vmatpush1.xpose.msra.mxu0 0.0
    %2094 = vmatprep.subr.mxu0 0.0
    %2095 = vmatpush1.xpose.msra.mxu0 0.0
    %2096 = vmatprep.subr.mxu0 0.0
    %2097 = vmatpush1.xpose.msra.mxu0 0.0
    %2098 = vmatprep.subr.mxu0 0.0
    %2099 = vmatpush1.xpose.msra.mxu0 0.0
    %2100 = vmatprep.subr.mxu0 0.0
    %2101 = vmatpush1.xpose.msra.mxu0 0.0
    %2102 = vmatprep.subr.mxu0 0.0
    %2103 = vmatpush1.xpose.msra.mxu0 0.0
    %2104 = vmatprep.subr.mxu0 0.0
    %2105 = vmatpush1.xpose.msra.mxu0 0.0
    %2106 = vmatprep.subr.mxu0 0.0
    %2107 = vmatpush1.xpose.msra.mxu0 0.0
    %2108 = vmatprep.subr.mxu0 0.0
    %2109 = vmatpush1.xpose.msra.mxu0 0.0
    %2110 = vmatprep.mubr.f32.mxu0 0.0
    %2111 = vmatmul.mubr.f32.gmra.mrb[0].mxu0 %v2038
    %v2112 = vpop.f32.mrb[0].mxu0
    %v2113 = vadd.f32 %v180, %v2112
    %v2114 = vpop.f32.mrb[0].mxu0
    %2115 = vmatprep.mubr.f32.mxu0 0.0
    %2116 = vmatmul.mubr.f32.gmra.mrb[0].mxu0 %v2040
    %v2117 = vpop.f32.mrb[0].mxu0
    %v2118 = vadd.f32 %v181, %v2117
    %v2119 = vpop.f32.mrb[0].mxu0
    %2120 = vdwg.mxu0
    %v2121 = vsel %vm457, %v2113, -inf
    %2122 = vmax.xlane.f32.xlu0 %v2121
    %v2123 = vpop.xlane.xlu0 %2122
    %v2124 = vsel %vm457, %v2118, -inf
    %2125 = vmax.xlane.f32.xlu0 %v2124
    %v2126 = vpop.xlane.xlu0 %2125
    %v2127 = vsub.f32 %v2113, %v2123
    %v2128 = vsub.f32 %v2118, %v2126
    %v2129 = vmul.f32 %v2127, 1.442695
    %v2130 = vpow.pop %v2129
    %v2131 = vmul.f32 %v2128, 1.442695
    %v2132 = vpow.pop %v2131
    %v2133 = vsel %vm457, %v2130, 0.0
    %2134 = vadd.xlane.f32.xlu0 %v2133
    %v2135 = vpop.xlane.xlu0 %2134
    %v2136 = vsel %vm457, %v2132, 0.0
    %2137 = vadd.xlane.f32.xlu0 %v2136
    %v2138 = vpop.xlane.xlu0 %2137
    %v2139 = vrcp.pop %v2135
    %v2140 = vrcp.pop %v2138
    %v2141 = vmul.f32 %v2130, %v2139
    %v2142 = vmul.f32 %v2132, %v2140
    %2143 = vrot.lane.b32.xlu0 %v267, 72
    %v2144 = vpop.permute.xlu0 %2143
    %2145 = vrot.lane.b32.xlu0 %v272, 72
    %v2146 = vpop.permute.xlu0 %2145
    %v2150 = vsel %vm457, %v2141, 0
    %v2153 = vsel %vm457, %v2142, 0
    %2155 = vmatprep.subr.mxu0 0.0
    %2156 = vmatpush1.msra.mxu0 %v2144
    %2157 = vmatprep.subr.mxu0 0.0
    %2158 = vmatpush1.msra.mxu0 %v2146
    %2159 = vmatprep.subr.mxu0 0.0
    %2160 = vmatpush1.msra.mxu0 0.0
    %2161 = vmatprep.subr.mxu0 0.0
    %2162 = vmatpush1.msra.mxu0 0.0
    %2163 = vmatprep.subr.mxu0 0.0
    %2164 = vmatpush1.msra.mxu0 0.0
    %2165 = vmatprep.subr.mxu0 0.0
    %2166 = vmatpush1.msra.mxu0 0.0
    %2167 = vmatprep.subr.mxu0 0.0
    %2168 = vmatpush1.msra.mxu0 0.0
    %2169 = vmatprep.subr.mxu0 0.0
    %2170 = vmatpush1.msra.mxu0 0.0
    %2171 = vmatprep.subr.mxu0 0.0
    %2172 = vmatpush1.msra.mxu0 0.0
    %2173 = vmatprep.subr.mxu0 0.0
    %2174 = vmatpush1.msra.mxu0 0.0
    %2175 = vmatprep.subr.mxu0 0.0
    %2176 = vmatpush1.msra.mxu0 0.0
    %2177 = vmatprep.subr.mxu0 0.0
    %2178 = vmatpush1.msra.mxu0 0.0
    %2179 = vmatprep.subr.mxu0 0.0
    %2180 = vmatpush1.msra.mxu0 0.0
    %2181 = vmatprep.subr.mxu0 0.0
    %2182 = vmatpush1.msra.mxu0 0.0
    %2183 = vmatprep.subr.mxu0 0.0
    %2184 = vmatpush1.msra.mxu0 0.0
    %2185 = vmatprep.subr.mxu0 0.0
    %2186 = vmatpush1.msra.mxu0 0.0
    %2187 = vmatprep.subr.mxu0 0.0
    %2188 = vmatpush1.msra.mxu0 0.0
    %2189 = vmatprep.subr.mxu0 0.0
    %2190 = vmatpush1.msra.mxu0 0.0
    %2191 = vmatprep.subr.mxu0 0.0
    %2192 = vmatpush1.msra.mxu0 0.0
    %2193 = vmatprep.subr.mxu0 0.0
    %2194 = vmatpush1.msra.mxu0 0.0
    %2195 = vmatprep.subr.mxu0 0.0
    %2196 = vmatpush1.msra.mxu0 0.0
    %2197 = vmatprep.subr.mxu0 0.0
    %2198 = vmatpush1.msra.mxu0 0.0
    %2199 = vmatprep.subr.mxu0 0.0
    %2200 = vmatpush1.msra.mxu0 0.0
    %2201 = vmatprep.subr.mxu0 0.0
    %2202 = vmatpush1.msra.mxu0 0.0
    %2203 = vmatprep.subr.mxu0 0.0
    %2204 = vmatpush1.msra.mxu0 0.0
    %2205 = vmatprep.subr.mxu0 0.0
    %2206 = vmatpush1.msra.mxu0 0.0
    %2207 = vmatprep.subr.mxu0 0.0
    %2208 = vmatpush1.msra.mxu0 0.0
    %2209 = vmatprep.subr.mxu0 0.0
    %2210 = vmatpush1.msra.mxu0 0.0
    %2211 = vmatprep.subr.mxu0 0.0
    %2212 = vmatpush1.msra.mxu0 0.0
    %2213 = vmatprep.subr.mxu0 0.0
    %2214 = vmatpush1.msra.mxu0 0.0
    %2215 = vmatprep.subr.mxu0 0.0
    %2216 = vmatpush1.msra.mxu0 0.0
    %2217 = vmatprep.subr.mxu0 0.0
    %2218 = vmatpush1.msra.mxu0 0.0
    %2219 = vmatprep.mubr.f32.mxu0 0.0
    %2220 = vmatmul.mubr.f32.gmra.mrb[0].mxu0 %v2150
    %v2221 = vpop.f32.mrb[0].mxu0
    %v2222 = vadd.f32 0.0, %v2221
    %v2223 = vpop.f32.mrb[0].mxu0
    %2224 = vmatprep.mubr.f32.mxu0 0.0
    %2225 = vmatmul.mubr.f32.gmra.mrb[0].mxu0 %v2153
    %v2226 = vpop.f32.mrb[0].mxu0
    %v2227 = vadd.f32 0.0, %v2226
    %v2228 = vpop.f32.mrb[0].mxu0
    %2229 = vdwg.mxu0
    %2232 = vrot.lane.b32.xlu0 %v1822, 8
    %v2233 = vpop.permute.xlu0 %2232
    %2234 = vrot.lane.b32.xlu0 %v1827, 8
    %v2235 = vpop.permute.xlu0 %2234
    %2240 = vrot.lane.b32.xlu0 %v2022, 16
    %v2241 = vpop.permute.xlu0 %2240
    %2242 = vrot.lane.b32.xlu0 %v2027, 16
    %v2243 = vpop.permute.xlu0 %2242
    %2248 = vrot.lane.b32.xlu0 %v2222, 24
    %v2249 = vpop.permute.xlu0 %2248
    %2250 = vrot.lane.b32.xlu0 %v2227, 24
    %v2251 = vpop.permute.xlu0 %2250
    %v2254 = vsel %vm373, %v1622, %v2233
    %v2255 = vsel %vm373, %v1627, %v2235
    %v2256 = vsel %vm457, %v2254, %v2241
    %v2257 = vsel %vm457, %v2255, %v2243
    %v2258 = vsel %vm1195, %v2256, %v2249
    %v2259 = vsel %vm1195, %v2257, %v2251
    %s2260 = scalar_lea.vmem %s10, 32
    %v2261 = vld [vmem:[%s2260] sm:$0xff]
    %v2262 = vld [vmem:[%s2260 + $0x8] sm:$0xff]
    %v2263 = vld [vmem:[%s2260 + $0x10] sm:$0xff]
    %v2264 = vld [vmem:[%s2260 + $0x18] sm:$0xff]
    %s2265 = scalar_lea.vmem %s11, 1
    %v2266 = vld [vmem:[%s2265] sm:$0x1]
    %v2268 = vlaneseq
    %v2269 = vshrl.u32 %v2268, 7
    %v2270 = vsub.s32 0, %v2269
    %v2271 = vrot.slane %v2266, %v2270
    %v2274 = vsel %vm193, %v2258, 0
    %v2277 = vsel %vm193, %v2259, 0
    %2279 = vmatprep.subr.mxu0 0.0
    %2280 = vmatpush1.msra.mxu0 %v2261
    %2281 = vmatprep.subr.mxu0 0.0
    %2282 = vmatpush1.msra.mxu0 %v2262
    %2283 = vmatprep.subr.mxu0 0.0
    %2284 = vmatpush1.msra.mxu0 %v2263
    %2285 = vmatprep.subr.mxu0 0.0
    %2286 = vmatpush1.msra.mxu0 %v2264
    %2287 = vmatprep.subr.mxu0 0.0
    %2288 = vmatpush1.msra.mxu0 0.0
    %2289 = vmatprep.subr.mxu0 0.0
    %2290 = vmatpush1.msra.mxu0 0.0
    %2291 = vmatprep.subr.mxu0 0.0
    %2292 = vmatpush1.msra.mxu0 0.0
    %2293 = vmatprep.subr.mxu0 0.0
    %2294 = vmatpush1.msra.mxu0 0.0
    %2295 = vmatprep.subr.mxu0 0.0
    %2296 = vmatpush1.msra.mxu0 0.0
    %2297 = vmatprep.subr.mxu0 0.0
    %2298 = vmatpush1.msra.mxu0 0.0
    %2299 = vmatprep.subr.mxu0 0.0
    %2300 = vmatpush1.msra.mxu0 0.0
    %2301 = vmatprep.subr.mxu0 0.0
    %2302 = vmatpush1.msra.mxu0 0.0
    %2303 = vmatprep.subr.mxu0 0.0
    %2304 = vmatpush1.msra.mxu0 0.0
    %2305 = vmatprep.subr.mxu0 0.0
    %2306 = vmatpush1.msra.mxu0 0.0
    %2307 = vmatprep.subr.mxu0 0.0
    %2308 = vmatpush1.msra.mxu0 0.0
    %2309 = vmatprep.subr.mxu0 0.0
    %2310 = vmatpush1.msra.mxu0 0.0
    %2311 = vmatprep.subr.mxu0 0.0
    %2312 = vmatpush1.msra.mxu0 0.0
    %2313 = vmatprep.subr.mxu0 0.0
    %2314 = vmatpush1.msra.mxu0 0.0
    %2315 = vmatprep.subr.mxu0 0.0
    %2316 = vmatpush1.msra.mxu0 0.0
    %2317 = vmatprep.subr.mxu0 0.0
    %2318 = vmatpush1.msra.mxu0 0.0
    %2319 = vmatprep.subr.mxu0 0.0
    %2320 = vmatpush1.msra.mxu0 0.0
    %2321 = vmatprep.subr.mxu0 0.0
    %2322 = vmatpush1.msra.mxu0 0.0
    %2323 = vmatprep.subr.mxu0 0.0
    %2324 = vmatpush1.msra.mxu0 0.0
    %2325 = vmatprep.subr.mxu0 0.0
    %2326 = vmatpush1.msra.mxu0 0.0
    %2327 = vmatprep.subr.mxu0 0.0
    %2328 = vmatpush1.msra.mxu0 0.0
    %2329 = vmatprep.subr.mxu0 0.0
    %2330 = vmatpush1.msra.mxu0 0.0
    %2331 = vmatprep.subr.mxu0 0.0
    %2332 = vmatpush1.msra.mxu0 0.0
    %2333 = vmatprep.subr.mxu0 0.0
    %2334 = vmatpush1.msra.mxu0 0.0
    %2335 = vmatprep.subr.mxu0 0.0
    %2336 = vmatpush1.msra.mxu0 0.0
    %2337 = vmatprep.subr.mxu0 0.0
    %2338 = vmatpush1.msra.mxu0 0.0
    %2339 = vmatprep.subr.mxu0 0.0
    %2340 = vmatpush1.msra.mxu0 0.0
    %2341 = vmatprep.subr.mxu0 0.0
    %2342 = vmatpush1.msra.mxu0 0.0
    %2343 = vmatprep.mubr.f32.mxu0 0.0
    %2344 = vmatmul.mubr.f32.gmra.mrb[0].mxu0 %v2274
    %v2345 = vpop.f32.mrb[0].mxu0
    %v2346 = vadd.f32 %v2271, %v2345
    %v2347 = vpop.f32.mrb[0].mxu0
    %2348 = vmatprep.mubr.f32.mxu0 0.0
    %2349 = vmatmul.mubr.f32.gmra.mrb[0].mxu0 %v2277
    %v2350 = vpop.f32.mrb[0].mxu0
    %v2351 = vadd.f32 %v2271, %v2350
    %v2352 = vpop.f32.mrb[0].mxu0
    %2353 = vdwg.mxu0
    %v2354 = vadd.f32 %v1340, %v2346
    %v2355 = vadd.f32 %v1341, %v2351
    %s2356 = scalar_lea.vmem %s16, 1
    %v2357 = vld [vmem:[%s2356] sm:$0x1]
    %s2358 = scalar_lea.vmem %s17, 1
    %v2359 = vld [vmem:[%s2358] sm:$0x1]
    %v2360 = vsel %vm193, %v2354, 0.0
    %2361 = vadd.xlane.f32.xlu0 %v2360
    %v2362 = vpop.xlane.xlu0 %2361
    %v2363 = vsel %vm193, %v2355, 0.0
    %2364 = vadd.xlane.f32.xlu0 %v2363
    %v2365 = vpop.xlane.xlu0 %2364
    %v2366 = vmul.f32 %v2354, %v2354
    %v2367 = vmul.f32 %v2355, %v2355
    %v2368 = vsel %vm193, %v2366, 0.0
    %2369 = vadd.xlane.f32.xlu0 %v2368
    %v2370 = vpop.xlane.xlu0 %2369
    %v2371 = vsel %vm193, %v2367, 0.0
    %2372 = vadd.xlane.f32.xlu0 %v2371
    %v2373 = vpop.xlane.xlu0 %2372
    %v2374 = vmul.f32 %v2362, 0.03125
    %v2375 = vmul.f32 %v2365, 0.03125
    %v2376 = vmul.f32 %v2370, 0.03125
    %v2377 = vmul.f32 %v2373, 0.03125
    %v2378 = vmul.f32 %v2374, %v2374
    %v2379 = vmul.f32 %v2375, %v2375
    %v2380 = vsub.f32 %v2376, %v2378
    %v2381 = vsub.f32 %v2377, %v2379
    %v2382 = vmax.f32 %v2380, 0.0
    %v2383 = vmax.f32 %v2381, 0.0
    %v2384 = vsub.f32 %v2354, %v2374
    %v2385 = vsub.f32 %v2355, %v2375
    %v2386 = vadd.f32 %v2382, 1e-05
    %v2387 = vadd.f32 %v2383, 1e-05
    %v2388 = vrsqrt.pop %v2386
    %v2389 = vrsqrt.pop %v2387
    %v2390 = vmul.f32 %v2384, %v2388
    %v2391 = vmul.f32 %v2385, %v2389
    %v2393 = vlaneseq
    %v2394 = vshrl.u32 %v2393, 7
    %v2395 = vsub.s32 0, %v2394
    %v2396 = vrot.slane %v2357, %v2395
    %v2398 = vmul.f32 %v2390, %v2396
    %v2399 = vmul.f32 %v2391, %v2396
    %v2401 = vlaneseq
    %v2402 = vshrl.u32 %v2401, 7
    %v2403 = vsub.s32 0, %v2402
    %v2404 = vrot.slane %v2359, %v2403
    %v2406 = vadd.f32 %v2398, %v2404
    %v2407 = vadd.f32 %v2399, %v2404
    %v2408 = vld [vmem:[#allocation10] sm:$0xff]
    %v2409 = vld [vmem:[#allocation10 + $0x8] sm:$0xff]
    %v2410 = vld [vmem:[#allocation10 + $0x10] sm:$0xff]
    %v2411 = vld [vmem:[#allocation10 + $0x18] sm:$0xff]
    %v2412 = vld [vmem:[#allocation11] sm:$0x1]
    %v2414 = vlaneseq
    %v2415 = vshrl.u32 %v2414, 7
    %v2416 = vsub.s32 0, %v2415
    %v2417 = vrot.slane %v2412, %v2416
    %v2420 = vsel %vm193, %v2406, 0
    %v2423 = vsel %vm193, %v2407, 0
    %2425 = vmatprep.subr.mxu0 0.0
    %2426 = vmatpush1.msra.mxu0 %v2408
    %2427 = vmatprep.subr.mxu0 0.0
    %2428 = vmatpush1.msra.mxu0 %v2409
    %2429 = vmatprep.subr.mxu0 0.0
    %2430 = vmatpush1.msra.mxu0 %v2410
    %2431 = vmatprep.subr.mxu0 0.0
    %2432 = vmatpush1.msra.mxu0 %v2411
    %2433 = vmatprep.subr.mxu0 0.0
    %2434 = vmatpush1.msra.mxu0 0.0
    %2435 = vmatprep.subr.mxu0 0.0
    %2436 = vmatpush1.msra.mxu0 0.0
    %2437 = vmatprep.subr.mxu0 0.0
    %2438 = vmatpush1.msra.mxu0 0.0
    %2439 = vmatprep.subr.mxu0 0.0
    %2440 = vmatpush1.msra.mxu0 0.0
    %2441 = vmatprep.subr.mxu0 0.0
    %2442 = vmatpush1.msra.mxu0 0.0
    %2443 = vmatprep.subr.mxu0 0.0
    %2444 = vmatpush1.msra.mxu0 0.0
    %2445 = vmatprep.subr.mxu0 0.0
    %2446 = vmatpush1.msra.mxu0 0.0
    %2447 = vmatprep.subr.mxu0 0.0
    %2448 = vmatpush1.msra.mxu0 0.0
    %2449 = vmatprep.subr.mxu0 0.0
    %2450 = vmatpush1.msra.mxu0 0.0
    %2451 = vmatprep.subr.mxu0 0.0
    %2452 = vmatpush1.msra.mxu0 0.0
    %2453 = vmatprep.subr.mxu0 0.0
    %2454 = vmatpush1.msra.mxu0 0.0
    %2455 = vmatprep.subr.mxu0 0.0
    %2456 = vmatpush1.msra.mxu0 0.0
    %2457 = vmatprep.subr.mxu0 0.0
    %2458 = vmatpush1.msra.mxu0 0.0
    %2459 = vmatprep.subr.mxu0 0.0
    %2460 = vmatpush1.msra.mxu0 0.0
    %2461 = vmatprep.subr.mxu0 0.0
    %2462 = vmatpush1.msra.mxu0 0.0
    %2463 = vmatprep.subr.mxu0 0.0
    %2464 = vmatpush1.msra.mxu0 0.0
    %2465 = vmatprep.subr.mxu0 0.0
    %2466 = vmatpush1.msra.mxu0 0.0
    %2467 = vmatprep.subr.mxu0 0.0
    %2468 = vmatpush1.msra.mxu0 0.0
    %2469 = vmatprep.subr.mxu0 0.0
    %2470 = vmatpush1.msra.mxu0 0.0
    %2471 = vmatprep.subr.mxu0 0.0
    %2472 = vmatpush1.msra.mxu0 0.0
    %2473 = vmatprep.subr.mxu0 0.0
    %2474 = vmatpush1.msra.mxu0 0.0
    %2475 = vmatprep.subr.mxu0 0.0
    %2476 = vmatpush1.msra.mxu0 0.0
    %2477 = vmatprep.subr.mxu0 0.0
    %2478 = vmatpush1.msra.mxu0 0.0
    %2479 = vmatprep.subr.mxu0 0.0
    %2480 = vmatpush1.msra.mxu0 0.0
    %2481 = vmatprep.subr.mxu0 0.0
    %2482 = vmatpush1.msra.mxu0 0.0
    %2483 = vmatprep.subr.mxu0 0.0
    %2484 = vmatpush1.msra.mxu0 0.0
    %2485 = vmatprep.subr.mxu0 0.0
    %2486 = vmatpush1.msra.mxu0 0.0
    %2487 = vmatprep.subr.mxu0 0.0
    %2488 = vmatpush1.msra.mxu0 0.0
    %2489 = vmatprep.mubr.f32.mxu0 0.0
    %2490 = vmatmul.mubr.f32.gmra.mrb[0].mxu0 %v2420
    %v2491 = vpop.f32.mrb[0].mxu0
    %v2492 = vadd.f32 %v2417, %v2491
    %v2493 = vpop.f32.mrb[0].mxu0
    %2494 = vmatprep.mubr.f32.mxu0 0.0
    %2495 = vmatmul.mubr.f32.gmra.mrb[0].mxu0 %v2423
    %v2496 = vpop.f32.mrb[0].mxu0
    %v2497 = vadd.f32 %v2417, %v2496
    %v2498 = vpop.f32.mrb[0].mxu0
    %2499 = vdwg.mxu0
    %v2500 = vmax.f32 %v2492, 0.0
    %v2501 = vmax.f32 %v2497, 0.0
    %v2502 = vld [vmem:[%s14] sm:$0xff]
    %v2503 = vld [vmem:[%s14 + $0x8] sm:$0xff]
    %v2504 = vld [vmem:[%s14 + $0x10] sm:$0xff]
    %v2505 = vld [vmem:[%s14 + $0x18] sm:$0xff]
    %v2506 = vld [vmem:[%s14 + $0x20] sm:$0xff]
    %v2507 = vld [vmem:[%s14 + $0x28] sm:$0xff]
    %v2508 = vld [vmem:[%s14 + $0x30] sm:$0xff]
    %v2509 = vld [vmem:[%s14 + $0x38] sm:$0xff]
    %v2510 = vld [vmem:[#allocation13] sm:$0x1]
    %v2512 = vlaneseq
    %v2513 = vshrl.u32 %v2512, 7
    %v2514 = vsub.s32 0, %v2513
    %v2515 = vrot.slane %v2510, %v2514
    %vm2517 = vcmask 523264
    %v2519 = vsel %vm2517, %v2500, 0
    %v2522 = vsel %vm2517, %v2501, 0
    %2524 = vmatprep.subr.mxu0 0.0
    %2525 = vmatpush1.msra.mxu0 %v2502
    %2526 = vmatprep.subr.mxu0 0.0
    %2527 = vmatpush1.msra.mxu0 %v2503
    %2528 = vmatprep.subr.mxu0 0.0
    %2529 = vmatpush1.msra.mxu0 %v2504
    %2530 = vmatprep.subr.mxu0 0.0
    %2531 = vmatpush1.msra.mxu0 %v2505
    %2532 = vmatprep.subr.mxu0 0.0
    %2533 = vmatpush1.msra.mxu0 %v2506
    %2534 = vmatprep.subr.mxu0 0.0
    %2535 = vmatpush1.msra.mxu0 %v2507
    %2536 = vmatprep.subr.mxu0 0.0
    %2537 = vmatpush1.msra.mxu0 %v2508
    %2538 = vmatprep.subr.mxu0 0.0
    %2539 = vmatpush1.msra.mxu0 %v2509
    %2540 = vmatprep.subr.mxu0 0.0
    %2541 = vmatpush1.msra.mxu0 0.0
    %2542 = vmatprep.subr.mxu0 0.0
    %2543 = vmatpush1.msra.mxu0 0.0
    %2544 = vmatprep.subr.mxu0 0.0
    %2545 = vmatpush1.msra.mxu0 0.0
    %2546 = vmatprep.subr.mxu0 0.0
    %2547 = vmatpush1.msra.mxu0 0.0
    %2548 = vmatprep.subr.mxu0 0.0
    %2549 = vmatpush1.msra.mxu0 0.0
    %2550 = vmatprep.subr.mxu0 0.0
    %2551 = vmatpush1.msra.mxu0 0.0
    %2552 = vmatprep.subr.mxu0 0.0
    %2553 = vmatpush1.msra.mxu0 0.0
    %2554 = vmatprep.subr.mxu0 0.0
    %2555 = vmatpush1.msra.mxu0 0.0
    %2556 = vmatprep.subr.mxu0 0.0
    %2557 = vmatpush1.msra.mxu0 0.0
    %2558 = vmatprep.subr.mxu0 0.0
    %2559 = vmatpush1.msra.mxu0 0.0
    %2560 = vmatprep.subr.mxu0 0.0
    %2561 = vmatpush1.msra.mxu0 0.0
    %2562 = vmatprep.subr.mxu0 0.0
    %2563 = vmatpush1.msra.mxu0 0.0
    %2564 = vmatprep.subr.mxu0 0.0
    %2565 = vmatpush1.msra.mxu0 0.0
    %2566 = vmatprep.subr.mxu0 0.0
    %2567 = vmatpush1.msra.mxu0 0.0
    %2568 = vmatprep.subr.mxu0 0.0
    %2569 = vmatpush1.msra.mxu0 0.0
    %2570 = vmatprep.subr.mxu0 0.0
    %2571 = vmatpush1.msra.mxu0 0.0
    %2572 = vmatprep.subr.mxu0 0.0
    %2573 = vmatpush1.msra.mxu0 0.0
    %2574 = vmatprep.subr.mxu0 0.0
    %2575 = vmatpush1.msra.mxu0 0.0
    %2576 = vmatprep.subr.mxu0 0.0
    %2577 = vmatpush1.msra.mxu0 0.0
    %2578 = vmatprep.subr.mxu0 0.0
    %2579 = vmatpush1.msra.mxu0 0.0
    %2580 = vmatprep.subr.mxu0 0.0
    %2581 = vmatpush1.msra.mxu0 0.0
    %2582 = vmatprep.subr.mxu0 0.0
    %2583 = vmatpush1.msra.mxu0 0.0
    %2584 = vmatprep.subr.mxu0 0.0
    %2585 = vmatpush1.msra.mxu0 0.0
    %2586 = vmatprep.subr.mxu0 0.0
    %2587 = vmatpush1.msra.mxu0 0.0
    %2588 = vmatprep.mubr.f32.mxu0 0.0
    %2589 = vmatmul.mubr.f32.gmra.mrb[0].mxu0 %v2519
    %v2590 = vpop.f32.mrb[0].mxu0
    %v2591 = vadd.f32 %v2515, %v2590
    %v2592 = vpop.f32.mrb[0].mxu0
    %2593 = vmatprep.mubr.f32.mxu0 0.0
    %2594 = vmatmul.mubr.f32.gmra.mrb[0].mxu0 %v2522
    %v2595 = vpop.f32.mrb[0].mxu0
    %v2596 = vadd.f32 %v2515, %v2595
    %v2597 = vpop.f32.mrb[0].mxu0
    %2598 = vdwg.mxu0
    %v2599 = vadd.f32 %v2406, %v2591
    %v2600 = vadd.f32 %v2407, %v2596
    %s2601 = scalar_lea.vmem %s16, 2
    %v2602 = vld [vmem:[%s2601] sm:$0x1]
    %s2603 = scalar_lea.vmem %s17, 2
    %v2604 = vld [vmem:[%s2603] sm:$0x1]
    %v2605 = vsel %vm193, %v2599, 0.0
    %2606 = vadd.xlane.f32.xlu0 %v2605
    %v2607 = vpop.xlane.xlu0 %2606
    %v2608 = vsel %vm193, %v2600, 0.0
    %2609 = vadd.xlane.f32.xlu0 %v2608
    %v2610 = vpop.xlane.xlu0 %2609
    %v2611 = vmul.f32 %v2599, %v2599
    %v2612 = vmul.f32 %v2600, %v2600
    %v2613 = vsel %vm193, %v2611, 0.0
    %2614 = vadd.xlane.f32.xlu0 %v2613
    %v2615 = vpop.xlane.xlu0 %2614
    %v2616 = vsel %vm193, %v2612, 0.0
    %2617 = vadd.xlane.f32.xlu0 %v2616
    %v2618 = vpop.xlane.xlu0 %2617
    %v2619 = vmul.f32 %v2607, 0.03125
    %v2620 = vmul.f32 %v2610, 0.03125
    %v2621 = vmul.f32 %v2615, 0.03125
    %v2622 = vmul.f32 %v2618, 0.03125
    %v2623 = vmul.f32 %v2619, %v2619
    %v2624 = vmul.f32 %v2620, %v2620
    %v2625 = vsub.f32 %v2621, %v2623
    %v2626 = vsub.f32 %v2622, %v2624
    %v2627 = vmax.f32 %v2625, 0.0
    %v2628 = vmax.f32 %v2626, 0.0
    %v2629 = vsub.f32 %v2599, %v2619
    %v2630 = vsub.f32 %v2600, %v2620
    %v2631 = vadd.f32 %v2627, 1e-05
    %v2632 = vadd.f32 %v2628, 1e-05
    %v2633 = vrsqrt.pop %v2631
    %v2634 = vrsqrt.pop %v2632
    %v2635 = vmul.f32 %v2629, %v2633
    %v2636 = vmul.f32 %v2630, %v2634
    %v2638 = vlaneseq
    %v2639 = vshrl.u32 %v2638, 7
    %v2640 = vsub.s32 0, %v2639
    %v2641 = vrot.slane %v2602, %v2640
    %v2643 = vmul.f32 %v2635, %v2641
    %v2644 = vmul.f32 %v2636, %v2641
    %v2646 = vlaneseq
    %v2647 = vshrl.u32 %v2646, 7
    %v2648 = vsub.s32 0, %v2647
    %v2649 = vrot.slane %v2604, %v2648
    %v2651 = vadd.f32 %v2643, %v2649
    %v2652 = vadd.f32 %v2644, %v2649
    %s2653 = scalar_lea.vmem %s4, 32
    %v2654 = vld [vmem:[%s2653] sm:$0xff]
    %v2655 = vld [vmem:[%s2653 + $0x8] sm:$0xff]
    %v2656 = vld [vmem:[%s2653 + $0x10] sm:$0xff]
    %v2657 = vld [vmem:[%s2653 + $0x18] sm:$0xff]
    %s2658 = scalar_lea.vmem [#allocation5], 1
    %v2659 = vld [vmem:[%s2658] sm:$0x1]
    %v2661 = vlaneseq
    %v2662 = vshrl.u32 %v2661, 7
    %v2663 = vsub.s32 0, %v2662
    %v2664 = vrot.slane %v2659, %v2663
    %v2667 = vsel %vm193, %v2651, 0
    %v2670 = vsel %vm193, %v2652, 0
    %2672 = vmatprep.subr.mxu0 0.0
    %2673 = vmatpush1.msra.mxu0 %v2654
    %2674 = vmatprep.subr.mxu0 0.0
    %2675 = vmatpush1.msra.mxu0 %v2655
    %2676 = vmatprep.subr.mxu0 0.0
    %2677 = vmatpush1.msra.mxu0 %v2656
    %2678 = vmatprep.subr.mxu0 0.0
    %2679 = vmatpush1.msra.mxu0 %v2657
    %2680 = vmatprep.subr.mxu0 0.0
    %2681 = vmatpush1.msra.mxu0 0.0
    %2682 = vmatprep.subr.mxu0 0.0
    %2683 = vmatpush1.msra.mxu0 0.0
    %2684 = vmatprep.subr.mxu0 0.0
    %2685 = vmatpush1.msra.mxu0 0.0
    %2686 = vmatprep.subr.mxu0 0.0
    %2687 = vmatpush1.msra.mxu0 0.0
    %2688 = vmatprep.subr.mxu0 0.0
    %2689 = vmatpush1.msra.mxu0 0.0
    %2690 = vmatprep.subr.mxu0 0.0
    %2691 = vmatpush1.msra.mxu0 0.0
    %2692 = vmatprep.subr.mxu0 0.0
    %2693 = vmatpush1.msra.mxu0 0.0
    %2694 = vmatprep.subr.mxu0 0.0
    %2695 = vmatpush1.msra.mxu0 0.0
    %2696 = vmatprep.subr.mxu0 0.0
    %2697 = vmatpush1.msra.mxu0 0.0
    %2698 = vmatprep.subr.mxu0 0.0
    %2699 = vmatpush1.msra.mxu0 0.0
    %2700 = vmatprep.subr.mxu0 0.0
    %2701 = vmatpush1.msra.mxu0 0.0
    %2702 = vmatprep.subr.mxu0 0.0
    %2703 = vmatpush1.msra.mxu0 0.0
    %2704 = vmatprep.subr.mxu0 0.0
    %2705 = vmatpush1.msra.mxu0 0.0
    %2706 = vmatprep.subr.mxu0 0.0
    %2707 = vmatpush1.msra.mxu0 0.0
    %2708 = vmatprep.subr.mxu0 0.0
    %2709 = vmatpush1.msra.mxu0 0.0
    %2710 = vmatprep.subr.mxu0 0.0
    %2711 = vmatpush1.msra.mxu0 0.0
    %2712 = vmatprep.subr.mxu0 0.0
    %2713 = vmatpush1.msra.mxu0 0.0
    %2714 = vmatprep.subr.mxu0 0.0
    %2715 = vmatpush1.msra.mxu0 0.0
    %2716 = vmatprep.subr.mxu0 0.0
    %2717 = vmatpush1.msra.mxu0 0.0
    %2718 = vmatprep.subr.mxu0 0.0
    %2719 = vmatpush1.msra.mxu0 0.0
    %2720 = vmatprep.subr.mxu0 0.0
    %2721 = vmatpush1.msra.mxu0 0.0
    %2722 = vmatprep.subr.mxu0 0.0
    %2723 = vmatpush1.msra.mxu0 0.0
    %2724 = vmatprep.subr.mxu0 0.0
    %2725 = vmatpush1.msra.mxu0 0.0
    %2726 = vmatprep.subr.mxu0 0.0
    %2727 = vmatpush1.msra.mxu0 0.0
    %2728 = vmatprep.subr.mxu0 0.0
    %2729 = vmatpush1.msra.mxu0 0.0
    %2730 = vmatprep.subr.mxu0 0.0
    %2731 = vmatpush1.msra.mxu0 0.0
    %2732 = vmatprep.subr.mxu0 0.0
    %2733 = vmatpush1.msra.mxu0 0.0
    %2734 = vmatprep.subr.mxu0 0.0
    %2735 = vmatpush1.msra.mxu0 0.0
    %2736 = vmatprep.mubr.f32.mxu0 0.0
    %2737 = vmatmul.mubr.f32.gmra.mrb[0].mxu0 %v2667
    %v2738 = vpop.f32.mrb[0].mxu0
    %v2739 = vadd.f32 %v2664, %v2738
    %v2740 = vpop.f32.mrb[0].mxu0
    %2741 = vmatprep.mubr.f32.mxu0 0.0
    %2742 = vmatmul.mubr.f32.gmra.mrb[0].mxu0 %v2670
    %v2743 = vpop.f32.mrb[0].mxu0
    %v2744 = vadd.f32 %v2664, %v2743
    %v2745 = vpop.f32.mrb[0].mxu0
    %2746 = vdwg.mxu0
    %2749 = vrot.lane.b32.xlu0 %v2739, 96
    %v2750 = vpop.permute.xlu0 %2749
    %2751 = vrot.lane.b32.xlu0 %v2744, 96
    %v2752 = vpop.permute.xlu0 %2751
    %v2753 = vsel %vm373, %v2739, 0
    %v2755 = vsel %vm373, %v2744, 0
    %v2757 = vsel %vm373, %v2750, 0
    %v2759 = vsel %vm373, %v2752, 0
    %2761 = vmatprep.subr.mxu0 0.0
    %2762 = vmatpush1.xpose.msra.mxu0 %v2757
    %2763 = vmatprep.subr.mxu0 0.0
    %2764 = vmatpush1.xpose.msra.mxu0 %v2759
    %2765 = vmatprep.subr.mxu0 0.0
    %2766 = vmatpush1.xpose.msra.mxu0 0.0
    %2767 = vmatprep.subr.mxu0 0.0
    %2768 = vmatpush1.xpose.msra.mxu0 0.0
    %2769 = vmatprep.subr.mxu0 0.0
    %2770 = vmatpush1.xpose.msra.mxu0 0.0
    %2771 = vmatprep.subr.mxu0 0.0
    %2772 = vmatpush1.xpose.msra.mxu0 0.0
    %2773 = vmatprep.subr.mxu0 0.0
    %2774 = vmatpush1.xpose.msra.mxu0 0.0
    %2775 = vmatprep.subr.mxu0 0.0
    %2776 = vmatpush1.xpose.msra.mxu0 0.0
    %2777 = vmatprep.subr.mxu0 0.0
    %2778 = vmatpush1.xpose.msra.mxu0 0.0
    %2779 = vmatprep.subr.mxu0 0.0
    %2780 = vmatpush1.xpose.msra.mxu0 0.0
    %2781 = vmatprep.subr.mxu0 0.0
    %2782 = vmatpush1.xpose.msra.mxu0 0.0
    %2783 = vmatprep.subr.mxu0 0.0
    %2784 = vmatpush1.xpose.msra.mxu0 0.0
    %2785 = vmatprep.subr.mxu0 0.0
    %2786 = vmatpush1.xpose.msra.mxu0 0.0
    %2787 = vmatprep.subr.mxu0 0.0
    %2788 = vmatpush1.xpose.msra.mxu0 0.0
    %2789 = vmatprep.subr.mxu0 0.0
    %2790 = vmatpush1.xpose.msra.mxu0 0.0
    %2791 = vmatprep.subr.mxu0 0.0
    %2792 = vmatpush1.xpose.msra.mxu0 0.0
    %2793 = vmatprep.subr.mxu0 0.0
    %2794 = vmatpush1.xpose.msra.mxu0 0.0
    %2795 = vmatprep.subr.mxu0 0.0
    %2796 = vmatpush1.xpose.msra.mxu0 0.0
    %2797 = vmatprep.subr.mxu0 0.0
    %2798 = vmatpush1.xpose.msra.mxu0 0.0
    %2799 = vmatprep.subr.mxu0 0.0
    %2800 = vmatpush1.xpose.msra.mxu0 0.0
    %2801 = vmatprep.subr.mxu0 0.0
    %2802 = vmatpush1.xpose.msra.mxu0 0.0
    %2803 = vmatprep.subr.mxu0 0.0
    %2804 = vmatpush1.xpose.msra.mxu0 0.0
    %2805 = vmatprep.subr.mxu0 0.0
    %2806 = vmatpush1.xpose.msra.mxu0 0.0
    %2807 = vmatprep.subr.mxu0 0.0
    %2808 = vmatpush1.xpose.msra.mxu0 0.0
    %2809 = vmatprep.subr.mxu0 0.0
    %2810 = vmatpush1.xpose.msra.mxu0 0.0
    %2811 = vmatprep.subr.mxu0 0.0
    %2812 = vmatpush1.xpose.msra.mxu0 0.0
    %2813 = vmatprep.subr.mxu0 0.0
    %2814 = vmatpush1.xpose.msra.mxu0 0.0
    %2815 = vmatprep.subr.mxu0 0.0
    %2816 = vmatpush1.xpose.msra.mxu0 0.0
    %2817 = vmatprep.subr.mxu0 0.0
    %2818 = vmatpush1.xpose.msra.mxu0 0.0
    %2819 = vmatprep.subr.mxu0 0.0
    %2820 = vmatpush1.xpose.msra.mxu0 0.0
    %2821 = vmatprep.subr.mxu0 0.0
    %2822 = vmatpush1.xpose.msra.mxu0 0.0
    %2823 = vmatprep.subr.mxu0 0.0
    %2824 = vmatpush1.xpose.msra.mxu0 0.0
    %2825 = vmatprep.mubr.f32.mxu0 0.0
    %2826 = vmatmul.mubr.f32.gmra.mrb[0].mxu0 %v2753
    %v2827 = vpop.f32.mrb[0].mxu0
    %v2828 = vadd.f32 %v178, %v2827
    %v2829 = vpop.f32.mrb[0].mxu0
    %2830 = vmatprep.mubr.f32.mxu0 0.0
    %2831 = vmatmul.mubr.f32.gmra.mrb[0].mxu0 %v2755
    %v2832 = vpop.f32.mrb[0].mxu0
    %v2833 = vadd.f32 %v179, %v2832
    %v2834 = vpop.f32.mrb[0].mxu0
    %2835 = vdwg.mxu0
    %v2836 = vsel %vm457, %v2828, -inf
    %2837 = vmax.xlane.f32.xlu0 %v2836
    %v2838 = vpop.xlane.xlu0 %2837
    %v2839 = vsel %vm457, %v2833, -inf
    %2840 = vmax.xlane.f32.xlu0 %v2839
    %v2841 = vpop.xlane.xlu0 %2840
    %v2842 = vsub.f32 %v2828, %v2838
    %v2843 = vsub.f32 %v2833, %v2841
    %v2844 = vmul.f32 %v2842, 1.442695
    %v2845 = vpow.pop %v2844
    %v2846 = vmul.f32 %v2843, 1.442695
    %v2847 = vpow.pop %v2846
    %v2848 = vsel %vm457, %v2845, 0.0
    %2849 = vadd.xlane.f32.xlu0 %v2848
    %v2850 = vpop.xlane.xlu0 %2849
    %v2851 = vsel %vm457, %v2847, 0.0
    %2852 = vadd.xlane.f32.xlu0 %v2851
    %v2853 = vpop.xlane.xlu0 %2852
    %v2854 = vrcp.pop %v2850
    %v2855 = vrcp.pop %v2853
    %v2856 = vmul.f32 %v2845, %v2854
    %v2857 = vmul.f32 %v2847, %v2855
    %2858 = vrot.lane.b32.xlu0 %v2739, 64
    %v2859 = vpop.permute.xlu0 %2858
    %2860 = vrot.lane.b32.xlu0 %v2744, 64
    %v2861 = vpop.permute.xlu0 %2860
    %v2865 = vsel %vm457, %v2856, 0
    %v2868 = vsel %vm457, %v2857, 0
    %2870 = vmatprep.subr.mxu0 0.0
    %2871 = vmatpush1.msra.mxu0 %v2859
    %2872 = vmatprep.subr.mxu0 0.0
    %2873 = vmatpush1.msra.mxu0 %v2861
    %2874 = vmatprep.subr.mxu0 0.0
    %2875 = vmatpush1.msra.mxu0 0.0
    %2876 = vmatprep.subr.mxu0 0.0
    %2877 = vmatpush1.msra.mxu0 0.0
    %2878 = vmatprep.subr.mxu0 0.0
    %2879 = vmatpush1.msra.mxu0 0.0
    %2880 = vmatprep.subr.mxu0 0.0
    %2881 = vmatpush1.msra.mxu0 0.0
    %2882 = vmatprep.subr.mxu0 0.0
    %2883 = vmatpush1.msra.mxu0 0.0
    %2884 = vmatprep.subr.mxu0 0.0
    %2885 = vmatpush1.msra.mxu0 0.0
    %2886 = vmatprep.subr.mxu0 0.0
    %2887 = vmatpush1.msra.mxu0 0.0
    %2888 = vmatprep.subr.mxu0 0.0
    %2889 = vmatpush1.msra.mxu0 0.0
    %2890 = vmatprep.subr.mxu0 0.0
    %2891 = vmatpush1.msra.mxu0 0.0
    %2892 = vmatprep.subr.mxu0 0.0
    %2893 = vmatpush1.msra.mxu0 0.0
    %2894 = vmatprep.subr.mxu0 0.0
    %2895 = vmatpush1.msra.mxu0 0.0
    %2896 = vmatprep.subr.mxu0 0.0
    %2897 = vmatpush1.msra.mxu0 0.0
    %2898 = vmatprep.subr.mxu0 0.0
    %2899 = vmatpush1.msra.mxu0 0.0
    %2900 = vmatprep.subr.mxu0 0.0
    %2901 = vmatpush1.msra.mxu0 0.0
    %2902 = vmatprep.subr.mxu0 0.0
    %2903 = vmatpush1.msra.mxu0 0.0
    %2904 = vmatprep.subr.mxu0 0.0
    %2905 = vmatpush1.msra.mxu0 0.0
    %2906 = vmatprep.subr.mxu0 0.0
    %2907 = vmatpush1.msra.mxu0 0.0
    %2908 = vmatprep.subr.mxu0 0.0
    %2909 = vmatpush1.msra.mxu0 0.0
    %2910 = vmatprep.subr.mxu0 0.0
    %2911 = vmatpush1.msra.mxu0 0.0
    %2912 = vmatprep.subr.mxu0 0.0
    %2913 = vmatpush1.msra.mxu0 0.0
    %2914 = vmatprep.subr.mxu0 0.0
    %2915 = vmatpush1.msra.mxu0 0.0
    %2916 = vmatprep.subr.mxu0 0.0
    %2917 = vmatpush1.msra.mxu0 0.0
    %2918 = vmatprep.subr.mxu0 0.0
    %2919 = vmatpush1.msra.mxu0 0.0
    %2920 = vmatprep.subr.mxu0 0.0
    %2921 = vmatpush1.msra.mxu0 0.0
    %2922 = vmatprep.subr.mxu0 0.0
    %2923 = vmatpush1.msra.mxu0 0.0
    %2924 = vmatprep.subr.mxu0 0.0
    %2925 = vmatpush1.msra.mxu0 0.0
    %2926 = vmatprep.subr.mxu0 0.0
    %2927 = vmatpush1.msra.mxu0 0.0
    %2928 = vmatprep.subr.mxu0 0.0
    %2929 = vmatpush1.msra.mxu0 0.0
    %2930 = vmatprep.subr.mxu0 0.0
    %2931 = vmatpush1.msra.mxu0 0.0
    %2932 = vmatprep.subr.mxu0 0.0
    %2933 = vmatpush1.msra.mxu0 0.0
    %2934 = vmatprep.mubr.f32.mxu0 0.0
    %2935 = vmatmul.mubr.f32.gmra.mrb[0].mxu0 %v2865
    %v2936 = vpop.f32.mrb[0].mxu0
    %v2937 = vadd.f32 0.0, %v2936
    %v2938 = vpop.f32.mrb[0].mxu0
    %2939 = vmatprep.mubr.f32.mxu0 0.0
    %2940 = vmatmul.mubr.f32.gmra.mrb[0].mxu0 %v2868
    %v2941 = vpop.f32.mrb[0].mxu0
    %v2942 = vadd.f32 0.0, %v2941
    %v2943 = vpop.f32.mrb[0].mxu0
    %2944 = vdwg.mxu0
    %2945 = vrot.lane.b32.xlu0 %v2739, 120
    %v2946 = vpop.permute.xlu0 %2945
    %2947 = vrot.lane.b32.xlu0 %v2744, 120
    %v2948 = vpop.permute.xlu0 %2947
    %2949 = vrot.lane.b32.xlu0 %v2739, 88
    %v2950 = vpop.permute.xlu0 %2949
    %2951 = vrot.lane.b32.xlu0 %v2744, 88
    %v2952 = vpop.permute.xlu0 %2951
    %v2953 = vsel %vm373, %v2946, 0
    %v2955 = vsel %vm373, %v2948, 0
    %v2957 = vsel %vm373, %v2950, 0
    %v2959 = vsel %vm373, %v2952, 0
    %2961 = vmatprep.subr.mxu0 0.0
    %2962 = vmatpush1.xpose.msra.mxu0 %v2957
    %2963 = vmatprep.subr.mxu0 0.0
    %2964 = vmatpush1.xpose.msra.mxu0 %v2959
    %2965 = vmatprep.subr.mxu0 0.0
    %2966 = vmatpush1.xpose.msra.mxu0 0.0
    %2967 = vmatprep.subr.mxu0 0.0
    %2968 = vmatpush1.xpose.msra.mxu0 0.0
    %2969 = vmatprep.subr.mxu0 0.0
    %2970 = vmatpush1.xpose.msra.mxu0 0.0
    %2971 = vmatprep.subr.mxu0 0.0
    %2972 = vmatpush1.xpose.msra.mxu0 0.0
    %2973 = vmatprep.subr.mxu0 0.0
    %2974 = vmatpush1.xpose.msra.mxu0 0.0
    %2975 = vmatprep.subr.mxu0 0.0
    %2976 = vmatpush1.xpose.msra.mxu0 0.0
    %2977 = vmatprep.subr.mxu0 0.0
    %2978 = vmatpush1.xpose.msra.mxu0 0.0
    %2979 = vmatprep.subr.mxu0 0.0
    %2980 = vmatpush1.xpose.msra.mxu0 0.0
    %2981 = vmatprep.subr.mxu0 0.0
    %2982 = vmatpush1.xpose.msra.mxu0 0.0
    %2983 = vmatprep.subr.mxu0 0.0
    %2984 = vmatpush1.xpose.msra.mxu0 0.0
    %2985 = vmatprep.subr.mxu0 0.0
    %2986 = vmatpush1.xpose.msra.mxu0 0.0
    %2987 = vmatprep.subr.mxu0 0.0
    %2988 = vmatpush1.xpose.msra.mxu0 0.0
    %2989 = vmatprep.subr.mxu0 0.0
    %2990 = vmatpush1.xpose.msra.mxu0 0.0
    %2991 = vmatprep.subr.mxu0 0.0
    %2992 = vmatpush1.xpose.msra.mxu0 0.0
    %2993 = vmatprep.subr.mxu0 0.0
    %2994 = vmatpush1.xpose.msra.mxu0 0.0
    %2995 = vmatprep.subr.mxu0 0.0
    %2996 = vmatpush1.xpose.msra.mxu0 0.0
    %2997 = vmatprep.subr.mxu0 0.0
    %2998 = vmatpush1.xpose.msra.mxu0 0.0
    %2999 = vmatprep.subr.mxu0 0.0
    %3000 = vmatpush1.xpose.msra.mxu0 0.0
    %3001 = vmatprep.subr.mxu0 0.0
    %3002 = vmatpush1.xpose.msra.mxu0 0.0
    %3003 = vmatprep.subr.mxu0 0.0
    %3004 = vmatpush1.xpose.msra.mxu0 0.0
    %3005 = vmatprep.subr.mxu0 0.0
    %3006 = vmatpush1.xpose.msra.mxu0 0.0
    %3007 = vmatprep.subr.mxu0 0.0
    %3008 = vmatpush1.xpose.msra.mxu0 0.0
    %3009 = vmatprep.subr.mxu0 0.0
    %3010 = vmatpush1.xpose.msra.mxu0 0.0
    %3011 = vmatprep.subr.mxu0 0.0
    %3012 = vmatpush1.xpose.msra.mxu0 0.0
    %3013 = vmatprep.subr.mxu0 0.0
    %3014 = vmatpush1.xpose.msra.mxu0 0.0
    %3015 = vmatprep.subr.mxu0 0.0
    %3016 = vmatpush1.xpose.msra.mxu0 0.0
    %3017 = vmatprep.subr.mxu0 0.0
    %3018 = vmatpush1.xpose.msra.mxu0 0.0
    %3019 = vmatprep.subr.mxu0 0.0
    %3020 = vmatpush1.xpose.msra.mxu0 0.0
    %3021 = vmatprep.subr.mxu0 0.0
    %3022 = vmatpush1.xpose.msra.mxu0 0.0
    %3023 = vmatprep.subr.mxu0 0.0
    %3024 = vmatpush1.xpose.msra.mxu0 0.0
    %3025 = vmatprep.mubr.f32.mxu0 0.0
    %3026 = vmatmul.mubr.f32.gmra.mrb[0].mxu0 %v2953
    %v3027 = vpop.f32.mrb[0].mxu0
    %v3028 = vadd.f32 %v178, %v3027
    %v3029 = vpop.f32.mrb[0].mxu0
    %3030 = vmatprep.mubr.f32.mxu0 0.0
    %3031 = vmatmul.mubr.f32.gmra.mrb[0].mxu0 %v2955
    %v3032 = vpop.f32.mrb[0].mxu0
    %v3033 = vadd.f32 %v179, %v3032
    %v3034 = vpop.f32.mrb[0].mxu0
    %3035 = vdwg.mxu0
    %v3036 = vsel %vm457, %v3028, -inf
    %3037 = vmax.xlane.f32.xlu0 %v3036
    %v3038 = vpop.xlane.xlu0 %3037
    %v3039 = vsel %vm457, %v3033, -inf
    %3040 = vmax.xlane.f32.xlu0 %v3039
    %v3041 = vpop.xlane.xlu0 %3040
    %v3042 = vsub.f32 %v3028, %v3038
    %v3043 = vsub.f32 %v3033, %v3041
    %v3044 = vmul.f32 %v3042, 1.442695
    %v3045 = vpow.pop %v3044
    %v3046 = vmul.f32 %v3043, 1.442695
    %v3047 = vpow.pop %v3046
    %v3048 = vsel %vm457, %v3045, 0.0
    %3049 = vadd.xlane.f32.xlu0 %v3048
    %v3050 = vpop.xlane.xlu0 %3049
    %v3051 = vsel %vm457, %v3047, 0.0
    %3052 = vadd.xlane.f32.xlu0 %v3051
    %v3053 = vpop.xlane.xlu0 %3052
    %v3054 = vrcp.pop %v3050
    %v3055 = vrcp.pop %v3053
    %v3056 = vmul.f32 %v3045, %v3054
    %v3057 = vmul.f32 %v3047, %v3055
    %3058 = vrot.lane.b32.xlu0 %v2739, 56
    %v3059 = vpop.permute.xlu0 %3058
    %3060 = vrot.lane.b32.xlu0 %v2744, 56
    %v3061 = vpop.permute.xlu0 %3060
    %v3065 = vsel %vm457, %v3056, 0
    %v3068 = vsel %vm457, %v3057, 0
    %3070 = vmatprep.subr.mxu0 0.0
    %3071 = vmatpush1.msra.mxu0 %v3059
    %3072 = vmatprep.subr.mxu0 0.0
    %3073 = vmatpush1.msra.mxu0 %v3061
    %3074 = vmatprep.subr.mxu0 0.0
    %3075 = vmatpush1.msra.mxu0 0.0
    %3076 = vmatprep.subr.mxu0 0.0
    %3077 = vmatpush1.msra.mxu0 0.0
    %3078 = vmatprep.subr.mxu0 0.0
    %3079 = vmatpush1.msra.mxu0 0.0
    %3080 = vmatprep.subr.mxu0 0.0
    %3081 = vmatpush1.msra.mxu0 0.0
    %3082 = vmatprep.subr.mxu0 0.0
    %3083 = vmatpush1.msra.mxu0 0.0
    %3084 = vmatprep.subr.mxu0 0.0
    %3085 = vmatpush1.msra.mxu0 0.0
    %3086 = vmatprep.subr.mxu0 0.0
    %3087 = vmatpush1.msra.mxu0 0.0
    %3088 = vmatprep.subr.mxu0 0.0
    %3089 = vmatpush1.msra.mxu0 0.0
    %3090 = vmatprep.subr.mxu0 0.0
    %3091 = vmatpush1.msra.mxu0 0.0
    %3092 = vmatprep.subr.mxu0 0.0
    %3093 = vmatpush1.msra.mxu0 0.0
    %3094 = vmatprep.subr.mxu0 0.0
    %3095 = vmatpush1.msra.mxu0 0.0
    %3096 = vmatprep.subr.mxu0 0.0
    %3097 = vmatpush1.msra.mxu0 0.0
    %3098 = vmatprep.subr.mxu0 0.0
    %3099 = vmatpush1.msra.mxu0 0.0
    %3100 = vmatprep.subr.mxu0 0.0
    %3101 = vmatpush1.msra.mxu0 0.0
    %3102 = vmatprep.subr.mxu0 0.0
    %3103 = vmatpush1.msra.mxu0 0.0
    %3104 = vmatprep.subr.mxu0 0.0
    %3105 = vmatpush1.msra.mxu0 0.0
    %3106 = vmatprep.subr.mxu0 0.0
    %3107 = vmatpush1.msra.mxu0 0.0
    %3108 = vmatprep.subr.mxu0 0.0
    %3109 = vmatpush1.msra.mxu0 0.0
    %3110 = vmatprep.subr.mxu0 0.0
    %3111 = vmatpush1.msra.mxu0 0.0
    %3112 = vmatprep.subr.mxu0 0.0
    %3113 = vmatpush1.msra.mxu0 0.0
    %3114 = vmatprep.subr.mxu0 0.0
    %3115 = vmatpush1.msra.mxu0 0.0
    %3116 = vmatprep.subr.mxu0 0.0
    %3117 = vmatpush1.msra.mxu0 0.0
    %3118 = vmatprep.subr.mxu0 0.0
    %3119 = vmatpush1.msra.mxu0 0.0
    %3120 = vmatprep.subr.mxu0 0.0
    %3121 = vmatpush1.msra.mxu0 0.0
    %3122 = vmatprep.subr.mxu0 0.0
    %3123 = vmatpush1.msra.mxu0 0.0
    %3124 = vmatprep.subr.mxu0 0.0
    %3125 = vmatpush1.msra.mxu0 0.0
    %3126 = vmatprep.subr.mxu0 0.0
    %3127 = vmatpush1.msra.mxu0 0.0
    %3128 = vmatprep.subr.mxu0 0.0
    %3129 = vmatpush1.msra.mxu0 0.0
    %3130 = vmatprep.subr.mxu0 0.0
    %3131 = vmatpush1.msra.mxu0 0.0
    %3132 = vmatprep.subr.mxu0 0.0
    %3133 = vmatpush1.msra.mxu0 0.0
    %3134 = vmatprep.mubr.f32.mxu0 0.0
    %3135 = vmatmul.mubr.f32.gmra.mrb[0].mxu0 %v3065
    %v3136 = vpop.f32.mrb[0].mxu0
    %v3137 = vadd.f32 0.0, %v3136
    %v3138 = vpop.f32.mrb[0].mxu0
    %3139 = vmatprep.mubr.f32.mxu0 0.0
    %3140 = vmatmul.mubr.f32.gmra.mrb[0].mxu0 %v3068
    %v3141 = vpop.f32.mrb[0].mxu0
    %v3142 = vadd.f32 0.0, %v3141
    %v3143 = vpop.f32.mrb[0].mxu0
    %3144 = vdwg.mxu0
    %3145 = vrot.lane.b32.xlu0 %v2739, 112
    %v3146 = vpop.permute.xlu0 %3145
    %3147 = vrot.lane.b32.xlu0 %v2744, 112
    %v3148 = vpop.permute.xlu0 %3147
    %3149 = vrot.lane.b32.xlu0 %v2739, 80
    %v3150 = vpop.permute.xlu0 %3149
    %3151 = vrot.lane.b32.xlu0 %v2744, 80
    %v3152 = vpop.permute.xlu0 %3151
    %v3153 = vsel %vm373, %v3146, 0
    %v3155 = vsel %vm373, %v3148, 0
    %v3157 = vsel %vm373, %v3150, 0
    %v3159 = vsel %vm373, %v3152, 0
    %3161 = vmatprep.subr.mxu0 0.0
    %3162 = vmatpush1.xpose.msra.mxu0 %v3157
    %3163 = vmatprep.subr.mxu0 0.0
    %3164 = vmatpush1.xpose.msra.mxu0 %v3159
    %3165 = vmatprep.subr.mxu0 0.0
    %3166 = vmatpush1.xpose.msra.mxu0 0.0
    %3167 = vmatprep.subr.mxu0 0.0
    %3168 = vmatpush1.xpose.msra.mxu0 0.0
    %3169 = vmatprep.subr.mxu0 0.0
    %3170 = vmatpush1.xpose.msra.mxu0 0.0
    %3171 = vmatprep.subr.mxu0 0.0
    %3172 = vmatpush1.xpose.msra.mxu0 0.0
    %3173 = vmatprep.subr.mxu0 0.0
    %3174 = vmatpush1.xpose.msra.mxu0 0.0
    %3175 = vmatprep.subr.mxu0 0.0
    %3176 = vmatpush1.xpose.msra.mxu0 0.0
    %3177 = vmatprep.subr.mxu0 0.0
    %3178 = vmatpush1.xpose.msra.mxu0 0.0
    %3179 = vmatprep.subr.mxu0 0.0
    %3180 = vmatpush1.xpose.msra.mxu0 0.0
    %3181 = vmatprep.subr.mxu0 0.0
    %3182 = vmatpush1.xpose.msra.mxu0 0.0
    %3183 = vmatprep.subr.mxu0 0.0
    %3184 = vmatpush1.xpose.msra.mxu0 0.0
    %3185 = vmatprep.subr.mxu0 0.0
    %3186 = vmatpush1.xpose.msra.mxu0 0.0
    %3187 = vmatprep.subr.mxu0 0.0
    %3188 = vmatpush1.xpose.msra.mxu0 0.0
    %3189 = vmatprep.subr.mxu0 0.0
    %3190 = vmatpush1.xpose.msra.mxu0 0.0
    %3191 = vmatprep.subr.mxu0 0.0
    %3192 = vmatpush1.xpose.msra.mxu0 0.0
    %3193 = vmatprep.subr.mxu0 0.0
    %3194 = vmatpush1.xpose.msra.mxu0 0.0
    %3195 = vmatprep.subr.mxu0 0.0
    %3196 = vmatpush1.xpose.msra.mxu0 0.0
    %3197 = vmatprep.subr.mxu0 0.0
    %3198 = vmatpush1.xpose.msra.mxu0 0.0
    %3199 = vmatprep.subr.mxu0 0.0
    %3200 = vmatpush1.xpose.msra.mxu0 0.0
    %3201 = vmatprep.subr.mxu0 0.0
    %3202 = vmatpush1.xpose.msra.mxu0 0.0
    %3203 = vmatprep.subr.mxu0 0.0
    %3204 = vmatpush1.xpose.msra.mxu0 0.0
    %3205 = vmatprep.subr.mxu0 0.0
    %3206 = vmatpush1.xpose.msra.mxu0 0.0
    %3207 = vmatprep.subr.mxu0 0.0
    %3208 = vmatpush1.xpose.msra.mxu0 0.0
    %3209 = vmatprep.subr.mxu0 0.0
    %3210 = vmatpush1.xpose.msra.mxu0 0.0
    %3211 = vmatprep.subr.mxu0 0.0
    %3212 = vmatpush1.xpose.msra.mxu0 0.0
    %3213 = vmatprep.subr.mxu0 0.0
    %3214 = vmatpush1.xpose.msra.mxu0 0.0
    %3215 = vmatprep.subr.mxu0 0.0
    %3216 = vmatpush1.xpose.msra.mxu0 0.0
    %3217 = vmatprep.subr.mxu0 0.0
    %3218 = vmatpush1.xpose.msra.mxu0 0.0
    %3219 = vmatprep.subr.mxu0 0.0
    %3220 = vmatpush1.xpose.msra.mxu0 0.0
    %3221 = vmatprep.subr.mxu0 0.0
    %3222 = vmatpush1.xpose.msra.mxu0 0.0
    %3223 = vmatprep.subr.mxu0 0.0
    %3224 = vmatpush1.xpose.msra.mxu0 0.0
    %3225 = vmatprep.mubr.f32.mxu0 0.0
    %3226 = vmatmul.mubr.f32.gmra.mrb[0].mxu0 %v3153
    %v3227 = vpop.f32.mrb[0].mxu0
    %v3228 = vadd.f32 %v178, %v3227
    %v3229 = vpop.f32.mrb[0].mxu0
    %3230 = vmatprep.mubr.f32.mxu0 0.0
    %3231 = vmatmul.mubr.f32.gmra.mrb[0].mxu0 %v3155
    %v3232 = vpop.f32.mrb[0].mxu0
    %v3233 = vadd.f32 %v179, %v3232
    %v3234 = vpop.f32.mrb[0].mxu0
    %3235 = vdwg.mxu0
    %v3236 = vsel %vm457, %v3228, -inf
    %3237 = vmax.xlane.f32.xlu0 %v3236
    %v3238 = vpop.xlane.xlu0 %3237
    %v3239 = vsel %vm457, %v3233, -inf
    %3240 = vmax.xlane.f32.xlu0 %v3239
    %v3241 = vpop.xlane.xlu0 %3240
    %v3242 = vsub.f32 %v3228, %v3238
    %v3243 = vsub.f32 %v3233, %v3241
    %v3244 = vmul.f32 %v3242, 1.442695
    %v3245 = vpow.pop %v3244
    %v3246 = vmul.f32 %v3243, 1.442695
    %v3247 = vpow.pop %v3246
    %v3248 = vsel %vm457, %v3245, 0.0
    %3249 = vadd.xlane.f32.xlu0 %v3248
    %v3250 = vpop.xlane.xlu0 %3249
    %v3251 = vsel %vm457, %v3247, 0.0
    %3252 = vadd.xlane.f32.xlu0 %v3251
    %v3253 = vpop.xlane.xlu0 %3252
    %v3254 = vrcp.pop %v3250
    %v3255 = vrcp.pop %v3253
    %v3256 = vmul.f32 %v3245, %v3254
    %v3257 = vmul.f32 %v3247, %v3255
    %3258 = vrot.lane.b32.xlu0 %v2739, 48
    %v3259 = vpop.permute.xlu0 %3258
    %3260 = vrot.lane.b32.xlu0 %v2744, 48
    %v3261 = vpop.permute.xlu0 %3260
    %v3265 = vsel %vm457, %v3256, 0
    %v3268 = vsel %vm457, %v3257, 0
    %3270 = vmatprep.subr.mxu0 0.0
    %3271 = vmatpush1.msra.mxu0 %v3259
    %3272 = vmatprep.subr.mxu0 0.0
    %3273 = vmatpush1.msra.mxu0 %v3261
    %3274 = vmatprep.subr.mxu0 0.0
    %3275 = vmatpush1.msra.mxu0 0.0
    %3276 = vmatprep.subr.mxu0 0.0
    %3277 = vmatpush1.msra.mxu0 0.0
    %3278 = vmatprep.subr.mxu0 0.0
    %3279 = vmatpush1.msra.mxu0 0.0
    %3280 = vmatprep.subr.mxu0 0.0
    %3281 = vmatpush1.msra.mxu0 0.0
    %3282 = vmatprep.subr.mxu0 0.0
    %3283 = vmatpush1.msra.mxu0 0.0
    %3284 = vmatprep.subr.mxu0 0.0
    %3285 = vmatpush1.msra.mxu0 0.0
    %3286 = vmatprep.subr.mxu0 0.0
    %3287 = vmatpush1.msra.mxu0 0.0
    %3288 = vmatprep.subr.mxu0 0.0
    %3289 = vmatpush1.msra.mxu0 0.0
    %3290 = vmatprep.subr.mxu0 0.0
    %3291 = vmatpush1.msra.mxu0 0.0
    %3292 = vmatprep.subr.mxu0 0.0
    %3293 = vmatpush1.msra.mxu0 0.0
    %3294 = vmatprep.subr.mxu0 0.0
    %3295 = vmatpush1.msra.mxu0 0.0
    %3296 = vmatprep.subr.mxu0 0.0
    %3297 = vmatpush1.msra.mxu0 0.0
    %3298 = vmatprep.subr.mxu0 0.0
    %3299 = vmatpush1.msra.mxu0 0.0
    %3300 = vmatprep.subr.mxu0 0.0
    %3301 = vmatpush1.msra.mxu0 0.0
    %3302 = vmatprep.subr.mxu0 0.0
    %3303 = vmatpush1.msra.mxu0 0.0
    %3304 = vmatprep.subr.mxu0 0.0
    %3305 = vmatpush1.msra.mxu0 0.0
    %3306 = vmatprep.subr.mxu0 0.0
    %3307 = vmatpush1.msra.mxu0 0.0
    %3308 = vmatprep.subr.mxu0 0.0
    %3309 = vmatpush1.msra.mxu0 0.0
    %3310 = vmatprep.subr.mxu0 0.0
    %3311 = vmatpush1.msra.mxu0 0.0
    %3312 = vmatprep.subr.mxu0 0.0
    %3313 = vmatpush1.msra.mxu0 0.0
    %3314 = vmatprep.subr.mxu0 0.0
    %3315 = vmatpush1.msra.mxu0 0.0
    %3316 = vmatprep.subr.mxu0 0.0
    %3317 = vmatpush1.msra.mxu0 0.0
    %3318 = vmatprep.subr.mxu0 0.0
    %3319 = vmatpush1.msra.mxu0 0.0
    %3320 = vmatprep.subr.mxu0 0.0
    %3321 = vmatpush1.msra.mxu0 0.0
    %3322 = vmatprep.subr.mxu0 0.0
    %3323 = vmatpush1.msra.mxu0 0.0
    %3324 = vmatprep.subr.mxu0 0.0
    %3325 = vmatpush1.msra.mxu0 0.0
    %3326 = vmatprep.subr.mxu0 0.0
    %3327 = vmatpush1.msra.mxu0 0.0
    %3328 = vmatprep.subr.mxu0 0.0
    %3329 = vmatpush1.msra.mxu0 0.0
    %3330 = vmatprep.subr.mxu0 0.0
    %3331 = vmatpush1.msra.mxu0 0.0
    %3332 = vmatprep.subr.mxu0 0.0
    %3333 = vmatpush1.msra.mxu0 0.0
    %3334 = vmatprep.mubr.f32.mxu0 0.0
    %3335 = vmatmul.mubr.f32.gmra.mrb[0].mxu0 %v3265
    %v3336 = vpop.f32.mrb[0].mxu0
    %v3337 = vadd.f32 0.0, %v3336
    %v3338 = vpop.f32.mrb[0].mxu0
    %3339 = vmatprep.mubr.f32.mxu0 0.0
    %3340 = vmatmul.mubr.f32.gmra.mrb[0].mxu0 %v3268
    %v3341 = vpop.f32.mrb[0].mxu0
    %v3342 = vadd.f32 0.0, %v3341
    %v3343 = vpop.f32.mrb[0].mxu0
    %3344 = vdwg.mxu0
    %3345 = vrot.lane.b32.xlu0 %v2739, 104
    %v3346 = vpop.permute.xlu0 %3345
    %3347 = vrot.lane.b32.xlu0 %v2744, 104
    %v3348 = vpop.permute.xlu0 %3347
    %3349 = vrot.lane.b32.xlu0 %v2739, 72
    %v3350 = vpop.permute.xlu0 %3349
    %3351 = vrot.lane.b32.xlu0 %v2744, 72
    %v3352 = vpop.permute.xlu0 %3351
    %v3353 = vsel %vm373, %v3346, 0
    %v3355 = vsel %vm373, %v3348, 0
    %v3357 = vsel %vm373, %v3350, 0
    %v3359 = vsel %vm373, %v3352, 0
    %3361 = vmatprep.subr.mxu0 0.0
    %3362 = vmatpush1.xpose.msra.mxu0 %v3357
    %3363 = vmatprep.subr.mxu0 0.0
    %3364 = vmatpush1.xpose.msra.mxu0 %v3359
    %3365 = vmatprep.subr.mxu0 0.0
    %3366 = vmatpush1.xpose.msra.mxu0 0.0
    %3367 = vmatprep.subr.mxu0 0.0
    %3368 = vmatpush1.xpose.msra.mxu0 0.0
    %3369 = vmatprep.subr.mxu0 0.0
    %3370 = vmatpush1.xpose.msra.mxu0 0.0
    %3371 = vmatprep.subr.mxu0 0.0
    %3372 = vmatpush1.xpose.msra.mxu0 0.0
    %3373 = vmatprep.subr.mxu0 0.0
    %3374 = vmatpush1.xpose.msra.mxu0 0.0
    %3375 = vmatprep.subr.mxu0 0.0
    %3376 = vmatpush1.xpose.msra.mxu0 0.0
    %3377 = vmatprep.subr.mxu0 0.0
    %3378 = vmatpush1.xpose.msra.mxu0 0.0
    %3379 = vmatprep.subr.mxu0 0.0
    %3380 = vmatpush1.xpose.msra.mxu0 0.0
    %3381 = vmatprep.subr.mxu0 0.0
    %3382 = vmatpush1.xpose.msra.mxu0 0.0
    %3383 = vmatprep.subr.mxu0 0.0
    %3384 = vmatpush1.xpose.msra.mxu0 0.0
    %3385 = vmatprep.subr.mxu0 0.0
    %3386 = vmatpush1.xpose.msra.mxu0 0.0
    %3387 = vmatprep.subr.mxu0 0.0
    %3388 = vmatpush1.xpose.msra.mxu0 0.0
    %3389 = vmatprep.subr.mxu0 0.0
    %3390 = vmatpush1.xpose.msra.mxu0 0.0
    %3391 = vmatprep.subr.mxu0 0.0
    %3392 = vmatpush1.xpose.msra.mxu0 0.0
    %3393 = vmatprep.subr.mxu0 0.0
    %3394 = vmatpush1.xpose.msra.mxu0 0.0
    %3395 = vmatprep.subr.mxu0 0.0
    %3396 = vmatpush1.xpose.msra.mxu0 0.0
    %3397 = vmatprep.subr.mxu0 0.0
    %3398 = vmatpush1.xpose.msra.mxu0 0.0
    %3399 = vmatprep.subr.mxu0 0.0
    %3400 = vmatpush1.xpose.msra.mxu0 0.0
    %3401 = vmatprep.subr.mxu0 0.0
    %3402 = vmatpush1.xpose.msra.mxu0 0.0
    %3403 = vmatprep.subr.mxu0 0.0
    %3404 = vmatpush1.xpose.msra.mxu0 0.0
    %3405 = vmatprep.subr.mxu0 0.0
    %3406 = vmatpush1.xpose.msra.mxu0 0.0
    %3407 = vmatprep.subr.mxu0 0.0
    %3408 = vmatpush1.xpose.msra.mxu0 0.0
    %3409 = vmatprep.subr.mxu0 0.0
    %3410 = vmatpush1.xpose.msra.mxu0 0.0
    %3411 = vmatprep.subr.mxu0 0.0
    %3412 = vmatpush1.xpose.msra.mxu0 0.0
    %3413 = vmatprep.subr.mxu0 0.0
    %3414 = vmatpush1.xpose.msra.mxu0 0.0
    %3415 = vmatprep.subr.mxu0 0.0
    %3416 = vmatpush1.xpose.msra.mxu0 0.0
    %3417 = vmatprep.subr.mxu0 0.0
    %3418 = vmatpush1.xpose.msra.mxu0 0.0
    %3419 = vmatprep.subr.mxu0 0.0
    %3420 = vmatpush1.xpose.msra.mxu0 0.0
    %3421 = vmatprep.subr.mxu0 0.0
    %3422 = vmatpush1.xpose.msra.mxu0 0.0
    %3423 = vmatprep.subr.mxu0 0.0
    %3424 = vmatpush1.xpose.msra.mxu0 0.0
    %3425 = vmatprep.mubr.f32.mxu0 0.0
    %3426 = vmatmul.mubr.f32.gmra.mrb[0].mxu0 %v3353
    %v3427 = vpop.f32.mrb[0].mxu0
    %v3428 = vadd.f32 %v178, %v3427
    %v3429 = vpop.f32.mrb[0].mxu0
    %3430 = vmatprep.mubr.f32.mxu0 0.0
    %3431 = vmatmul.mubr.f32.gmra.mrb[0].mxu0 %v3355
    %v3432 = vpop.f32.mrb[0].mxu0
    %v3433 = vadd.f32 %v179, %v3432
    %v3434 = vpop.f32.mrb[0].mxu0
    %3435 = vdwg.mxu0
    %v3436 = vsel %vm457, %v3428, -inf
    %3437 = vmax.xlane.f32.xlu0 %v3436
    %v3438 = vpop.xlane.xlu0 %3437
    %v3439 = vsel %vm457, %v3433, -inf
    %3440 = vmax.xlane.f32.xlu0 %v3439
    %v3441 = vpop.xlane.xlu0 %3440
    %v3442 = vsub.f32 %v3428, %v3438
    %v3443 = vsub.f32 %v3433, %v3441
    %v3444 = vmul.f32 %v3442, 1.442695
    %v3445 = vpow.pop %v3444
    %v3446 = vmul.f32 %v3443, 1.442695
    %v3447 = vpow.pop %v3446
    %v3448 = vsel %vm457, %v3445, 0.0
    %3449 = vadd.xlane.f32.xlu0 %v3448
    %v3450 = vpop.xlane.xlu0 %3449
    %v3451 = vsel %vm457, %v3447, 0.0
    %3452 = vadd.xlane.f32.xlu0 %v3451
    %v3453 = vpop.xlane.xlu0 %3452
    %v3454 = vrcp.pop %v3450
    %v3455 = vrcp.pop %v3453
    %v3456 = vmul.f32 %v3445, %v3454
    %v3457 = vmul.f32 %v3447, %v3455
    %3458 = vrot.lane.b32.xlu0 %v2739, 40
    %v3459 = vpop.permute.xlu0 %3458
    %3460 = vrot.lane.b32.xlu0 %v2744, 40
    %v3461 = vpop.permute.xlu0 %3460
    %v3465 = vsel %vm457, %v3456, 0
    %v3468 = vsel %vm457, %v3457, 0
    %3470 = vmatprep.subr.mxu0 0.0
    %3471 = vmatpush1.msra.mxu0 %v3459
    %3472 = vmatprep.subr.mxu0 0.0
    %3473 = vmatpush1.msra.mxu0 %v3461
    %3474 = vmatprep.subr.mxu0 0.0
    %3475 = vmatpush1.msra.mxu0 0.0
    %3476 = vmatprep.subr.mxu0 0.0
    %3477 = vmatpush1.msra.mxu0 0.0
    %3478 = vmatprep.subr.mxu0 0.0
    %3479 = vmatpush1.msra.mxu0 0.0
    %3480 = vmatprep.subr.mxu0 0.0
    %3481 = vmatpush1.msra.mxu0 0.0
    %3482 = vmatprep.subr.mxu0 0.0
    %3483 = vmatpush1.msra.mxu0 0.0
    %3484 = vmatprep.subr.mxu0 0.0
    %3485 = vmatpush1.msra.mxu0 0.0
    %3486 = vmatprep.subr.mxu0 0.0
    %3487 = vmatpush1.msra.mxu0 0.0
    %3488 = vmatprep.subr.mxu0 0.0
    %3489 = vmatpush1.msra.mxu0 0.0
    %3490 = vmatprep.subr.mxu0 0.0
    %3491 = vmatpush1.msra.mxu0 0.0
    %3492 = vmatprep.subr.mxu0 0.0
    %3493 = vmatpush1.msra.mxu0 0.0
    %3494 = vmatprep.subr.mxu0 0.0
    %3495 = vmatpush1.msra.mxu0 0.0
    %3496 = vmatprep.subr.mxu0 0.0
    %3497 = vmatpush1.msra.mxu0 0.0
    %3498 = vmatprep.subr.mxu0 0.0
    %3499 = vmatpush1.msra.mxu0 0.0
    %3500 = vmatprep.subr.mxu0 0.0
    %3501 = vmatpush1.msra.mxu0 0.0
    %3502 = vmatprep.subr.mxu0 0.0
    %3503 = vmatpush1.msra.mxu0 0.0
    %3504 = vmatprep.subr.mxu0 0.0
    %3505 = vmatpush1.msra.mxu0 0.0
    %3506 = vmatprep.subr.mxu0 0.0
    %3507 = vmatpush1.msra.mxu0 0.0
    %3508 = vmatprep.subr.mxu0 0.0
    %3509 = vmatpush1.msra.mxu0 0.0
    %3510 = vmatprep.subr.mxu0 0.0
    %3511 = vmatpush1.msra.mxu0 0.0
    %3512 = vmatprep.subr.mxu0 0.0
    %3513 = vmatpush1.msra.mxu0 0.0
    %3514 = vmatprep.subr.mxu0 0.0
    %3515 = vmatpush1.msra.mxu0 0.0
    %3516 = vmatprep.subr.mxu0 0.0
    %3517 = vmatpush1.msra.mxu0 0.0
    %3518 = vmatprep.subr.mxu0 0.0
    %3519 = vmatpush1.msra.mxu0 0.0
    %3520 = vmatprep.subr.mxu0 0.0
    %3521 = vmatpush1.msra.mxu0 0.0
    %3522 = vmatprep.subr.mxu0 0.0
    %3523 = vmatpush1.msra.mxu0 0.0
    %3524 = vmatprep.subr.mxu0 0.0
    %3525 = vmatpush1.msra.mxu0 0.0
    %3526 = vmatprep.subr.mxu0 0.0
    %3527 = vmatpush1.msra.mxu0 0.0
    %3528 = vmatprep.subr.mxu0 0.0
    %3529 = vmatpush1.msra.mxu0 0.0
    %3530 = vmatprep.subr.mxu0 0.0
    %3531 = vmatpush1.msra.mxu0 0.0
    %3532 = vmatprep.subr.mxu0 0.0
    %3533 = vmatpush1.msra.mxu0 0.0
    %3534 = vmatprep.mubr.f32.mxu0 0.0
    %3535 = vmatmul.mubr.f32.gmra.mrb[0].mxu0 %v3465
    %v3536 = vpop.f32.mrb[0].mxu0
    %v3537 = vadd.f32 0.0, %v3536
    %v3538 = vpop.f32.mrb[0].mxu0
    %3539 = vmatprep.mubr.f32.mxu0 0.0
    %3540 = vmatmul.mubr.f32.gmra.mrb[0].mxu0 %v3468
    %v3541 = vpop.f32.mrb[0].mxu0
    %v3542 = vadd.f32 0.0, %v3541
    %v3543 = vpop.f32.mrb[0].mxu0
    %3544 = vdwg.mxu0
    %3547 = vrot.lane.b32.xlu0 %v3137, 8
    %v3548 = vpop.permute.xlu0 %3547
    %3549 = vrot.lane.b32.xlu0 %v3142, 8
    %v3550 = vpop.permute.xlu0 %3549
    %3555 = vrot.lane.b32.xlu0 %v3337, 16
    %v3556 = vpop.permute.xlu0 %3555
    %3557 = vrot.lane.b32.xlu0 %v3342, 16
    %v3558 = vpop.permute.xlu0 %3557
    %3563 = vrot.lane.b32.xlu0 %v3537, 24
    %v3564 = vpop.permute.xlu0 %3563
    %3565 = vrot.lane.b32.xlu0 %v3542, 24
    %v3566 = vpop.permute.xlu0 %3565
    %v3569 = vsel %vm373, %v2937, %v3548
    %v3570 = vsel %vm373, %v2942, %v3550
    %v3571 = vsel %vm457, %v3569, %v3556
    %v3572 = vsel %vm457, %v3570, %v3558
    %v3573 = vsel %vm1195, %v3571, %v3564
    %v3574 = vsel %vm1195, %v3572, %v3566
    %s3575 = scalar_lea.vmem %s10, 64
    %v3576 = vld [vmem:[%s3575] sm:$0xff]
    %v3577 = vld [vmem:[%s3575 + $0x8] sm:$0xff]
    %v3578 = vld [vmem:[%s3575 + $0x10] sm:$0xff]
    %v3579 = vld [vmem:[%s3575 + $0x18] sm:$0xff]
    %s3580 = scalar_lea.vmem %s11, 2
    %v3581 = vld [vmem:[%s3580] sm:$0x1]
    %v3583 = vlaneseq
    %v3584 = vshrl.u32 %v3583, 7
    %v3585 = vsub.s32 0, %v3584
    %v3586 = vrot.slane %v3581, %v3585
    %v3589 = vsel %vm193, %v3573, 0
    %v3592 = vsel %vm193, %v3574, 0
    %3594 = vmatprep.subr.mxu0 0.0
    %3595 = vmatpush1.msra.mxu0 %v3576
    %3596 = vmatprep.subr.mxu0 0.0
    %3597 = vmatpush1.msra.mxu0 %v3577
    %3598 = vmatprep.subr.mxu0 0.0
    %3599 = vmatpush1.msra.mxu0 %v3578
    %3600 = vmatprep.subr.mxu0 0.0
    %3601 = vmatpush1.msra.mxu0 %v3579
    %3602 = vmatprep.subr.mxu0 0.0
    %3603 = vmatpush1.msra.mxu0 0.0
    %3604 = vmatprep.subr.mxu0 0.0
    %3605 = vmatpush1.msra.mxu0 0.0
    %3606 = vmatprep.subr.mxu0 0.0
    %3607 = vmatpush1.msra.mxu0 0.0
    %3608 = vmatprep.subr.mxu0 0.0
    %3609 = vmatpush1.msra.mxu0 0.0
    %3610 = vmatprep.subr.mxu0 0.0
    %3611 = vmatpush1.msra.mxu0 0.0
    %3612 = vmatprep.subr.mxu0 0.0
    %3613 = vmatpush1.msra.mxu0 0.0
    %3614 = vmatprep.subr.mxu0 0.0
    %3615 = vmatpush1.msra.mxu0 0.0
    %3616 = vmatprep.subr.mxu0 0.0
    %3617 = vmatpush1.msra.mxu0 0.0
    %3618 = vmatprep.subr.mxu0 0.0
    %3619 = vmatpush1.msra.mxu0 0.0
    %3620 = vmatprep.subr.mxu0 0.0
    %3621 = vmatpush1.msra.mxu0 0.0
    %3622 = vmatprep.subr.mxu0 0.0
    %3623 = vmatpush1.msra.mxu0 0.0
    %3624 = vmatprep.subr.mxu0 0.0
    %3625 = vmatpush1.msra.mxu0 0.0
    %3626 = vmatprep.subr.mxu0 0.0
    %3627 = vmatpush1.msra.mxu0 0.0
    %3628 = vmatprep.subr.mxu0 0.0
    %3629 = vmatpush1.msra.mxu0 0.0
    %3630 = vmatprep.subr.mxu0 0.0
    %3631 = vmatpush1.msra.mxu0 0.0
    %3632 = vmatprep.subr.mxu0 0.0
    %3633 = vmatpush1.msra.mxu0 0.0
    %3634 = vmatprep.subr.mxu0 0.0
    %3635 = vmatpush1.msra.mxu0 0.0
    %3636 = vmatprep.subr.mxu0 0.0
    %3637 = vmatpush1.msra.mxu0 0.0
    %3638 = vmatprep.subr.mxu0 0.0
    %3639 = vmatpush1.msra.mxu0 0.0
    %3640 = vmatprep.subr.mxu0 0.0
    %3641 = vmatpush1.msra.mxu0 0.0
    %3642 = vmatprep.subr.mxu0 0.0
    %3643 = vmatpush1.msra.mxu0 0.0
    %3644 = vmatprep.subr.mxu0 0.0
    %3645 = vmatpush1.msra.mxu0 0.0
    %3646 = vmatprep.subr.mxu0 0.0
    %3647 = vmatpush1.msra.mxu0 0.0
    %3648 = vmatprep.subr.mxu0 0.0
    %3649 = vmatpush1.msra.mxu0 0.0
    %3650 = vmatprep.subr.mxu0 0.0
    %3651 = vmatpush1.msra.mxu0 0.0
    %3652 = vmatprep.subr.mxu0 0.0
    %3653 = vmatpush1.msra.mxu0 0.0
    %3654 = vmatprep.subr.mxu0 0.0
    %3655 = vmatpush1.msra.mxu0 0.0
    %3656 = vmatprep.subr.mxu0 0.0
    %3657 = vmatpush1.msra.mxu0 0.0
    %3658 = vmatprep.mubr.f32.mxu0 0.0
    %3659 = vmatmul.mubr.f32.gmra.mrb[0].mxu0 %v3589
    %v3660 = vpop.f32.mrb[0].mxu0
    %v3661 = vadd.f32 %v3586, %v3660
    %v3662 = vpop.f32.mrb[0].mxu0
    %3663 = vmatprep.mubr.f32.mxu0 0.0
    %3664 = vmatmul.mubr.f32.gmra.mrb[0].mxu0 %v3592
    %v3665 = vpop.f32.mrb[0].mxu0
    %v3666 = vadd.f32 %v3586, %v3665
    %v3667 = vpop.f32.mrb[0].mxu0
    %3668 = vdwg.mxu0
    %v3669 = vadd.f32 %v2651, %v3661
    %v3670 = vadd.f32 %v2652, %v3666
    %s3671 = scalar_lea.vmem %s16, 3
    %v3672 = vld [vmem:[%s3671] sm:$0x1]
    %s3673 = scalar_lea.vmem %s17, 3
    %v3674 = vld [vmem:[%s3673] sm:$0x1]
    %v3675 = vsel %vm193, %v3669, 0.0
    %3676 = vadd.xlane.f32.xlu0 %v3675
    %v3677 = vpop.xlane.xlu0 %3676
    %v3678 = vsel %vm193, %v3670, 0.0
    %3679 = vadd.xlane.f32.xlu0 %v3678
    %v3680 = vpop.xlane.xlu0 %3679
    %v3681 = vmul.f32 %v3669, %v3669
    %v3682 = vmul.f32 %v3670, %v3670
    %v3683 = vsel %vm193, %v3681, 0.0
    %3684 = vadd.xlane.f32.xlu0 %v3683
    %v3685 = vpop.xlane.xlu0 %3684
    %v3686 = vsel %vm193, %v3682, 0.0
    %3687 = vadd.xlane.f32.xlu0 %v3686
    %v3688 = vpop.xlane.xlu0 %3687
    %v3689 = vmul.f32 %v3677, 0.03125
    %v3690 = vmul.f32 %v3680, 0.03125
    %v3691 = vmul.f32 %v3685, 0.03125
    %v3692 = vmul.f32 %v3688, 0.03125
    %v3693 = vmul.f32 %v3689, %v3689
    %v3694 = vmul.f32 %v3690, %v3690
    %v3695 = vsub.f32 %v3691, %v3693
    %v3696 = vsub.f32 %v3692, %v3694
    %v3697 = vmax.f32 %v3695, 0.0
    %v3698 = vmax.f32 %v3696, 0.0
    %v3699 = vsub.f32 %v3669, %v3689
    %v3700 = vsub.f32 %v3670, %v3690
    %v3701 = vadd.f32 %v3697, 1e-05
    %v3702 = vadd.f32 %v3698, 1e-05
    %v3703 = vrsqrt.pop %v3701
    %v3704 = vrsqrt.pop %v3702
    %v3705 = vmul.f32 %v3699, %v3703
    %v3706 = vmul.f32 %v3700, %v3704
    %v3708 = vlaneseq
    %v3709 = vshrl.u32 %v3708, 7
    %v3710 = vsub.s32 0, %v3709
    %v3711 = vrot.slane %v3672, %v3710
    %v3713 = vmul.f32 %v3705, %v3711
    %v3714 = vmul.f32 %v3706, %v3711
    %v3716 = vlaneseq
    %v3717 = vshrl.u32 %v3716, 7
    %v3718 = vsub.s32 0, %v3717
    %v3719 = vrot.slane %v3674, %v3718
    %v3721 = vadd.f32 %v3713, %v3719
    %v3722 = vadd.f32 %v3714, %v3719
    %s3723 = scalar_lea.vmem [#allocation7], 32
    %v3724 = vld [vmem:[%s3723] sm:$0xff]
    %v3725 = vld [vmem:[%s3723 + $0x8] sm:$0xff]
    %v3726 = vld [vmem:[%s3723 + $0x10] sm:$0xff]
    %v3727 = vld [vmem:[%s3723 + $0x18] sm:$0xff]
    %s3728 = scalar_lea.vmem [#allocation8], 1
    %v3729 = vld [vmem:[%s3728] sm:$0x1]
    %v3731 = vlaneseq
    %v3732 = vshrl.u32 %v3731, 7
    %v3733 = vsub.s32 0, %v3732
    %v3734 = vrot.slane %v3729, %v3733
    %v3737 = vsel %vm193, %v3721, 0
    %v3740 = vsel %vm193, %v3722, 0
    %3742 = vmatprep.subr.mxu0 0.0
    %3743 = vmatpush1.msra.mxu0 %v3724
    %3744 = vmatprep.subr.mxu0 0.0
    %3745 = vmatpush1.msra.mxu0 %v3725
    %3746 = vmatprep.subr.mxu0 0.0
    %3747 = vmatpush1.msra.mxu0 %v3726
    %3748 = vmatprep.subr.mxu0 0.0
    %3749 = vmatpush1.msra.mxu0 %v3727
    %3750 = vmatprep.subr.mxu0 0.0
    %3751 = vmatpush1.msra.mxu0 0.0
    %3752 = vmatprep.subr.mxu0 0.0
    %3753 = vmatpush1.msra.mxu0 0.0
    %3754 = vmatprep.subr.mxu0 0.0
    %3755 = vmatpush1.msra.mxu0 0.0
    %3756 = vmatprep.subr.mxu0 0.0
    %3757 = vmatpush1.msra.mxu0 0.0
    %3758 = vmatprep.subr.mxu0 0.0
    %3759 = vmatpush1.msra.mxu0 0.0
    %3760 = vmatprep.subr.mxu0 0.0
    %3761 = vmatpush1.msra.mxu0 0.0
    %3762 = vmatprep.subr.mxu0 0.0
    %3763 = vmatpush1.msra.mxu0 0.0
    %3764 = vmatprep.subr.mxu0 0.0
    %3765 = vmatpush1.msra.mxu0 0.0
    %3766 = vmatprep.subr.mxu0 0.0
    %3767 = vmatpush1.msra.mxu0 0.0
    %3768 = vmatprep.subr.mxu0 0.0
    %3769 = vmatpush1.msra.mxu0 0.0
    %3770 = vmatprep.subr.mxu0 0.0
    %3771 = vmatpush1.msra.mxu0 0.0
    %3772 = vmatprep.subr.mxu0 0.0
    %3773 = vmatpush1.msra.mxu0 0.0
    %3774 = vmatprep.subr.mxu0 0.0
    %3775 = vmatpush1.msra.mxu0 0.0
    %3776 = vmatprep.subr.mxu0 0.0
    %3777 = vmatpush1.msra.mxu0 0.0
    %3778 = vmatprep.subr.mxu0 0.0
    %3779 = vmatpush1.msra.mxu0 0.0
    %3780 = vmatprep.subr.mxu0 0.0
    %3781 = vmatpush1.msra.mxu0 0.0
    %3782 = vmatprep.subr.mxu0 0.0
    %3783 = vmatpush1.msra.mxu0 0.0
    %3784 = vmatprep.subr.mxu0 0.0
    %3785 = vmatpush1.msra.mxu0 0.0
    %3786 = vmatprep.subr.mxu0 0.0
    %3787 = vmatpush1.msra.mxu0 0.0
    %3788 = vmatprep.subr.mxu0 0.0
    %3789 = vmatpush1.msra.mxu0 0.0
    %3790 = vmatprep.subr.mxu0 0.0
    %3791 = vmatpush1.msra.mxu0 0.0
    %3792 = vmatprep.subr.mxu0 0.0
    %3793 = vmatpush1.msra.mxu0 0.0
    %3794 = vmatprep.subr.mxu0 0.0
    %3795 = vmatpush1.msra.mxu0 0.0
    %3796 = vmatprep.subr.mxu0 0.0
    %3797 = vmatpush1.msra.mxu0 0.0
    %3798 = vmatprep.subr.mxu0 0.0
    %3799 = vmatpush1.msra.mxu0 0.0
    %3800 = vmatprep.subr.mxu0 0.0
    %3801 = vmatpush1.msra.mxu0 0.0
    %3802 = vmatprep.subr.mxu0 0.0
    %3803 = vmatpush1.msra.mxu0 0.0
    %3804 = vmatprep.subr.mxu0 0.0
    %3805 = vmatpush1.msra.mxu0 0.0
    %3806 = vmatprep.mubr.f32.mxu0 0.0
    %3807 = vmatmul.mubr.f32.gmra.mrb[0].mxu0 %v3737
    %v3808 = vpop.f32.mrb[0].mxu0
    %v3809 = vadd.f32 %v3734, %v3808
    %v3810 = vpop.f32.mrb[0].mxu0
    %3811 = vmatprep.mubr.f32.mxu0 0.0
    %3812 = vmatmul.mubr.f32.gmra.mrb[0].mxu0 %v3740
    %v3813 = vpop.f32.mrb[0].mxu0
    %v3814 = vadd.f32 %v3734, %v3813
    %v3815 = vpop.f32.mrb[0].mxu0
    %3816 = vdwg.mxu0
    %3817 = vrot.lane.b32.xlu0 %v267, 64
    %v3818 = vpop.permute.xlu0 %3817
    %3819 = vrot.lane.b32.xlu0 %v272, 64
    %v3820 = vpop.permute.xlu0 %3819
    %v3822 = vsel %vm373, %v3809, 0
    %v3825 = vsel %vm373, %v3814, 0
    %v3827 = vsel %vm373, %v3818, 0
    %v3829 = vsel %vm373, %v3820, 0
    %3831 = vmatprep.subr.mxu0 0.0
    %3832 = vmatpush1.xpose.msra.mxu0 %v3827
    %3833 = vmatprep.subr.mxu0 0.0
    %3834 = vmatpush1.xpose.msra.mxu0 %v3829
    %3835 = vmatprep.subr.mxu0 0.0
    %3836 = vmatpush1.xpose.msra.mxu0 0.0
    %3837 = vmatprep.subr.mxu0 0.0
    %3838 = vmatpush1.xpose.msra.mxu0 0.0
    %3839 = vmatprep.subr.mxu0 0.0
    %3840 = vmatpush1.xpose.msra.mxu0 0.0
    %3841 = vmatprep.subr.mxu0 0.0
    %3842 = vmatpush1.xpose.msra.mxu0 0.0
    %3843 = vmatprep.subr.mxu0 0.0
    %3844 = vmatpush1.xpose.msra.mxu0 0.0
    %3845 = vmatprep.subr.mxu0 0.0
    %3846 = vmatpush1.xpose.msra.mxu0 0.0
    %3847 = vmatprep.subr.mxu0 0.0
    %3848 = vmatpush1.xpose.msra.mxu0 0.0
    %3849 = vmatprep.subr.mxu0 0.0
    %3850 = vmatpush1.xpose.msra.mxu0 0.0
    %3851 = vmatprep.subr.mxu0 0.0
    %3852 = vmatpush1.xpose.msra.mxu0 0.0
    %3853 = vmatprep.subr.mxu0 0.0
    %3854 = vmatpush1.xpose.msra.mxu0 0.0
    %3855 = vmatprep.subr.mxu0 0.0
    %3856 = vmatpush1.xpose.msra.mxu0 0.0
    %3857 = vmatprep.subr.mxu0 0.0
    %3858 = vmatpush1.xpose.msra.mxu0 0.0
    %3859 = vmatprep.subr.mxu0 0.0
    %3860 = vmatpush1.xpose.msra.mxu0 0.0
    %3861 = vmatprep.subr.mxu0 0.0
    %3862 = vmatpush1.xpose.msra.mxu0 0.0
    %3863 = vmatprep.subr.mxu0 0.0
    %3864 = vmatpush1.xpose.msra.mxu0 0.0
    %3865 = vmatprep.subr.mxu0 0.0
    %3866 = vmatpush1.xpose.msra.mxu0 0.0
    %3867 = vmatprep.subr.mxu0 0.0
    %3868 = vmatpush1.xpose.msra.mxu0 0.0
    %3869 = vmatprep.subr.mxu0 0.0
    %3870 = vmatpush1.xpose.msra.mxu0 0.0
    %3871 = vmatprep.subr.mxu0 0.0
    %3872 = vmatpush1.xpose.msra.mxu0 0.0
    %3873 = vmatprep.subr.mxu0 0.0
    %3874 = vmatpush1.xpose.msra.mxu0 0.0
    %3875 = vmatprep.subr.mxu0 0.0
    %3876 = vmatpush1.xpose.msra.mxu0 0.0
    %3877 = vmatprep.subr.mxu0 0.0
    %3878 = vmatpush1.xpose.msra.mxu0 0.0
    %3879 = vmatprep.subr.mxu0 0.0
    %3880 = vmatpush1.xpose.msra.mxu0 0.0
    %3881 = vmatprep.subr.mxu0 0.0
    %3882 = vmatpush1.xpose.msra.mxu0 0.0
    %3883 = vmatprep.subr.mxu0 0.0
    %3884 = vmatpush1.xpose.msra.mxu0 0.0
    %3885 = vmatprep.subr.mxu0 0.0
    %3886 = vmatpush1.xpose.msra.mxu0 0.0
    %3887 = vmatprep.subr.mxu0 0.0
    %3888 = vmatpush1.xpose.msra.mxu0 0.0
    %3889 = vmatprep.subr.mxu0 0.0
    %3890 = vmatpush1.xpose.msra.mxu0 0.0
    %3891 = vmatprep.subr.mxu0 0.0
    %3892 = vmatpush1.xpose.msra.mxu0 0.0
    %3893 = vmatprep.subr.mxu0 0.0
    %3894 = vmatpush1.xpose.msra.mxu0 0.0
    %3895 = vmatprep.mubr.f32.mxu0 0.0
    %3896 = vmatmul.mubr.f32.gmra.mrb[0].mxu0 %v3822
    %v3897 = vpop.f32.mrb[0].mxu0
    %v3898 = vadd.f32 %v180, %v3897
    %v3899 = vpop.f32.mrb[0].mxu0
    %3900 = vmatprep.mubr.f32.mxu0 0.0
    %3901 = vmatmul.mubr.f32.gmra.mrb[0].mxu0 %v3825
    %v3902 = vpop.f32.mrb[0].mxu0
    %v3903 = vadd.f32 %v181, %v3902
    %v3904 = vpop.f32.mrb[0].mxu0
    %3905 = vdwg.mxu0
    %v3906 = vsel %vm457, %v3898, -inf
    %3907 = vmax.xlane.f32.xlu0 %v3906
    %v3908 = vpop.xlane.xlu0 %3907
    %v3909 = vsel %vm457, %v3903, -inf
    %3910 = vmax.xlane.f32.xlu0 %v3909
    %v3911 = vpop.xlane.xlu0 %3910
    %v3912 = vsub.f32 %v3898, %v3908
    %v3913 = vsub.f32 %v3903, %v3911
    %v3914 = vmul.f32 %v3912, 1.442695
    %v3915 = vpow.pop %v3914
    %v3916 = vmul.f32 %v3913, 1.442695
    %v3917 = vpow.pop %v3916
    %v3918 = vsel %vm457, %v3915, 0.0
    %3919 = vadd.xlane.f32.xlu0 %v3918
    %v3920 = vpop.xlane.xlu0 %3919
    %v3921 = vsel %vm457, %v3917, 0.0
    %3922 = vadd.xlane.f32.xlu0 %v3921
    %v3923 = vpop.xlane.xlu0 %3922
    %v3924 = vrcp.pop %v3920
    %v3925 = vrcp.pop %v3923
    %v3926 = vmul.f32 %v3915, %v3924
    %v3927 = vmul.f32 %v3917, %v3925
    %3928 = vrot.lane.b32.xlu0 %v267, 32
    %v3929 = vpop.permute.xlu0 %3928
    %3930 = vrot.lane.b32.xlu0 %v272, 32
    %v3931 = vpop.permute.xlu0 %3930
    %v3935 = vsel %vm457, %v3926, 0
    %v3938 = vsel %vm457, %v3927, 0
    %3940 = vmatprep.subr.mxu0 0.0
    %3941 = vmatpush1.msra.mxu0 %v3929
    %3942 = vmatprep.subr.mxu0 0.0
    %3943 = vmatpush1.msra.mxu0 %v3931
    %3944 = vmatprep.subr.mxu0 0.0
    %3945 = vmatpush1.msra.mxu0 0.0
    %3946 = vmatprep.subr.mxu0 0.0
    %3947 = vmatpush1.msra.mxu0 0.0
    %3948 = vmatprep.subr.mxu0 0.0
    %3949 = vmatpush1.msra.mxu0 0.0
    %3950 = vmatprep.subr.mxu0 0.0
    %3951 = vmatpush1.msra.mxu0 0.0
    %3952 = vmatprep.subr.mxu0 0.0
    %3953 = vmatpush1.msra.mxu0 0.0
    %3954 = vmatprep.subr.mxu0 0.0
    %3955 = vmatpush1.msra.mxu0 0.0
    %3956 = vmatprep.subr.mxu0 0.0
    %3957 = vmatpush1.msra.mxu0 0.0
    %3958 = vmatprep.subr.mxu0 0.0
    %3959 = vmatpush1.msra.mxu0 0.0
    %3960 = vmatprep.subr.mxu0 0.0
    %3961 = vmatpush1.msra.mxu0 0.0
    %3962 = vmatprep.subr.mxu0 0.0
    %3963 = vmatpush1.msra.mxu0 0.0
    %3964 = vmatprep.subr.mxu0 0.0
    %3965 = vmatpush1.msra.mxu0 0.0
    %3966 = vmatprep.subr.mxu0 0.0
    %3967 = vmatpush1.msra.mxu0 0.0
    %3968 = vmatprep.subr.mxu0 0.0
    %3969 = vmatpush1.msra.mxu0 0.0
    %3970 = vmatprep.subr.mxu0 0.0
    %3971 = vmatpush1.msra.mxu0 0.0
    %3972 = vmatprep.subr.mxu0 0.0
    %3973 = vmatpush1.msra.mxu0 0.0
    %3974 = vmatprep.subr.mxu0 0.0
    %3975 = vmatpush1.msra.mxu0 0.0
    %3976 = vmatprep.subr.mxu0 0.0
    %3977 = vmatpush1.msra.mxu0 0.0
    %3978 = vmatprep.subr.mxu0 0.0
    %3979 = vmatpush1.msra.mxu0 0.0
    %3980 = vmatprep.subr.mxu0 0.0
    %3981 = vmatpush1.msra.mxu0 0.0
    %3982 = vmatprep.subr.mxu0 0.0
    %3983 = vmatpush1.msra.mxu0 0.0
    %3984 = vmatprep.subr.mxu0 0.0
    %3985 = vmatpush1.msra.mxu0 0.0
    %3986 = vmatprep.subr.mxu0 0.0
    %3987 = vmatpush1.msra.mxu0 0.0
    %3988 = vmatprep.subr.mxu0 0.0
    %3989 = vmatpush1.msra.mxu0 0.0
    %3990 = vmatprep.subr.mxu0 0.0
    %3991 = vmatpush1.msra.mxu0 0.0
    %3992 = vmatprep.subr.mxu0 0.0
    %3993 = vmatpush1.msra.mxu0 0.0
    %3994 = vmatprep.subr.mxu0 0.0
    %3995 = vmatpush1.msra.mxu0 0.0
    %3996 = vmatprep.subr.mxu0 0.0
    %3997 = vmatpush1.msra.mxu0 0.0
    %3998 = vmatprep.subr.mxu0 0.0
    %3999 = vmatpush1.msra.mxu0 0.0
    %4000 = vmatprep.subr.mxu0 0.0
    %4001 = vmatpush1.msra.mxu0 0.0
    %4002 = vmatprep.subr.mxu0 0.0
    %4003 = vmatpush1.msra.mxu0 0.0
    %4004 = vmatprep.mubr.f32.mxu0 0.0
    %4005 = vmatmul.mubr.f32.gmra.mrb[0].mxu0 %v3935
    %v4006 = vpop.f32.mrb[0].mxu0
    %v4007 = vadd.f32 0.0, %v4006
    %v4008 = vpop.f32.mrb[0].mxu0
    %4009 = vmatprep.mubr.f32.mxu0 0.0
    %4010 = vmatmul.mubr.f32.gmra.mrb[0].mxu0 %v3938
    %v4011 = vpop.f32.mrb[0].mxu0
    %v4012 = vadd.f32 0.0, %v4011
    %v4013 = vpop.f32.mrb[0].mxu0
    %4014 = vdwg.mxu0
    %4015 = vrot.lane.b32.xlu0 %v3809, 120
    %v4016 = vpop.permute.xlu0 %4015
    %4017 = vrot.lane.b32.xlu0 %v3814, 120
    %v4018 = vpop.permute.xlu0 %4017
    %4019 = vrot.lane.b32.xlu0 %v267, 56
    %v4020 = vpop.permute.xlu0 %4019
    %4021 = vrot.lane.b32.xlu0 %v272, 56
    %v4022 = vpop.permute.xlu0 %4021
    %v4023 = vsel %vm373, %v4016, 0
    %v4025 = vsel %vm373, %v4018, 0
    %v4027 = vsel %vm373, %v4020, 0
    %v4029 = vsel %vm373, %v4022, 0
    %4031 = vmatprep.subr.mxu0 0.0
    %4032 = vmatpush1.xpose.msra.mxu0 %v4027
    %4033 = vmatprep.subr.mxu0 0.0
    %4034 = vmatpush1.xpose.msra.mxu0 %v4029
    %4035 = vmatprep.subr.mxu0 0.0
    %4036 = vmatpush1.xpose.msra.mxu0 0.0
    %4037 = vmatprep.subr.mxu0 0.0
    %4038 = vmatpush1.xpose.msra.mxu0 0.0
    %4039 = vmatprep.subr.mxu0 0.0
    %4040 = vmatpush1.xpose.msra.mxu0 0.0
    %4041 = vmatprep.subr.mxu0 0.0
    %4042 = vmatpush1.xpose.msra.mxu0 0.0
    %4043 = vmatprep.subr.mxu0 0.0
    %4044 = vmatpush1.xpose.msra.mxu0 0.0
    %4045 = vmatprep.subr.mxu0 0.0
    %4046 = vmatpush1.xpose.msra.mxu0 0.0
    %4047 = vmatprep.subr.mxu0 0.0
    %4048 = vmatpush1.xpose.msra.mxu0 0.0
    %4049 = vmatprep.subr.mxu0 0.0
    %4050 = vmatpush1.xpose.msra.mxu0 0.0
    %4051 = vmatprep.subr.mxu0 0.0
    %4052 = vmatpush1.xpose.msra.mxu0 0.0
    %4053 = vmatprep.subr.mxu0 0.0
    %4054 = vmatpush1.xpose.msra.mxu0 0.0
    %4055 = vmatprep.subr.mxu0 0.0
    %4056 = vmatpush1.xpose.msra.mxu0 0.0
    %4057 = vmatprep.subr.mxu0 0.0
    %4058 = vmatpush1.xpose.msra.mxu0 0.0
    %4059 = vmatprep.subr.mxu0 0.0
    %4060 = vmatpush1.xpose.msra.mxu0 0.0
    %4061 = vmatprep.subr.mxu0 0.0
    %4062 = vmatpush1.xpose.msra.mxu0 0.0
    %4063 = vmatprep.subr.mxu0 0.0
    %4064 = vmatpush1.xpose.msra.mxu0 0.0
    %4065 = vmatprep.subr.mxu0 0.0
    %4066 = vmatpush1.xpose.msra.mxu0 0.0
    %4067 = vmatprep.subr.mxu0 0.0
    %4068 = vmatpush1.xpose.msra.mxu0 0.0
    %4069 = vmatprep.subr.mxu0 0.0
    %4070 = vmatpush1.xpose.msra.mxu0 0.0
    %4071 = vmatprep.subr.mxu0 0.0
    %4072 = vmatpush1.xpose.msra.mxu0 0.0
    %4073 = vmatprep.subr.mxu0 0.0
    %4074 = vmatpush1.xpose.msra.mxu0 0.0
    %4075 = vmatprep.subr.mxu0 0.0
    %4076 = vmatpush1.xpose.msra.mxu0 0.0
    %4077 = vmatprep.subr.mxu0 0.0
    %4078 = vmatpush1.xpose.msra.mxu0 0.0
    %4079 = vmatprep.subr.mxu0 0.0
    %4080 = vmatpush1.xpose.msra.mxu0 0.0
    %4081 = vmatprep.subr.mxu0 0.0
    %4082 = vmatpush1.xpose.msra.mxu0 0.0
    %4083 = vmatprep.subr.mxu0 0.0
    %4084 = vmatpush1.xpose.msra.mxu0 0.0
    %4085 = vmatprep.subr.mxu0 0.0
    %4086 = vmatpush1.xpose.msra.mxu0 0.0
    %4087 = vmatprep.subr.mxu0 0.0
    %4088 = vmatpush1.xpose.msra.mxu0 0.0
    %4089 = vmatprep.subr.mxu0 0.0
    %4090 = vmatpush1.xpose.msra.mxu0 0.0
    %4091 = vmatprep.subr.mxu0 0.0
    %4092 = vmatpush1.xpose.msra.mxu0 0.0
    %4093 = vmatprep.subr.mxu0 0.0
    %4094 = vmatpush1.xpose.msra.mxu0 0.0
    %4095 = vmatprep.mubr.f32.mxu0 0.0
    %4096 = vmatmul.mubr.f32.gmra.mrb[0].mxu0 %v4023
    %v4097 = vpop.f32.mrb[0].mxu0
    %v4098 = vadd.f32 %v180, %v4097
    %v4099 = vpop.f32.mrb[0].mxu0
    %4100 = vmatprep.mubr.f32.mxu0 0.0
    %4101 = vmatmul.mubr.f32.gmra.mrb[0].mxu0 %v4025
    %v4102 = vpop.f32.mrb[0].mxu0
    %v4103 = vadd.f32 %v181, %v4102
    %v4104 = vpop.f32.mrb[0].mxu0
    %4105 = vdwg.mxu0
    %v4106 = vsel %vm457, %v4098, -inf
    %4107 = vmax.xlane.f32.xlu0 %v4106
    %v4108 = vpop.xlane.xlu0 %4107
    %v4109 = vsel %vm457, %v4103, -inf
    %4110 = vmax.xlane.f32.xlu0 %v4109
    %v4111 = vpop.xlane.xlu0 %4110
    %v4112 = vsub.f32 %v4098, %v4108
    %v4113 = vsub.f32 %v4103, %v4111
    %v4114 = vmul.f32 %v4112, 1.442695
    %v4115 = vpow.pop %v4114
    %v4116 = vmul.f32 %v4113, 1.442695
    %v4117 = vpow.pop %v4116
    %v4118 = vsel %vm457, %v4115, 0.0
    %4119 = vadd.xlane.f32.xlu0 %v4118
    %v4120 = vpop.xlane.xlu0 %4119
    %v4121 = vsel %vm457, %v4117, 0.0
    %4122 = vadd.xlane.f32.xlu0 %v4121
    %v4123 = vpop.xlane.xlu0 %4122
    %v4124 = vrcp.pop %v4120
    %v4125 = vrcp.pop %v4123
    %v4126 = vmul.f32 %v4115, %v4124
    %v4127 = vmul.f32 %v4117, %v4125
    %4128 = vrot.lane.b32.xlu0 %v267, 24
    %v4129 = vpop.permute.xlu0 %4128
    %4130 = vrot.lane.b32.xlu0 %v272, 24
    %v4131 = vpop.permute.xlu0 %4130
    %v4135 = vsel %vm457, %v4126, 0
    %v4138 = vsel %vm457, %v4127, 0
    %4140 = vmatprep.subr.mxu0 0.0
    %4141 = vmatpush1.msra.mxu0 %v4129
    %4142 = vmatprep.subr.mxu0 0.0
    %4143 = vmatpush1.msra.mxu0 %v4131
    %4144 = vmatprep.subr.mxu0 0.0
    %4145 = vmatpush1.msra.mxu0 0.0
    %4146 = vmatprep.subr.mxu0 0.0
    %4147 = vmatpush1.msra.mxu0 0.0
    %4148 = vmatprep.subr.mxu0 0.0
    %4149 = vmatpush1.msra.mxu0 0.0
    %4150 = vmatprep.subr.mxu0 0.0
    %4151 = vmatpush1.msra.mxu0 0.0
    %4152 = vmatprep.subr.mxu0 0.0
    %4153 = vmatpush1.msra.mxu0 0.0
    %4154 = vmatprep.subr.mxu0 0.0
    %4155 = vmatpush1.msra.mxu0 0.0
    %4156 = vmatprep.subr.mxu0 0.0
    %4157 = vmatpush1.msra.mxu0 0.0
    %4158 = vmatprep.subr.mxu0 0.0
    %4159 = vmatpush1.msra.mxu0 0.0
    %4160 = vmatprep.subr.mxu0 0.0
    %4161 = vmatpush1.msra.mxu0 0.0
    %4162 = vmatprep.subr.mxu0 0.0
    %4163 = vmatpush1.msra.mxu0 0.0
    %4164 = vmatprep.subr.mxu0 0.0
    %4165 = vmatpush1.msra.mxu0 0.0
    %4166 = vmatprep.subr.mxu0 0.0
    %4167 = vmatpush1.msra.mxu0 0.0
    %4168 = vmatprep.subr.mxu0 0.0
    %4169 = vmatpush1.msra.mxu0 0.0
    %4170 = vmatprep.subr.mxu0 0.0
    %4171 = vmatpush1.msra.mxu0 0.0
    %4172 = vmatprep.subr.mxu0 0.0
    %4173 = vmatpush1.msra.mxu0 0.0
    %4174 = vmatprep.subr.mxu0 0.0
    %4175 = vmatpush1.msra.mxu0 0.0
    %4176 = vmatprep.subr.mxu0 0.0
    %4177 = vmatpush1.msra.mxu0 0.0
    %4178 = vmatprep.subr.mxu0 0.0
    %4179 = vmatpush1.msra.mxu0 0.0
    %4180 = vmatprep.subr.mxu0 0.0
    %4181 = vmatpush1.msra.mxu0 0.0
    %4182 = vmatprep.subr.mxu0 0.0
    %4183 = vmatpush1.msra.mxu0 0.0
    %4184 = vmatprep.subr.mxu0 0.0
    %4185 = vmatpush1.msra.mxu0 0.0
    %4186 = vmatprep.subr.mxu0 0.0
    %4187 = vmatpush1.msra.mxu0 0.0
    %4188 = vmatprep.subr.mxu0 0.0
    %4189 = vmatpush1.msra.mxu0 0.0
    %4190 = vmatprep.subr.mxu0 0.0
    %4191 = vmatpush1.msra.mxu0 0.0
    %4192 = vmatprep.subr.mxu0 0.0
    %4193 = vmatpush1.msra.mxu0 0.0
    %4194 = vmatprep.subr.mxu0 0.0
    %4195 = vmatpush1.msra.mxu0 0.0
    %4196 = vmatprep.subr.mxu0 0.0
    %4197 = vmatpush1.msra.mxu0 0.0
    %4198 = vmatprep.subr.mxu0 0.0
    %4199 = vmatpush1.msra.mxu0 0.0
    %4200 = vmatprep.subr.mxu0 0.0
    %4201 = vmatpush1.msra.mxu0 0.0
    %4202 = vmatprep.subr.mxu0 0.0
    %4203 = vmatpush1.msra.mxu0 0.0
    %4204 = vmatprep.mubr.f32.mxu0 0.0
    %4205 = vmatmul.mubr.f32.gmra.mrb[0].mxu0 %v4135
    %v4206 = vpop.f32.mrb[0].mxu0
    %v4207 = vadd.f32 0.0, %v4206
    %v4208 = vpop.f32.mrb[0].mxu0
    %4209 = vmatprep.mubr.f32.mxu0 0.0
    %4210 = vmatmul.mubr.f32.gmra.mrb[0].mxu0 %v4138
    %v4211 = vpop.f32.mrb[0].mxu0
    %v4212 = vadd.f32 0.0, %v4211
    %v4213 = vpop.f32.mrb[0].mxu0
    %4214 = vdwg.mxu0
    %4215 = vrot.lane.b32.xlu0 %v3809, 112
    %v4216 = vpop.permute.xlu0 %4215
    %4217 = vrot.lane.b32.xlu0 %v3814, 112
    %v4218 = vpop.permute.xlu0 %4217
    %4219 = vrot.lane.b32.xlu0 %v267, 48
    %v4220 = vpop.permute.xlu0 %4219
    %4221 = vrot.lane.b32.xlu0 %v272, 48
    %v4222 = vpop.permute.xlu0 %4221
    %v4223 = vsel %vm373, %v4216, 0
    %v4225 = vsel %vm373, %v4218, 0
    %v4227 = vsel %vm373, %v4220, 0
    %v4229 = vsel %vm373, %v4222, 0
    %4231 = vmatprep.subr.mxu0 0.0
    %4232 = vmatpush1.xpose.msra.mxu0 %v4227
    %4233 = vmatprep.subr.mxu0 0.0
    %4234 = vmatpush1.xpose.msra.mxu0 %v4229
    %4235 = vmatprep.subr.mxu0 0.0
    %4236 = vmatpush1.xpose.msra.mxu0 0.0
    %4237 = vmatprep.subr.mxu0 0.0
    %4238 = vmatpush1.xpose.msra.mxu0 0.0
    %4239 = vmatprep.subr.mxu0 0.0
    %4240 = vmatpush1.xpose.msra.mxu0 0.0
    %4241 = vmatprep.subr.mxu0 0.0
    %4242 = vmatpush1.xpose.msra.mxu0 0.0
    %4243 = vmatprep.subr.mxu0 0.0
    %4244 = vmatpush1.xpose.msra.mxu0 0.0
    %4245 = vmatprep.subr.mxu0 0.0
    %4246 = vmatpush1.xpose.msra.mxu0 0.0
    %4247 = vmatprep.subr.mxu0 0.0
    %4248 = vmatpush1.xpose.msra.mxu0 0.0
    %4249 = vmatprep.subr.mxu0 0.0
    %4250 = vmatpush1.xpose.msra.mxu0 0.0
    %4251 = vmatprep.subr.mxu0 0.0
    %4252 = vmatpush1.xpose.msra.mxu0 0.0
    %4253 = vmatprep.subr.mxu0 0.0
    %4254 = vmatpush1.xpose.msra.mxu0 0.0
    %4255 = vmatprep.subr.mxu0 0.0
    %4256 = vmatpush1.xpose.msra.mxu0 0.0
    %4257 = vmatprep.subr.mxu0 0.0
    %4258 = vmatpush1.xpose.msra.mxu0 0.0
    %4259 = vmatprep.subr.mxu0 0.0
    %4260 = vmatpush1.xpose.msra.mxu0 0.0
    %4261 = vmatprep.subr.mxu0 0.0
    %4262 = vmatpush1.xpose.msra.mxu0 0.0
    %4263 = vmatprep.subr.mxu0 0.0
    %4264 = vmatpush1.xpose.msra.mxu0 0.0
    %4265 = vmatprep.subr.mxu0 0.0
    %4266 = vmatpush1.xpose.msra.mxu0 0.0
    %4267 = vmatprep.subr.mxu0 0.0
    %4268 = vmatpush1.xpose.msra.mxu0 0.0
    %4269 = vmatprep.subr.mxu0 0.0
    %4270 = vmatpush1.xpose.msra.mxu0 0.0
    %4271 = vmatprep.subr.mxu0 0.0
    %4272 = vmatpush1.xpose.msra.mxu0 0.0
    %4273 = vmatprep.subr.mxu0 0.0
    %4274 = vmatpush1.xpose.msra.mxu0 0.0
    %4275 = vmatprep.subr.mxu0 0.0
    %4276 = vmatpush1.xpose.msra.mxu0 0.0
    %4277 = vmatprep.subr.mxu0 0.0
    %4278 = vmatpush1.xpose.msra.mxu0 0.0
    %4279 = vmatprep.subr.mxu0 0.0
    %4280 = vmatpush1.xpose.msra.mxu0 0.0
    %4281 = vmatprep.subr.mxu0 0.0
    %4282 = vmatpush1.xpose.msra.mxu0 0.0
    %4283 = vmatprep.subr.mxu0 0.0
    %4284 = vmatpush1.xpose.msra.mxu0 0.0
    %4285 = vmatprep.subr.mxu0 0.0
    %4286 = vmatpush1.xpose.msra.mxu0 0.0
    %4287 = vmatprep.subr.mxu0 0.0
    %4288 = vmatpush1.xpose.msra.mxu0 0.0
    %4289 = vmatprep.subr.mxu0 0.0
    %4290 = vmatpush1.xpose.msra.mxu0 0.0
    %4291 = vmatprep.subr.mxu0 0.0
    %4292 = vmatpush1.xpose.msra.mxu0 0.0
    %4293 = vmatprep.subr.mxu0 0.0
    %4294 = vmatpush1.xpose.msra.mxu0 0.0
    %4295 = vmatprep.mubr.f32.mxu0 0.0
    %4296 = vmatmul.mubr.f32.gmra.mrb[0].mxu0 %v4223
    %v4297 = vpop.f32.mrb[0].mxu0
    %v4298 = vadd.f32 %v180, %v4297
    %v4299 = vpop.f32.mrb[0].mxu0
    %4300 = vmatprep.mubr.f32.mxu0 0.0
    %4301 = vmatmul.mubr.f32.gmra.mrb[0].mxu0 %v4225
    %v4302 = vpop.f32.mrb[0].mxu0
    %v4303 = vadd.f32 %v181, %v4302
    %v4304 = vpop.f32.mrb[0].mxu0
    %4305 = vdwg.mxu0
    %v4306 = vsel %vm457, %v4298, -inf
    %4307 = vmax.xlane.f32.xlu0 %v4306
    %v4308 = vpop.xlane.xlu0 %4307
    %v4309 = vsel %vm457, %v4303, -inf
    %4310 = vmax.xlane.f32.xlu0 %v4309
    %v4311 = vpop.xlane.xlu0 %4310
    %v4312 = vsub.f32 %v4298, %v4308
    %v4313 = vsub.f32 %v4303, %v4311
    %v4314 = vmul.f32 %v4312, 1.442695
    %v4315 = vpow.pop %v4314
    %v4316 = vmul.f32 %v4313, 1.442695
    %v4317 = vpow.pop %v4316
    %v4318 = vsel %vm457, %v4315, 0.0
    %4319 = vadd.xlane.f32.xlu0 %v4318
    %v4320 = vpop.xlane.xlu0 %4319
    %v4321 = vsel %vm457, %v4317, 0.0
    %4322 = vadd.xlane.f32.xlu0 %v4321
    %v4323 = vpop.xlane.xlu0 %4322
    %v4324 = vrcp.pop %v4320
    %v4325 = vrcp.pop %v4323
    %v4326 = vmul.f32 %v4315, %v4324
    %v4327 = vmul.f32 %v4317, %v4325
    %4328 = vrot.lane.b32.xlu0 %v267, 16
    %v4329 = vpop.permute.xlu0 %4328
    %4330 = vrot.lane.b32.xlu0 %v272, 16
    %v4331 = vpop.permute.xlu0 %4330
    %v4335 = vsel %vm457, %v4326, 0
    %v4338 = vsel %vm457, %v4327, 0
    %4340 = vmatprep.subr.mxu0 0.0
    %4341 = vmatpush1.msra.mxu0 %v4329
    %4342 = vmatprep.subr.mxu0 0.0
    %4343 = vmatpush1.msra.mxu0 %v4331
    %4344 = vmatprep.subr.mxu0 0.0
    %4345 = vmatpush1.msra.mxu0 0.0
    %4346 = vmatprep.subr.mxu0 0.0
    %4347 = vmatpush1.msra.mxu0 0.0
    %4348 = vmatprep.subr.mxu0 0.0
    %4349 = vmatpush1.msra.mxu0 0.0
    %4350 = vmatprep.subr.mxu0 0.0
    %4351 = vmatpush1.msra.mxu0 0.0
    %4352 = vmatprep.subr.mxu0 0.0
    %4353 = vmatpush1.msra.mxu0 0.0
    %4354 = vmatprep.subr.mxu0 0.0
    %4355 = vmatpush1.msra.mxu0 0.0
    %4356 = vmatprep.subr.mxu0 0.0
    %4357 = vmatpush1.msra.mxu0 0.0
    %4358 = vmatprep.subr.mxu0 0.0
    %4359 = vmatpush1.msra.mxu0 0.0
    %4360 = vmatprep.subr.mxu0 0.0
    %4361 = vmatpush1.msra.mxu0 0.0
    %4362 = vmatprep.subr.mxu0 0.0
    %4363 = vmatpush1.msra.mxu0 0.0
    %4364 = vmatprep.subr.mxu0 0.0
    %4365 = vmatpush1.msra.mxu0 0.0
    %4366 = vmatprep.subr.mxu0 0.0
    %4367 = vmatpush1.msra.mxu0 0.0
    %4368 = vmatprep.subr.mxu0 0.0
    %4369 = vmatpush1.msra.mxu0 0.0
    %4370 = vmatprep.subr.mxu0 0.0
    %4371 = vmatpush1.msra.mxu0 0.0
    %4372 = vmatprep.subr.mxu0 0.0
    %4373 = vmatpush1.msra.mxu0 0.0
    %4374 = vmatprep.subr.mxu0 0.0
    %4375 = vmatpush1.msra.mxu0 0.0
    %4376 = vmatprep.subr.mxu0 0.0
    %4377 = vmatpush1.msra.mxu0 0.0
    %4378 = vmatprep.subr.mxu0 0.0
    %4379 = vmatpush1.msra.mxu0 0.0
    %4380 = vmatprep.subr.mxu0 0.0
    %4381 = vmatpush1.msra.mxu0 0.0
    %4382 = vmatprep.subr.mxu0 0.0
    %4383 = vmatpush1.msra.mxu0 0.0
    %4384 = vmatprep.subr.mxu0 0.0
    %4385 = vmatpush1.msra.mxu0 0.0
    %4386 = vmatprep.subr.mxu0 0.0
    %4387 = vmatpush1.msra.mxu0 0.0
    %4388 = vmatprep.subr.mxu0 0.0
    %4389 = vmatpush1.msra.mxu0 0.0
    %4390 = vmatprep.subr.mxu0 0.0
    %4391 = vmatpush1.msra.mxu0 0.0
    %4392 = vmatprep.subr.mxu0 0.0
    %4393 = vmatpush1.msra.mxu0 0.0
    %4394 = vmatprep.subr.mxu0 0.0
    %4395 = vmatpush1.msra.mxu0 0.0
    %4396 = vmatprep.subr.mxu0 0.0
    %4397 = vmatpush1.msra.mxu0 0.0
    %4398 = vmatprep.subr.mxu0 0.0
    %4399 = vmatpush1.msra.mxu0 0.0
    %4400 = vmatprep.subr.mxu0 0.0
    %4401 = vmatpush1.msra.mxu0 0.0
    %4402 = vmatprep.subr.mxu0 0.0
    %4403 = vmatpush1.msra.mxu0 0.0
    %4404 = vmatprep.mubr.f32.mxu0 0.0
    %4405 = vmatmul.mubr.f32.gmra.mrb[0].mxu0 %v4335
    %v4406 = vpop.f32.mrb[0].mxu0
    %v4407 = vadd.f32 0.0, %v4406
    %v4408 = vpop.f32.mrb[0].mxu0
    %4409 = vmatprep.mubr.f32.mxu0 0.0
    %4410 = vmatmul.mubr.f32.gmra.mrb[0].mxu0 %v4338
    %v4411 = vpop.f32.mrb[0].mxu0
    %v4412 = vadd.f32 0.0, %v4411
    %v4413 = vpop.f32.mrb[0].mxu0
    %4414 = vdwg.mxu0
    %4415 = vrot.lane.b32.xlu0 %v3809, 104
    %v4416 = vpop.permute.xlu0 %4415
    %4417 = vrot.lane.b32.xlu0 %v3814, 104
    %v4418 = vpop.permute.xlu0 %4417
    %4419 = vrot.lane.b32.xlu0 %v267, 40
    %v4420 = vpop.permute.xlu0 %4419
    %4421 = vrot.lane.b32.xlu0 %v272, 40
    %v4422 = vpop.permute.xlu0 %4421
    %v4423 = vsel %vm373, %v4416, 0
    %v4425 = vsel %vm373, %v4418, 0
    %v4427 = vsel %vm373, %v4420, 0
    %v4429 = vsel %vm373, %v4422, 0
    %4431 = vmatprep.subr.mxu0 0.0
    %4432 = vmatpush1.xpose.msra.mxu0 %v4427
    %4433 = vmatprep.subr.mxu0 0.0
    %4434 = vmatpush1.xpose.msra.mxu0 %v4429
    %4435 = vmatprep.subr.mxu0 0.0
    %4436 = vmatpush1.xpose.msra.mxu0 0.0
    %4437 = vmatprep.subr.mxu0 0.0
    %4438 = vmatpush1.xpose.msra.mxu0 0.0
    %4439 = vmatprep.subr.mxu0 0.0
    %4440 = vmatpush1.xpose.msra.mxu0 0.0
    %4441 = vmatprep.subr.mxu0 0.0
    %4442 = vmatpush1.xpose.msra.mxu0 0.0
    %4443 = vmatprep.subr.mxu0 0.0
    %4444 = vmatpush1.xpose.msra.mxu0 0.0
    %4445 = vmatprep.subr.mxu0 0.0
    %4446 = vmatpush1.xpose.msra.mxu0 0.0
    %4447 = vmatprep.subr.mxu0 0.0
    %4448 = vmatpush1.xpose.msra.mxu0 0.0
    %4449 = vmatprep.subr.mxu0 0.0
    %4450 = vmatpush1.xpose.msra.mxu0 0.0
    %4451 = vmatprep.subr.mxu0 0.0
    %4452 = vmatpush1.xpose.msra.mxu0 0.0
    %4453 = vmatprep.subr.mxu0 0.0
    %4454 = vmatpush1.xpose.msra.mxu0 0.0
    %4455 = vmatprep.subr.mxu0 0.0
    %4456 = vmatpush1.xpose.msra.mxu0 0.0
    %4457 = vmatprep.subr.mxu0 0.0
    %4458 = vmatpush1.xpose.msra.mxu0 0.0
    %4459 = vmatprep.subr.mxu0 0.0
    %4460 = vmatpush1.xpose.msra.mxu0 0.0
    %4461 = vmatprep.subr.mxu0 0.0
    %4462 = vmatpush1.xpose.msra.mxu0 0.0
    %4463 = vmatprep.subr.mxu0 0.0
    %4464 = vmatpush1.xpose.msra.mxu0 0.0
    %4465 = vmatprep.subr.mxu0 0.0
    %4466 = vmatpush1.xpose.msra.mxu0 0.0
    %4467 = vmatprep.subr.mxu0 0.0
    %4468 = vmatpush1.xpose.msra.mxu0 0.0
    %4469 = vmatprep.subr.mxu0 0.0
    %4470 = vmatpush1.xpose.msra.mxu0 0.0
    %4471 = vmatprep.subr.mxu0 0.0
    %4472 = vmatpush1.xpose.msra.mxu0 0.0
    %4473 = vmatprep.subr.mxu0 0.0
    %4474 = vmatpush1.xpose.msra.mxu0 0.0
    %4475 = vmatprep.subr.mxu0 0.0
    %4476 = vmatpush1.xpose.msra.mxu0 0.0
    %4477 = vmatprep.subr.mxu0 0.0
    %4478 = vmatpush1.xpose.msra.mxu0 0.0
    %4479 = vmatprep.subr.mxu0 0.0
    %4480 = vmatpush1.xpose.msra.mxu0 0.0
    %4481 = vmatprep.subr.mxu0 0.0
    %4482 = vmatpush1.xpose.msra.mxu0 0.0
    %4483 = vmatprep.subr.mxu0 0.0
    %4484 = vmatpush1.xpose.msra.mxu0 0.0
    %4485 = vmatprep.subr.mxu0 0.0
    %4486 = vmatpush1.xpose.msra.mxu0 0.0
    %4487 = vmatprep.subr.mxu0 0.0
    %4488 = vmatpush1.xpose.msra.mxu0 0.0
    %4489 = vmatprep.subr.mxu0 0.0
    %4490 = vmatpush1.xpose.msra.mxu0 0.0
    %4491 = vmatprep.subr.mxu0 0.0
    %4492 = vmatpush1.xpose.msra.mxu0 0.0
    %4493 = vmatprep.subr.mxu0 0.0
    %4494 = vmatpush1.xpose.msra.mxu0 0.0
    %4495 = vmatprep.mubr.f32.mxu0 0.0
    %4496 = vmatmul.mubr.f32.gmra.mrb[0].mxu0 %v4423
    %v4497 = vpop.f32.mrb[0].mxu0
    %v4498 = vadd.f32 %v180, %v4497
    %v4499 = vpop.f32.mrb[0].mxu0
    %4500 = vmatprep.mubr.f32.mxu0 0.0
    %4501 = vmatmul.mubr.f32.gmra.mrb[0].mxu0 %v4425
    %v4502 = vpop.f32.mrb[0].mxu0
    %v4503 = vadd.f32 %v181, %v4502
    %v4504 = vpop.f32.mrb[0].mxu0
    %4505 = vdwg.mxu0
    %v4506 = vsel %vm457, %v4498, -inf
    %4507 = vmax.xlane.f32.xlu0 %v4506
    %v4508 = vpop.xlane.xlu0 %4507
    %v4509 = vsel %vm457, %v4503, -inf
    %4510 = vmax.xlane.f32.xlu0 %v4509
    %v4511 = vpop.xlane.xlu0 %4510
    %v4512 = vsub.f32 %v4498, %v4508
    %v4513 = vsub.f32 %v4503, %v4511
    %v4514 = vmul.f32 %v4512, 1.442695
    %v4515 = vpow.pop %v4514
    %v4516 = vmul.f32 %v4513, 1.442695
    %v4517 = vpow.pop %v4516
    %v4518 = vsel %vm457, %v4515, 0.0
    %4519 = vadd.xlane.f32.xlu0 %v4518
    %v4520 = vpop.xlane.xlu0 %4519
    %v4521 = vsel %vm457, %v4517, 0.0
    %4522 = vadd.xlane.f32.xlu0 %v4521
    %v4523 = vpop.xlane.xlu0 %4522
    %v4524 = vrcp.pop %v4520
    %v4525 = vrcp.pop %v4523
    %v4526 = vmul.f32 %v4515, %v4524
    %v4527 = vmul.f32 %v4517, %v4525
    %4528 = vrot.lane.b32.xlu0 %v267, 8
    %v4529 = vpop.permute.xlu0 %4528
    %4530 = vrot.lane.b32.xlu0 %v272, 8
    %v4531 = vpop.permute.xlu0 %4530
    %v4535 = vsel %vm457, %v4526, 0
    %v4538 = vsel %vm457, %v4527, 0
    %4540 = vmatprep.subr.mxu0 0.0
    %4541 = vmatpush1.msra.mxu0 %v4529
    %4542 = vmatprep.subr.mxu0 0.0
    %4543 = vmatpush1.msra.mxu0 %v4531
    %4544 = vmatprep.subr.mxu0 0.0
    %4545 = vmatpush1.msra.mxu0 0.0
    %4546 = vmatprep.subr.mxu0 0.0
    %4547 = vmatpush1.msra.mxu0 0.0
    %4548 = vmatprep.subr.mxu0 0.0
    %4549 = vmatpush1.msra.mxu0 0.0
    %4550 = vmatprep.subr.mxu0 0.0
    %4551 = vmatpush1.msra.mxu0 0.0
    %4552 = vmatprep.subr.mxu0 0.0
    %4553 = vmatpush1.msra.mxu0 0.0
    %4554 = vmatprep.subr.mxu0 0.0
    %4555 = vmatpush1.msra.mxu0 0.0
    %4556 = vmatprep.subr.mxu0 0.0
    %4557 = vmatpush1.msra.mxu0 0.0
    %4558 = vmatprep.subr.mxu0 0.0
    %4559 = vmatpush1.msra.mxu0 0.0
    %4560 = vmatprep.subr.mxu0 0.0
    %4561 = vmatpush1.msra.mxu0 0.0
    %4562 = vmatprep.subr.mxu0 0.0
    %4563 = vmatpush1.msra.mxu0 0.0
    %4564 = vmatprep.subr.mxu0 0.0
    %4565 = vmatpush1.msra.mxu0 0.0
    %4566 = vmatprep.subr.mxu0 0.0
    %4567 = vmatpush1.msra.mxu0 0.0
    %4568 = vmatprep.subr.mxu0 0.0
    %4569 = vmatpush1.msra.mxu0 0.0
    %4570 = vmatprep.subr.mxu0 0.0
    %4571 = vmatpush1.msra.mxu0 0.0
    %4572 = vmatprep.subr.mxu0 0.0
    %4573 = vmatpush1.msra.mxu0 0.0
    %4574 = vmatprep.subr.mxu0 0.0
    %4575 = vmatpush1.msra.mxu0 0.0
    %4576 = vmatprep.subr.mxu0 0.0
    %4577 = vmatpush1.msra.mxu0 0.0
    %4578 = vmatprep.subr.mxu0 0.0
    %4579 = vmatpush1.msra.mxu0 0.0
    %4580 = vmatprep.subr.mxu0 0.0
    %4581 = vmatpush1.msra.mxu0 0.0
    %4582 = vmatprep.subr.mxu0 0.0
    %4583 = vmatpush1.msra.mxu0 0.0
    %4584 = vmatprep.subr.mxu0 0.0
    %4585 = vmatpush1.msra.mxu0 0.0
    %4586 = vmatprep.subr.mxu0 0.0
    %4587 = vmatpush1.msra.mxu0 0.0
    %4588 = vmatprep.subr.mxu0 0.0
    %4589 = vmatpush1.msra.mxu0 0.0
    %4590 = vmatprep.subr.mxu0 0.0
    %4591 = vmatpush1.msra.mxu0 0.0
    %4592 = vmatprep.subr.mxu0 0.0
    %4593 = vmatpush1.msra.mxu0 0.0
    %4594 = vmatprep.subr.mxu0 0.0
    %4595 = vmatpush1.msra.mxu0 0.0
    %4596 = vmatprep.subr.mxu0 0.0
    %4597 = vmatpush1.msra.mxu0 0.0
    %4598 = vmatprep.subr.mxu0 0.0
    %4599 = vmatpush1.msra.mxu0 0.0
    %4600 = vmatprep.subr.mxu0 0.0
    %4601 = vmatpush1.msra.mxu0 0.0
    %4602 = vmatprep.subr.mxu0 0.0
    %4603 = vmatpush1.msra.mxu0 0.0
    %4604 = vmatprep.mubr.f32.mxu0 0.0
    %4605 = vmatmul.mubr.f32.gmra.mrb[0].mxu0 %v4535
    %v4606 = vpop.f32.mrb[0].mxu0
    %v4607 = vadd.f32 0.0, %v4606
    %v4608 = vpop.f32.mrb[0].mxu0
    %4609 = vmatprep.mubr.f32.mxu0 0.0
    %4610 = vmatmul.mubr.f32.gmra.mrb[0].mxu0 %v4538
    %v4611 = vpop.f32.mrb[0].mxu0
    %v4612 = vadd.f32 0.0, %v4611
    %v4613 = vpop.f32.mrb[0].mxu0
    %4614 = vdwg.mxu0
    %4617 = vrot.lane.b32.xlu0 %v4207, 8
    %v4618 = vpop.permute.xlu0 %4617
    %4619 = vrot.lane.b32.xlu0 %v4212, 8
    %v4620 = vpop.permute.xlu0 %4619
    %4625 = vrot.lane.b32.xlu0 %v4407, 16
    %v4626 = vpop.permute.xlu0 %4625
    %4627 = vrot.lane.b32.xlu0 %v4412, 16
    %v4628 = vpop.permute.xlu0 %4627
    %4633 = vrot.lane.b32.xlu0 %v4607, 24
    %v4634 = vpop.permute.xlu0 %4633
    %4635 = vrot.lane.b32.xlu0 %v4612, 24
    %v4636 = vpop.permute.xlu0 %4635
    %v4639 = vsel %vm373, %v4007, %v4618
    %v4640 = vsel %vm373, %v4012, %v4620
    %v4641 = vsel %vm457, %v4639, %v4626
    %v4642 = vsel %vm457, %v4640, %v4628
    %v4643 = vsel %vm1195, %v4641, %v4634
    %v4644 = vsel %vm1195, %v4642, %v4636
    %s4645 = scalar_lea.vmem %s10, 96
    %v4646 = vld [vmem:[%s4645] sm:$0xff]
    %v4647 = vld [vmem:[%s4645 + $0x8] sm:$0xff]
    %v4648 = vld [vmem:[%s4645 + $0x10] sm:$0xff]
    %v4649 = vld [vmem:[%s4645 + $0x18] sm:$0xff]
    %s4650 = scalar_lea.vmem %s11, 3
    %v4651 = vld [vmem:[%s4650] sm:$0x1]
    %v4653 = vlaneseq
    %v4654 = vshrl.u32 %v4653, 7
    %v4655 = vsub.s32 0, %v4654
    %v4656 = vrot.slane %v4651, %v4655
    %v4659 = vsel %vm193, %v4643, 0
    %v4662 = vsel %vm193, %v4644, 0
    %4664 = vmatprep.subr.mxu0 0.0
    %4665 = vmatpush1.msra.mxu0 %v4646
    %4666 = vmatprep.subr.mxu0 0.0
    %4667 = vmatpush1.msra.mxu0 %v4647
    %4668 = vmatprep.subr.mxu0 0.0
    %4669 = vmatpush1.msra.mxu0 %v4648
    %4670 = vmatprep.subr.mxu0 0.0
    %4671 = vmatpush1.msra.mxu0 %v4649
    %4672 = vmatprep.subr.mxu0 0.0
    %4673 = vmatpush1.msra.mxu0 0.0
    %4674 = vmatprep.subr.mxu0 0.0
    %4675 = vmatpush1.msra.mxu0 0.0
    %4676 = vmatprep.subr.mxu0 0.0
    %4677 = vmatpush1.msra.mxu0 0.0
    %4678 = vmatprep.subr.mxu0 0.0
    %4679 = vmatpush1.msra.mxu0 0.0
    %4680 = vmatprep.subr.mxu0 0.0
    %4681 = vmatpush1.msra.mxu0 0.0
    %4682 = vmatprep.subr.mxu0 0.0
    %4683 = vmatpush1.msra.mxu0 0.0
    %4684 = vmatprep.subr.mxu0 0.0
    %4685 = vmatpush1.msra.mxu0 0.0
    %4686 = vmatprep.subr.mxu0 0.0
    %4687 = vmatpush1.msra.mxu0 0.0
    %4688 = vmatprep.subr.mxu0 0.0
    %4689 = vmatpush1.msra.mxu0 0.0
    %4690 = vmatprep.subr.mxu0 0.0
    %4691 = vmatpush1.msra.mxu0 0.0
    %4692 = vmatprep.subr.mxu0 0.0
    %4693 = vmatpush1.msra.mxu0 0.0
    %4694 = vmatprep.subr.mxu0 0.0
    %4695 = vmatpush1.msra.mxu0 0.0
    %4696 = vmatprep.subr.mxu0 0.0
    %4697 = vmatpush1.msra.mxu0 0.0
    %4698 = vmatprep.subr.mxu0 0.0
    %4699 = vmatpush1.msra.mxu0 0.0
    %4700 = vmatprep.subr.mxu0 0.0
    %4701 = vmatpush1.msra.mxu0 0.0
    %4702 = vmatprep.subr.mxu0 0.0
    %4703 = vmatpush1.msra.mxu0 0.0
    %4704 = vmatprep.subr.mxu0 0.0
    %4705 = vmatpush1.msra.mxu0 0.0
    %4706 = vmatprep.subr.mxu0 0.0
    %4707 = vmatpush1.msra.mxu0 0.0
    %4708 = vmatprep.subr.mxu0 0.0
    %4709 = vmatpush1.msra.mxu0 0.0
    %4710 = vmatprep.subr.mxu0 0.0
    %4711 = vmatpush1.msra.mxu0 0.0
    %4712 = vmatprep.subr.mxu0 0.0
    %4713 = vmatpush1.msra.mxu0 0.0
    %4714 = vmatprep.subr.mxu0 0.0
    %4715 = vmatpush1.msra.mxu0 0.0
    %4716 = vmatprep.subr.mxu0 0.0
    %4717 = vmatpush1.msra.mxu0 0.0
    %4718 = vmatprep.subr.mxu0 0.0
    %4719 = vmatpush1.msra.mxu0 0.0
    %4720 = vmatprep.subr.mxu0 0.0
    %4721 = vmatpush1.msra.mxu0 0.0
    %4722 = vmatprep.subr.mxu0 0.0
    %4723 = vmatpush1.msra.mxu0 0.0
    %4724 = vmatprep.subr.mxu0 0.0
    %4725 = vmatpush1.msra.mxu0 0.0
    %4726 = vmatprep.subr.mxu0 0.0
    %4727 = vmatpush1.msra.mxu0 0.0
    %4728 = vmatprep.mubr.f32.mxu0 0.0
    %4729 = vmatmul.mubr.f32.gmra.mrb[0].mxu0 %v4659
    %v4730 = vpop.f32.mrb[0].mxu0
    %v4731 = vadd.f32 %v4656, %v4730
    %v4732 = vpop.f32.mrb[0].mxu0
    %4733 = vmatprep.mubr.f32.mxu0 0.0
    %4734 = vmatmul.mubr.f32.gmra.mrb[0].mxu0 %v4662
    %v4735 = vpop.f32.mrb[0].mxu0
    %v4736 = vadd.f32 %v4656, %v4735
    %v4737 = vpop.f32.mrb[0].mxu0
    %4738 = vdwg.mxu0
    %v4739 = vadd.f32 %v3721, %v4731
    %v4740 = vadd.f32 %v3722, %v4736
    %s4741 = scalar_lea.vmem %s16, 4
    %v4742 = vld [vmem:[%s4741] sm:$0x1]
    %s4743 = scalar_lea.vmem %s17, 4
    %v4744 = vld [vmem:[%s4743] sm:$0x1]
    %v4745 = vsel %vm193, %v4739, 0.0
    %4746 = vadd.xlane.f32.xlu0 %v4745
    %v4747 = vpop.xlane.xlu0 %4746
    %v4748 = vsel %vm193, %v4740, 0.0
    %4749 = vadd.xlane.f32.xlu0 %v4748
    %v4750 = vpop.xlane.xlu0 %4749
    %v4751 = vmul.f32 %v4739, %v4739
    %v4752 = vmul.f32 %v4740, %v4740
    %v4753 = vsel %vm193, %v4751, 0.0
    %4754 = vadd.xlane.f32.xlu0 %v4753
    %v4755 = vpop.xlane.xlu0 %4754
    %v4756 = vsel %vm193, %v4752, 0.0
    %4757 = vadd.xlane.f32.xlu0 %v4756
    %v4758 = vpop.xlane.xlu0 %4757
    %v4759 = vmul.f32 %v4747, 0.03125
    %v4760 = vmul.f32 %v4750, 0.03125
    %v4761 = vmul.f32 %v4755, 0.03125
    %v4762 = vmul.f32 %v4758, 0.03125
    %v4763 = vmul.f32 %v4759, %v4759
    %v4764 = vmul.f32 %v4760, %v4760
    %v4765 = vsub.f32 %v4761, %v4763
    %v4766 = vsub.f32 %v4762, %v4764
    %v4767 = vmax.f32 %v4765, 0.0
    %v4768 = vmax.f32 %v4766, 0.0
    %v4769 = vsub.f32 %v4739, %v4759
    %v4770 = vsub.f32 %v4740, %v4760
    %v4771 = vadd.f32 %v4767, 1e-05
    %v4772 = vadd.f32 %v4768, 1e-05
    %v4773 = vrsqrt.pop %v4771
    %v4774 = vrsqrt.pop %v4772
    %v4775 = vmul.f32 %v4769, %v4773
    %v4776 = vmul.f32 %v4770, %v4774
    %v4778 = vlaneseq
    %v4779 = vshrl.u32 %v4778, 7
    %v4780 = vsub.s32 0, %v4779
    %v4781 = vrot.slane %v4742, %v4780
    %v4783 = vmul.f32 %v4775, %v4781
    %v4784 = vmul.f32 %v4776, %v4781
    %v4786 = vlaneseq
    %v4787 = vshrl.u32 %v4786, 7
    %v4788 = vsub.s32 0, %v4787
    %v4789 = vrot.slane %v4744, %v4788
    %v4791 = vadd.f32 %v4783, %v4789
    %v4792 = vadd.f32 %v4784, %v4789
    %s4793 = scalar_lea.vmem [#allocation10], 32
    %v4794 = vld [vmem:[%s4793] sm:$0xff]
    %v4795 = vld [vmem:[%s4793 + $0x8] sm:$0xff]
    %v4796 = vld [vmem:[%s4793 + $0x10] sm:$0xff]
    %v4797 = vld [vmem:[%s4793 + $0x18] sm:$0xff]
    %s4798 = scalar_lea.vmem [#allocation11], 1
    %v4799 = vld [vmem:[%s4798] sm:$0x1]
    %v4801 = vlaneseq
    %v4802 = vshrl.u32 %v4801, 7
    %v4803 = vsub.s32 0, %v4802
    %v4804 = vrot.slane %v4799, %v4803
    %v4807 = vsel %vm193, %v4791, 0
    %v4810 = vsel %vm193, %v4792, 0
    %4812 = vmatprep.subr.mxu0 0.0
    %4813 = vmatpush1.msra.mxu0 %v4794
    %4814 = vmatprep.subr.mxu0 0.0
    %4815 = vmatpush1.msra.mxu0 %v4795
    %4816 = vmatprep.subr.mxu0 0.0
    %4817 = vmatpush1.msra.mxu0 %v4796
    %4818 = vmatprep.subr.mxu0 0.0
    %4819 = vmatpush1.msra.mxu0 %v4797
    %4820 = vmatprep.subr.mxu0 0.0
    %4821 = vmatpush1.msra.mxu0 0.0
    %4822 = vmatprep.subr.mxu0 0.0
    %4823 = vmatpush1.msra.mxu0 0.0
    %4824 = vmatprep.subr.mxu0 0.0
    %4825 = vmatpush1.msra.mxu0 0.0
    %4826 = vmatprep.subr.mxu0 0.0
    %4827 = vmatpush1.msra.mxu0 0.0
    %4828 = vmatprep.subr.mxu0 0.0
    %4829 = vmatpush1.msra.mxu0 0.0
    %4830 = vmatprep.subr.mxu0 0.0
    %4831 = vmatpush1.msra.mxu0 0.0
    %4832 = vmatprep.subr.mxu0 0.0
    %4833 = vmatpush1.msra.mxu0 0.0
    %4834 = vmatprep.subr.mxu0 0.0
    %4835 = vmatpush1.msra.mxu0 0.0
    %4836 = vmatprep.subr.mxu0 0.0
    %4837 = vmatpush1.msra.mxu0 0.0
    %4838 = vmatprep.subr.mxu0 0.0
    %4839 = vmatpush1.msra.mxu0 0.0
    %4840 = vmatprep.subr.mxu0 0.0
    %4841 = vmatpush1.msra.mxu0 0.0
    %4842 = vmatprep.subr.mxu0 0.0
    %4843 = vmatpush1.msra.mxu0 0.0
    %4844 = vmatprep.subr.mxu0 0.0
    %4845 = vmatpush1.msra.mxu0 0.0
    %4846 = vmatprep.subr.mxu0 0.0
    %4847 = vmatpush1.msra.mxu0 0.0
    %4848 = vmatprep.subr.mxu0 0.0
    %4849 = vmatpush1.msra.mxu0 0.0
    %4850 = vmatprep.subr.mxu0 0.0
    %4851 = vmatpush1.msra.mxu0 0.0
    %4852 = vmatprep.subr.mxu0 0.0
    %4853 = vmatpush1.msra.mxu0 0.0
    %4854 = vmatprep.subr.mxu0 0.0
    %4855 = vmatpush1.msra.mxu0 0.0
    %4856 = vmatprep.subr.mxu0 0.0
    %4857 = vmatpush1.msra.mxu0 0.0
    %4858 = vmatprep.subr.mxu0 0.0
    %4859 = vmatpush1.msra.mxu0 0.0
    %4860 = vmatprep.subr.mxu0 0.0
    %4861 = vmatpush1.msra.mxu0 0.0
    %4862 = vmatprep.subr.mxu0 0.0
    %4863 = vmatpush1.msra.mxu0 0.0
    %4864 = vmatprep.subr.mxu0 0.0
    %4865 = vmatpush1.msra.mxu0 0.0
    %4866 = vmatprep.subr.mxu0 0.0
    %4867 = vmatpush1.msra.mxu0 0.0
    %4868 = vmatprep.subr.mxu0 0.0
    %4869 = vmatpush1.msra.mxu0 0.0
    %4870 = vmatprep.subr.mxu0 0.0
    %4871 = vmatpush1.msra.mxu0 0.0
    %4872 = vmatprep.subr.mxu0 0.0
    %4873 = vmatpush1.msra.mxu0 0.0
    %4874 = vmatprep.subr.mxu0 0.0
    %4875 = vmatpush1.msra.mxu0 0.0
    %4876 = vmatprep.mubr.f32.mxu0 0.0
    %4877 = vmatmul.mubr.f32.gmra.mrb[0].mxu0 %v4807
    %v4878 = vpop.f32.mrb[0].mxu0
    %v4879 = vadd.f32 %v4804, %v4878
    %v4880 = vpop.f32.mrb[0].mxu0
    %4881 = vmatprep.mubr.f32.mxu0 0.0
    %4882 = vmatmul.mubr.f32.gmra.mrb[0].mxu0 %v4810
    %v4883 = vpop.f32.mrb[0].mxu0
    %v4884 = vadd.f32 %v4804, %v4883
    %v4885 = vpop.f32.mrb[0].mxu0
    %4886 = vdwg.mxu0
    %v4887 = vmax.f32 %v4879, 0.0
    %v4888 = vmax.f32 %v4884, 0.0
    %s4889 = scalar_lea.vmem %s14, 64
    %v4890 = vld [vmem:[%s4889] sm:$0xff]
    %v4891 = vld [vmem:[%s4889 + $0x8] sm:$0xff]
    %v4892 = vld [vmem:[%s4889 + $0x10] sm:$0xff]
    %v4893 = vld [vmem:[%s4889 + $0x18] sm:$0xff]
    %v4894 = vld [vmem:[%s4889 + $0x20] sm:$0xff]
    %v4895 = vld [vmem:[%s4889 + $0x28] sm:$0xff]
    %v4896 = vld [vmem:[%s4889 + $0x30] sm:$0xff]
    %v4897 = vld [vmem:[%s4889 + $0x38] sm:$0xff]
    %s4898 = scalar_lea.vmem [#allocation13], 1
    %v4899 = vld [vmem:[%s4898] sm:$0x1]
    %v4901 = vlaneseq
    %v4902 = vshrl.u32 %v4901, 7
    %v4903 = vsub.s32 0, %v4902
    %v4904 = vrot.slane %v4899, %v4903
    %v4907 = vsel %vm2517, %v4887, 0
    %v4910 = vsel %vm2517, %v4888, 0
    %4912 = vmatprep.subr.mxu0 0.0
    %4913 = vmatpush1.msra.mxu0 %v4890
    %4914 = vmatprep.subr.mxu0 0.0
    %4915 = vmatpush1.msra.mxu0 %v4891
    %4916 = vmatprep.subr.mxu0 0.0
    %4917 = vmatpush1.msra.mxu0 %v4892
    %4918 = vmatprep.subr.mxu0 0.0
    %4919 = vmatpush1.msra.mxu0 %v4893
    %4920 = vmatprep.subr.mxu0 0.0
    %4921 = vmatpush1.msra.mxu0 %v4894
    %4922 = vmatprep.subr.mxu0 0.0
    %4923 = vmatpush1.msra.mxu0 %v4895
    %4924 = vmatprep.subr.mxu0 0.0
    %4925 = vmatpush1.msra.mxu0 %v4896
    %4926 = vmatprep.subr.mxu0 0.0
    %4927 = vmatpush1.msra.mxu0 %v4897
    %4928 = vmatprep.subr.mxu0 0.0
    %4929 = vmatpush1.msra.mxu0 0.0
    %4930 = vmatprep.subr.mxu0 0.0
    %4931 = vmatpush1.msra.mxu0 0.0
    %4932 = vmatprep.subr.mxu0 0.0
    %4933 = vmatpush1.msra.mxu0 0.0
    %4934 = vmatprep.subr.mxu0 0.0
    %4935 = vmatpush1.msra.mxu0 0.0
    %4936 = vmatprep.subr.mxu0 0.0
    %4937 = vmatpush1.msra.mxu0 0.0
    %4938 = vmatprep.subr.mxu0 0.0
    %4939 = vmatpush1.msra.mxu0 0.0
    %4940 = vmatprep.subr.mxu0 0.0
    %4941 = vmatpush1.msra.mxu0 0.0
    %4942 = vmatprep.subr.mxu0 0.0
    %4943 = vmatpush1.msra.mxu0 0.0
    %4944 = vmatprep.subr.mxu0 0.0
    %4945 = vmatpush1.msra.mxu0 0.0
    %4946 = vmatprep.subr.mxu0 0.0
    %4947 = vmatpush1.msra.mxu0 0.0
    %4948 = vmatprep.subr.mxu0 0.0
    %4949 = vmatpush1.msra.mxu0 0.0
    %4950 = vmatprep.subr.mxu0 0.0
    %4951 = vmatpush1.msra.mxu0 0.0
    %4952 = vmatprep.subr.mxu0 0.0
    %4953 = vmatpush1.msra.mxu0 0.0
    %4954 = vmatprep.subr.mxu0 0.0
    %4955 = vmatpush1.msra.mxu0 0.0
    %4956 = vmatprep.subr.mxu0 0.0
    %4957 = vmatpush1.msra.mxu0 0.0
    %4958 = vmatprep.subr.mxu0 0.0
    %4959 = vmatpush1.msra.mxu0 0.0
    %4960 = vmatprep.subr.mxu0 0.0
    %4961 = vmatpush1.msra.mxu0 0.0
    %4962 = vmatprep.subr.mxu0 0.0
    %4963 = vmatpush1.msra.mxu0 0.0
    %4964 = vmatprep.subr.mxu0 0.0
    %4965 = vmatpush1.msra.mxu0 0.0
    %4966 = vmatprep.subr.mxu0 0.0
    %4967 = vmatpush1.msra.mxu0 0.0
    %4968 = vmatprep.subr.mxu0 0.0
    %4969 = vmatpush1.msra.mxu0 0.0
    %4970 = vmatprep.subr.mxu0 0.0
    %4971 = vmatpush1.msra.mxu0 0.0
    %4972 = vmatprep.subr.mxu0 0.0
    %4973 = vmatpush1.msra.mxu0 0.0
    %4974 = vmatprep.subr.mxu0 0.0
    %4975 = vmatpush1.msra.mxu0 0.0
    %4976 = vmatprep.mubr.f32.mxu0 0.0
    %4977 = vmatmul.mubr.f32.gmra.mrb[0].mxu0 %v4907
    %v4978 = vpop.f32.mrb[0].mxu0
    %v4979 = vadd.f32 %v4904, %v4978
    %v4980 = vpop.f32.mrb[0].mxu0
    %4981 = vmatprep.mubr.f32.mxu0 0.0
    %4982 = vmatmul.mubr.f32.gmra.mrb[0].mxu0 %v4910
    %v4983 = vpop.f32.mrb[0].mxu0
    %v4984 = vadd.f32 %v4904, %v4983
    %v4985 = vpop.f32.mrb[0].mxu0
    %4986 = vdwg.mxu0
    %v4987 = vadd.f32 %v4791, %v4979
    %v4988 = vadd.f32 %v4792, %v4984
    %v4989 = vld [vmem:[#allocation14] sm:$0x1]
    %v4990 = vld [vmem:[#allocation2] sm:$0x1]
    %v4991 = vsel %vm193, %v4987, 0.0
    %4992 = vadd.xlane.f32.xlu0 %v4991
    %v4993 = vpop.xlane.xlu0 %4992
    %v4994 = vsel %vm193, %v4988, 0.0
    %4995 = vadd.xlane.f32.xlu0 %v4994
    %v4996 = vpop.xlane.xlu0 %4995
    %v4997 = vmul.f32 %v4987, %v4987
    %v4998 = vmul.f32 %v4988, %v4988
    %v4999 = vsel %vm193, %v4997, 0.0
    %5000 = vadd.xlane.f32.xlu0 %v4999
    %v5001 = vpop.xlane.xlu0 %5000
    %v5002 = vsel %vm193, %v4998, 0.0
    %5003 = vadd.xlane.f32.xlu0 %v5002
    %v5004 = vpop.xlane.xlu0 %5003
    %v5005 = vmul.f32 %v4993, 0.03125
    %v5006 = vmul.f32 %v4996, 0.03125
    %v5007 = vmul.f32 %v5001, 0.03125
    %v5008 = vmul.f32 %v5004, 0.03125
    %v5009 = vmul.f32 %v5005, %v5005
    %v5010 = vmul.f32 %v5006, %v5006
    %v5011 = vsub.f32 %v5007, %v5009
    %v5012 = vsub.f32 %v5008, %v5010
    %v5013 = vmax.f32 %v5011, 0.0
    %v5014 = vmax.f32 %v5012, 0.0
    %v5015 = vsub.f32 %v4987, %v5005
    %v5016 = vsub.f32 %v4988, %v5006
    %v5017 = vadd.f32 %v5013, 1e-05
    %v5018 = vadd.f32 %v5014, 1e-05
    %v5019 = vrsqrt.pop %v5017
    %v5020 = vrsqrt.pop %v5018
    %v5021 = vmul.f32 %v5015, %v5019
    %v5022 = vmul.f32 %v5016, %v5020
    %v5024 = vlaneseq
    %v5025 = vshrl.u32 %v5024, 7
    %v5026 = vsub.s32 0, %v5025
    %v5027 = vrot.slane %v4989, %v5026
    %v5029 = vmul.f32 %v5021, %v5027
    %v5030 = vmul.f32 %v5022, %v5027
    %v5031 = vsel %vm193, %v5029, 0.0
    %5032 = vadd.xlane.f32.xlu0 %v5031
    %v5033 = vpop.xlane.xlu0 %5032
    %v5034 = vsel %vm193, %v5030, 0.0
    %5035 = vadd.xlane.f32.xlu0 %v5034
    %v5036 = vpop.xlane.xlu0 %5035
    %v5038 = vlaneseq
    %v5039 = vshrl.u32 %v5038, 7
    %v5040 = vsub.s32 0, %v5039
    %v5041 = vrot.slane %v4990, %v5040
    %v5043 = vadd.f32 %v5033, %v5041
    %v5044 = vadd.f32 %v5036, %v5041
    %vm5045 = vcmask 7168
    %5046 = vst.msk [vmem:[%s20] sm:$0xff] %vm5045, %v5043
    %5047 = vst.msk [vmem:[%s20 + $0x8] sm:$0xff] %vm5045, %v5044
    // Predicated region
    $region114: #{_selection_core.1} parent=1 // pred_check
      _
    $region115: #{_selection_core.1} parent=1 // pred_check_branch
      %5049 = sbr.rel (0) target = $region117
    $region116: #{_selection_core.1} parent=1 // pred_region
      _
    $region117: #{_selection_core.1} parent=1 // pred_fallthru
      _
    // Predicated region
    $region118: #{_selection_core.1} parent=1 // pred_check
      _
    $region119: #{_selection_core.1} parent=1 // pred_check_branch
      %5051 = sbr.rel (0) target = $region121
    $region120: #{_selection_core.1} parent=1 // pred_region
      _
    $region121: #{_selection_core.1} parent=1 // pred_fallthru
      _
    %5052 = vsyncpa [#allocation4], 1
    %5053 = vsyncpa [#allocation6], 1
    %5054 = vsyncpa [#allocation9], 1
    %5055 = vsyncpa [#allocation12], 1
    %5056 = vsyncpa [#allocation15], 1

</llo_original>
